<compile_context>
chip_gen: v7x
topology: tpu7x:2x2x1
jax: 0.10.0
libtpu: 0.0.40
codegen_flags: <defaults>
</compile_context>

<pallas_src>
import jax
import jax.numpy as jnp
from jax.experimental import pallas as pl
from jax.experimental.pallas import tpu as pltpu

_LN_EPS = 1e-5     # nn.LayerNorm default
_BN_EPS = 1e-5     # nn.BatchNorm2d default
_TM_MIX = 2048     # row tile for embedding/mixer kernels (feature dims are 2..64)
_TM_HEAD = 256     # row tile for the head (wide K = pn*d_model, wide N = pred_seq)


def _round_up(x, m):
    return (x + m - 1) // m * m


def _row_tiles(m, tm_max):
    """Row-tile size + grid length.  No padding: grid = cdiv(m, tm) and Pallas masks
    the ragged last block.  Forces >= 2 tiles when there is enough work (v7x dual
    TensorCore); tm is a multiple of 8 (f32 sublane tile) or equals m."""
    if m <= 16:
        return m, 1
    n_tiles = max(2, pl.cdiv(m, tm_max))
    tm = _round_up(pl.cdiv(m, n_tiles), 8)
    return tm, pl.cdiv(m, tm)


def _gelu_tanh(x):
    # TODO(synk): PyTorch nn.GELU() is the exact erf form; the tanh approximation is
    # used (|diff| < 1e-3) because erf is not guaranteed to lower in Mosaic.
    return 0.5 * x * (1.0 + jnp.tanh(0.7978845608028654 * (x + 0.044715 * x * x * x)))


# ---------------------------------------------------------------------------
# Pallas kernels (bf16 MXU operands, f32 LN/GELU math and accumulation)
# ---------------------------------------------------------------------------
def _linear_bias_kernel(x_ref, w_ref, b_ref, o_ref):
    acc = jnp.dot(x_ref[...].astype(jnp.bfloat16), w_ref[...],
                  preferred_element_type=jnp.float32)
    o_ref[...] = (acc + b_ref[...]).astype(o_ref.dtype)


def _ln_mlp_res_kernel(x_ref, g_ref, be_ref, w1_ref, b1_ref, w2_ref, b2_ref, o_ref):
    x = x_ref[...].astype(jnp.float32)
    mean = jnp.mean(x, axis=-1, keepdims=True)
    xc = x - mean
    var = jnp.mean(xc * xc, axis=-1, keepdims=True)
    xn = xc * jax.lax.rsqrt(var + _LN_EPS) * g_ref[...] + be_ref[...]
    h = jnp.dot(xn.astype(jnp.bfloat16), w1_ref[...],
                preferred_element_type=jnp.float32) + b1_ref[...]
    h = _gelu_tanh(h)
    y = jnp.dot(h.astype(jnp.bfloat16), w2_ref[...],
                preferred_element_type=jnp.float32) + b2_ref[...]
    o_ref[...] = (y + x).astype(o_ref.dtype)


def _emb_mix_kernel(x_ref, we_ref, eb_ref, g_ref, be_ref,
                    w1_ref, b1_ref, w2_ref, b2_ref, o_ref):
    """Fused patch_embedding + patch_mixer (+ residual) on one row tile."""
    e = jnp.dot(x_ref[...].astype(jnp.bfloat16), we_ref[...],
                preferred_element_type=jnp.float32) + eb_ref[...]
    mean = jnp.mean(e, axis=-1, keepdims=True)
    ec = e - mean
    var = jnp.mean(ec * ec, axis=-1, keepdims=True)
    xn = ec * jax.lax.rsqrt(var + _LN_EPS) * g_ref[...] + be_ref[...]
    h = jnp.dot(xn.astype(jnp.bfloat16), w1_ref[...],
                preferred_element_type=jnp.float32) + b1_ref[...]
    h = _gelu_tanh(h)
    y = jnp.dot(h.astype(jnp.bfloat16), w2_ref[...],
                preferred_element_type=jnp.float32) + b2_ref[...]
    o_ref[...] = (y + e).astype(o_ref.dtype)


# ---------------------------------------------------------------------------
# Kernel wrappers (row-tiled, cdiv grid, resident weights)
# ---------------------------------------------------------------------------
def _resident(shape):
    return pl.BlockSpec(shape, lambda i: (0, 0))


def _emb_mix(x2d, we, eb, g, be, w1, b1, w2, b2):
    m, plen = x2d.shape
    d = we.shape[1]
    h = w1.shape[1]
    tm, grid = _row_tiles(m, _TM_MIX)
    return pl.pallas_call(
        _emb_mix_kernel,
        out_shape=jax.ShapeDtypeStruct((m, d), jnp.float32),
        grid=(grid,),
        in_specs=[
            pl.BlockSpec((tm, plen), lambda i: (i, 0)),          # patch rows, pipelined
            _resident((plen, d)), _resident((1, d)),             # emb W (bf16), b
            _resident((1, d)), _resident((1, d)),                # LN gamma, beta
            _resident((d, h)), _resident((1, h)),                # W1 (bf16), b1
            _resident((h, d)), _resident((1, d)),                # W2 (bf16), b2
        ],
        out_specs=pl.BlockSpec((tm, d), lambda i: (i, 0)),
        compiler_params=pltpu.CompilerParams(dimension_semantics=("parallel",)),
        cost_estimate=pl.CostEstimate(
            flops=2 * m * (plen * d + 2 * d * h) + 10 * m * d,
            transcendentals=m * h,
            bytes_accessed=4 * m * (plen + d) + 2 * (plen * d + 2 * d * h)
            + 4 * (4 * d + h)),
    )(x2d, we, eb, g, be, w1, b1, w2, b2)


def _ln_mlp_res(x2d, g, be, w1, b1, w2, b2):
    m, d = x2d.shape
    h = w1.shape[1]
    tm, grid = _row_tiles(m, _TM_MIX)
    return pl.pallas_call(
        _ln_mlp_res_kernel,
        out_shape=jax.ShapeDtypeStruct((m, d), jnp.float32),
        grid=(grid,),
        in_specs=[
            pl.BlockSpec((tm, d), lambda i: (i, 0)),             # row tile, pipelined
            _resident((1, d)), _resident((1, d)),                # LN gamma, beta
            _resident((d, h)), _resident((1, h)),                # W1 (bf16), b1
            _resident((h, d)), _resident((1, d)),                # W2 (bf16), b2
        ],
        out_specs=pl.BlockSpec((tm, d), lambda i: (i, 0)),
        compiler_params=pltpu.CompilerParams(dimension_semantics=("parallel",)),
        cost_estimate=pl.CostEstimate(
            flops=4 * m * d * h + 10 * m * d,
            transcendentals=m * h,
            bytes_accessed=8 * m * d + 4 * d * h + 4 * (3 * d + h)),
    )(x2d, g, be, w1, b1, w2, b2)


def _linear_bias(x2d, w, b):
    m, k = x2d.shape
    n = w.shape[1]
    tm, grid = _row_tiles(m, _TM_HEAD)   # small tile: resident W + tiles fit v7x VMEM
    return pl.pallas_call(
        _linear_bias_kernel,
        out_shape=jax.ShapeDtypeStruct((m, n), jnp.float32),
        grid=(grid,),
        in_specs=[
            pl.BlockSpec((tm, k), lambda i: (i, 0)),             # row tile, pipelined
            _resident((k, n)), _resident((1, n)),                # W (bf16), bias
        ],
        out_specs=pl.BlockSpec((tm, n), lambda i: (i, 0)),
        compiler_params=pltpu.CompilerParams(dimension_semantics=("parallel",)),
        cost_estimate=pl.CostEstimate(
            flops=2 * m * k * n, transcendentals=0,
            bytes_accessed=4 * m * (k + n) + 2 * k * n + 4 * n),
    )(x2d, w, b)


# ---------------------------------------------------------------------------
# XLA-side helpers (variable_mixer + pure-JAX reference)
# ---------------------------------------------------------------------------
def _ln_jnp(x, g, b):
    m = jnp.mean(x, axis=-1, keepdims=True)
    v = jnp.mean((x - m) ** 2, axis=-1, keepdims=True)
    return (x - m) * jax.lax.rsqrt(v + _LN_EPS) * g + b


def _mixer_jnp(x, g, b, w1, b1, w2, b2):
    h = _gelu_tanh(_ln_jnp(x, g, b) @ w1.astype(jnp.float32) + b1)
    return h @ w2.astype(jnp.float32) + b2 + x


# ---------------------------------------------------------------------------
# Parameters / modules (inference mode)
# ---------------------------------------------------------------------------
def _linear_params(key, fan_in, fan_out):
    kw, kb = jax.random.split(key)
    bound = 1.0 / (fan_in ** 0.5)
    w = jax.random.uniform(kw, (fan_in, fan_out), jnp.float32, -bound, bound)
    b = jax.random.uniform(kb, (1, fan_out), jnp.float32, -bound, bound)
    return w.astype(jnp.bfloat16), b        # weights stored bf16 (MXU fast path)


class MultiPatchMixer:
    """JAX/Pallas port of Multi_PatchMixer (eval: Dropout=id, BN=running stats)."""

    def __init__(self, input_seq, pred_seq, patch_len, channel, key):
        self.input_seq = input_seq
        self.pred_seq = pred_seq
        self.patch_len = patch_len
        self.patch_stride = patch_len // 2
        self.patch_num = int((input_seq - patch_len) / self.patch_stride + 2)
        self.d_model = patch_len * 2
        self.channel = channel
        d, pn = self.d_model, self.patch_num

        keys = jax.random.split(key, 6)
        # BatchNorm2d(channel) running stats / affine (eval mode)
        self.bn_gamma = jnp.ones((channel,), jnp.float32)
        self.bn_beta = jnp.zeros((channel,), jnp.float32)
        self.bn_mean = jnp.zeros((channel,), jnp.float32)
        self.bn_var = jnp.ones((channel,), jnp.float32)
        # patch_embedding_layer: Linear(patch_len, d_model) — stored (in, out)
        self.emb_w, self.emb_b = _linear_params(keys[0], patch_len, d)
        # patch_mixer: LN(d) -> Linear(d, 2d) -> GELU -> Linear(2d, d)
        self.pm_g = jnp.ones((1, d), jnp.float32)
        self.pm_b = jnp.zeros((1, d), jnp.float32)
        self.pm_w1, self.pm_b1 = _linear_params(keys[1], d, 2 * d)
        self.pm_w2, self.pm_b2 = _linear_params(keys[2], 2 * d, d)
        # time_mixer: LN(pn) -> Linear(pn, 2pn) -> GELU -> Linear(2pn, pn)
        self.tm_g = jnp.ones((1, pn), jnp.float32)
        self.tm_b = jnp.zeros((1, pn), jnp.float32)
        self.tm_w1, self.tm_b1 = _linear_params(keys[3], pn, 2 * pn)
        self.tm_w2, self.tm_b2 = _linear_params(keys[4], 2 * pn, pn)
        # head: Flatten(pn, d) + Linear(pn*d, pred_seq).  head_w keeps the PyTorch
        # row order (p*d + j) for the reference; head_w_perm re-orders rows to
        # (j*pn + p) so the kernel path consumes the time-mixer output directly in
        # its transposed (B,C,d,pn) layout (removes one XLA transpose per mixer).
        self.head_w, self.head_b = _linear_params(keys[5], pn * d, pred_seq)
        self.head_w_perm = jnp.transpose(
            self.head_w.reshape(pn, d, pred_seq), (1, 0, 2)).reshape(d * pn, pred_seq)

    def __call__(self, x):
        B, C, L = x.shape
        ps, plen, pn, d = self.patch_stride, self.patch_len, self.patch_num, self.d_model
        # BatchNorm2d (eval) is a per-channel affine -> commutes with patching.
        inv = self.bn_gamma * jax.lax.rsqrt(self.bn_var + _BN_EPS)
        xb = (x - self.bn_mean[None, :, None]) * inv[None, :, None] \
            + self.bn_beta[None, :, None]
        # do_patching: repeat last element patch_stride times, then unfold (gather).
        x_new = jnp.concatenate([xb, jnp.repeat(xb[:, :, -1:], ps, axis=-1)], axis=-1)
        win = jnp.arange(pn)[:, None] * ps + jnp.arange(plen)[None, :]
        xp = x_new[:, :, win].reshape(B * C * pn, plen)          # (B*C*pn, plen)
        # fused: patch embedding -> LN -> MLP -> +residual  (patch_mixer)
        u = _emb_mix(xp, self.emb_w, self.emb_b, self.pm_g, self.pm_b,
                     self.pm_w1, self.pm_b1, self.pm_w2, self.pm_b2)
        # time_mixer on the transposed layout (one XLA transpose per mixer)
        ut = jnp.swapaxes(u.reshape(B, C, pn, d), 2, 3).reshape(B * C * d, pn)
        vt = _ln_mlp_res(ut, self.tm_g, self.tm_b, self.tm_w1, self.tm_b1,
                         self.tm_w2, self.tm_b2)                 # (B*C*d, pn)
        # head consumes the transposed layout via the pre-permuted weight -> no
        # inverse swapaxes / HBM transpose.
        out = _linear_bias(vt.reshape(B * C, d * pn), self.head_w_perm, self.head_b)
        return out.reshape(B, C, self.pred_seq)


class MPMBlock:
    """JAX/Pallas port of MPMBlock (inference mode)."""

    def __init__(self, input_seq, pred_seq, channel, patch_len=(4, 8, 16),
                 key=jax.random.PRNGKey(0)):
        k0, k1, k2, k3, k4 = jax.random.split(key, 5)
        self.mp0 = MultiPatchMixer(input_seq, pred_seq, patch_len[0], channel, k0)
        self.mp1 = MultiPatchMixer(input_seq, pred_seq, patch_len[1], channel, k1)
        self.mp2 = MultiPatchMixer(input_seq, pred_seq, patch_len[2], channel, k2)
        self.weights = jnp.ones((3,), jnp.float32)
        # variable_mixer: LN(C) -> Linear(C, 2C) -> GELU -> Linear(2C, C).
        # Left to XLA per the perf review (rows = B*pred_seq and lane width = C are
        # tiny; a dedicated pallas_call is launch/masked-store overhead).
        self.vm_g = jnp.ones((1, channel), jnp.float32)
        self.vm_b = jnp.zeros((1, channel), jnp.float32)
        self.vm_w1, self.vm_b1 = _linear_params(k3, channel, 2 * channel)
        self.vm_w2, self.vm_b2 = _linear_params(k4, 2 * channel, channel)

    def __call__(self, x):
        x0 = self.mp0(x)
        x1 = self.mp1(x)
        x2 = self.mp2(x)
        nw = jax.nn.softmax(self.weights)
        xc = x0 * nw[0] + x1 * nw[1] + x2 * nw[2]                # (B, C, pred_seq)
        xt = jnp.swapaxes(xc, 1, 2)                              # (B, pred_seq, C)
        y = _mixer_jnp(xt, self.vm_g, self.vm_b, self.vm_w1, self.vm_b1,
                       self.vm_w2, self.vm_b2)
        return jnp.swapaxes(y, 1, 2)                             # variable_mixer(x)+x


# ---------------------------------------------------------------------------
# Pure-JAX reference (mirrors the PyTorch forward, eval mode)
# ---------------------------------------------------------------------------
def _mpm_ref(m, x):
    B, C, L = x.shape
    ps, plen, pn, d = m.patch_stride, m.patch_len, m.patch_num, m.d_model
    x_new = jnp.concatenate([x, jnp.repeat(x[:, :, -1:], ps, axis=-1)], axis=-1)
    win = jnp.arange(pn)[:, None] * ps + jnp.arange(plen)[None, :]
    xp = x_new[:, :, win]                                        # (B, C, pn, plen)
    inv = m.bn_gamma * jax.lax.rsqrt(m.bn_var + _BN_EPS)
    xp = (xp - m.bn_mean[None, :, None, None]) * inv[None, :, None, None] \
        + m.bn_beta[None, :, None, None]
    e = xp @ m.emb_w.astype(jnp.float32) + m.emb_b
    u = _mixer_jnp(e, m.pm_g, m.pm_b, m.pm_w1, m.pm_b1, m.pm_w2, m.pm_b2)
    vt = _mixer_jnp(jnp.swapaxes(u, 2, 3), m.tm_g, m.tm_b,
                    m.tm_w1, m.tm_b1, m.tm_w2, m.tm_b2)
    v = jnp.swapaxes(vt, 2, 3)
    return v.reshape(B, C, pn * d) @ m.head_w.astype(jnp.float32) + m.head_b


def _block_ref(blk, x):
    x0, x1, x2 = _mpm_ref(blk.mp0, x), _mpm_ref(blk.mp1, x), _mpm_ref(blk.mp2, x)
    nw = jax.nn.softmax(blk.weights)
    xc = x0 * nw[0] + x1 * nw[1] + x2 * nw[2]
    xt = jnp.swapaxes(xc, 1, 2)
    y = _mixer_jnp(xt, blk.vm_g, blk.vm_b, blk.vm_w1, blk.vm_b1, blk.vm_w2, blk.vm_b2)
    return jnp.swapaxes(y, 1, 2)


if __name__ == "__main__":
    key = jax.random.PRNGKey(0)
    kx, kp = jax.random.split(key)

    B, C, L, P = 2, 4, 16, 8
    x = jax.random.normal(kx, (B, C, L), jnp.float32)

    block = MPMBlock(input_seq=L, pred_seq=P, channel=C, patch_len=(4, 8, 16), key=kp)

    y = jax.jit(block.__call__)(x)
    y = jax.block_until_ready(y)

    y_ref = _block_ref(block, x)
    assert y.shape == (B, C, P), y.shape
    err = float(jnp.max(jnp.abs(y - y_ref)))
    # Kernels use bf16 MXU operands (per perf review); reference is f32 -> 3e-2 tol.
    assert jnp.allclose(y, y_ref, atol=3e-2, rtol=3e-2), f"max abs err {err}"
    print("KERNEL_OK")
</pallas_src>

<mosaic_0001>
module attributes {stable_mosaic.version = 11 : i64} {
  func.func @_ln_mlp_res_kernel(%arg0: i32, %arg1: memref<128x2xf32, #tpu.memory_space<vmem>>, %arg2: memref<1x2xf32, #tpu.memory_space<vmem>>, %arg3: memref<1x2xf32, #tpu.memory_space<vmem>>, %arg4: memref<2x4xbf16, #tpu.memory_space<vmem>>, %arg5: memref<1x4xf32, #tpu.memory_space<vmem>>, %arg6: memref<4x2xbf16, #tpu.memory_space<vmem>>, %arg7: memref<1x2xf32, #tpu.memory_space<vmem>>, %arg8: memref<128x2xf32, #tpu.memory_space<vmem>>) attributes {dimension_semantics = [#tpu.dimension_semantics<parallel>], iteration_bounds = array<i64: 2>, scalar_prefetch = 0 : i64, scratch_operands = 0 : i64, tpu.core_type = #tpu.core_type<tc>, window_params = [{transform_indices = @transform_0, window_bounds = array<i64: 128, 2>}, {pipeline_mode = #tpu.pipeline_mode<synchronous>, transform_indices = @transform_1, window_bounds = array<i64: 1, 2>}, {pipeline_mode = #tpu.pipeline_mode<synchronous>, transform_indices = @transform_2, window_bounds = array<i64: 1, 2>}, {pipeline_mode = #tpu.pipeline_mode<synchronous>, transform_indices = @transform_3, window_bounds = array<i64: 2, 4>}, {pipeline_mode = #tpu.pipeline_mode<synchronous>, transform_indices = @transform_4, window_bounds = array<i64: 1, 4>}, {pipeline_mode = #tpu.pipeline_mode<synchronous>, transform_indices = @transform_5, window_bounds = array<i64: 4, 2>}, {pipeline_mode = #tpu.pipeline_mode<synchronous>, transform_indices = @transform_6, window_bounds = array<i64: 1, 2>}, {transform_indices = @transform_7, window_bounds = array<i64: 128, 2>}]} {
    %c0 = arith.constant 0 : index
    %c0_0 = arith.constant 0 : index
    %0 = vector.load %arg1[%c0, %c0_0] : memref<128x2xf32, #tpu.memory_space<vmem>>, vector<128x2xf32>
    %cst = arith.constant dense<0.000000e+00> : vector<128xf32>
    %1 = vector.multi_reduction <add>, %0, %cst [1] : vector<128x2xf32> to vector<128xf32>
    %2 = vector.shape_cast %1 : vector<128xf32> to vector<128x1xf32>
    %cst_1 = arith.constant 2.000000e+00 : f32
    %3 = vector.broadcast %cst_1 : f32 to vector<128x1xf32>
    %4 = arith.divf %2, %3 : vector<128x1xf32>
    %5 = vector.broadcast %4 : vector<128x1xf32> to vector<128x2xf32>
    %6 = arith.subf %0, %5 : vector<128x2xf32>
    %7 = arith.mulf %6, %6 : vector<128x2xf32>
    %cst_2 = arith.constant dense<0.000000e+00> : vector<128xf32>
    %8 = vector.multi_reduction <add>, %7, %cst_2 [1] : vector<128x2xf32> to vector<128xf32>
    %9 = vector.shape_cast %8 : vector<128xf32> to vector<128x1xf32>
    %cst_3 = arith.constant 2.000000e+00 : f32
    %10 = vector.broadcast %cst_3 : f32 to vector<128x1xf32>
    %11 = arith.divf %9, %10 : vector<128x1xf32>
    %cst_4 = arith.constant 9.99999974E-6 : f32
    %12 = vector.broadcast %cst_4 : f32 to vector<128x1xf32>
    %13 = arith.addf %11, %12 : vector<128x1xf32>
    %14 = math.rsqrt %13 : vector<128x1xf32>
    %15 = vector.broadcast %14 : vector<128x1xf32> to vector<128x2xf32>
    %16 = arith.mulf %6, %15 : vector<128x2xf32>
    %c0_5 = arith.constant 0 : index
    %c0_6 = arith.constant 0 : index
    %17 = vector.load %arg2[%c0_5, %c0_6] : memref<1x2xf32, #tpu.memory_space<vmem>>, vector<1x2xf32>
    %18 = vector.broadcast %17 : vector<1x2xf32> to vector<128x2xf32>
    %19 = arith.mulf %16, %18 : vector<128x2xf32>
    %c0_7 = arith.constant 0 : index
    %c0_8 = arith.constant 0 : index
    %20 = vector.load %arg3[%c0_7, %c0_8] : memref<1x2xf32, #tpu.memory_space<vmem>>, vector<1x2xf32>
    %21 = vector.broadcast %20 : vector<1x2xf32> to vector<128x2xf32>
    %22 = arith.addf %19, %21 : vector<128x2xf32>
    %23 = arith.truncf %22 : vector<128x2xf32> to vector<128x2xbf16>
    %c0_9 = arith.constant 0 : index
    %c0_10 = arith.constant 0 : index
    %24 = vector.load %arg4[%c0_9, %c0_10] : memref<2x4xbf16, #tpu.memory_space<vmem>>, vector<2x4xbf16>
    %cst_11 = arith.constant dense<0.000000e+00> : vector<128x4xf32>
    %25 = tpu.matmul %23, %24, %cst_11 {dimension_numbers = #tpu.dot_dimension_numbers<[1], [0], [0], [1], [0, 0, 1, 1], [], []>} : vector<128x2xbf16>, vector<2x4xbf16>, vector<128x4xf32> -> vector<128x4xf32>
    %c0_12 = arith.constant 0 : index
    %c0_13 = arith.constant 0 : index
    %26 = vector.load %arg5[%c0_12, %c0_13] : memref<1x4xf32, #tpu.memory_space<vmem>>, vector<1x4xf32>
    %27 = vector.broadcast %26 : vector<1x4xf32> to vector<128x4xf32>
    %28 = arith.addf %25, %27 : vector<128x4xf32>
    %cst_14 = arith.constant 5.000000e-01 : f32
    %29 = vector.broadcast %cst_14 : f32 to vector<128x4xf32>
    %30 = arith.mulf %29, %28 : vector<128x4xf32>
    %cst_15 = arith.constant 4.471500e-02 : f32
    %31 = vector.broadcast %cst_15 : f32 to vector<128x4xf32>
    %32 = arith.mulf %31, %28 : vector<128x4xf32>
    %33 = arith.mulf %32, %28 : vector<128x4xf32>
    %34 = arith.mulf %33, %28 : vector<128x4xf32>
    %35 = arith.addf %28, %34 : vector<128x4xf32>
    %cst_16 = arith.constant 0.797884583 : f32
    %36 = vector.broadcast %cst_16 : f32 to vector<128x4xf32>
    %37 = arith.mulf %36, %35 : vector<128x4xf32>
    %38 = math.tanh %37 : vector<128x4xf32>
    %cst_17 = arith.constant 1.000000e+00 : f32
    %39 = vector.broadcast %cst_17 : f32 to vector<128x4xf32>
    %40 = arith.addf %39, %38 : vector<128x4xf32>
    %41 = arith.mulf %30, %40 : vector<128x4xf32>
    %42 = arith.truncf %41 : vector<128x4xf32> to vector<128x4xbf16>
    %c0_18 = arith.constant 0 : index
    %c0_19 = arith.constant 0 : index
    %43 = vector.load %arg6[%c0_18, %c0_19] : memref<4x2xbf16, #tpu.memory_space<vmem>>, vector<4x2xbf16>
    %cst_20 = arith.constant dense<0.000000e+00> : vector<128x2xf32>
    %44 = tpu.matmul %42, %43, %cst_20 {dimension_numbers = #tpu.dot_dimension_numbers<[1], [0], [0], [1], [0, 0, 1, 1], [], []>} : vector<128x4xbf16>, vector<4x2xbf16>, vector<128x2xf32> -> vector<128x2xf32>
    %c0_21 = arith.constant 0 : index
    %c0_22 = arith.constant 0 : index
    %45 = vector.load %arg7[%c0_21, %c0_22] : memref<1x2xf32, #tpu.memory_space<vmem>>, vector<1x2xf32>
    %46 = vector.broadcast %45 : vector<1x2xf32> to vector<128x2xf32>
    %47 = arith.addf %44, %46 : vector<128x2xf32>
    %48 = arith.addf %47, %0 : vector<128x2xf32>
    %c0_23 = arith.constant 0 : index
    %c0_24 = arith.constant 0 : index
    %49 = vector.load %arg8[%c0_23, %c0_24] : memref<128x2xf32, #tpu.memory_space<vmem>>, vector<128x2xf32>
    tpu.vector_store %arg8[%c0_23, %c0_24], %48 {strides = array<i32>} : memref<128x2xf32, #tpu.memory_space<vmem>>, vector<128x2xf32>,
    return
  }
  func.func @transform_0(%arg0: i32) -> (i32, i32) {
    %c0_i32 = arith.constant 0 : i32
    %c0_i32_0 = arith.constant 0 : i32
    return %arg0, %c0_i32 : i32, i32
  }
  func.func @transform_1(%arg0: i32) -> (i32, i32) {
    %c0_i32 = arith.constant 0 : i32
    %c0_i32_0 = arith.constant 0 : i32
    %c0_i32_1 = arith.constant 0 : i32
    return %c0_i32, %c0_i32_0 : i32, i32
  }
  func.func @transform_2(%arg0: i32) -> (i32, i32) {
    %c0_i32 = arith.constant 0 : i32
    %c0_i32_0 = arith.constant 0 : i32
    %c0_i32_1 = arith.constant 0 : i32
    return %c0_i32, %c0_i32_0 : i32, i32
  }
  func.func @transform_3(%arg0: i32) -> (i32, i32) {
    %c0_i32 = arith.constant 0 : i32
    %c0_i32_0 = arith.constant 0 : i32
    %c0_i32_1 = arith.constant 0 : i32
    return %c0_i32, %c0_i32_0 : i32, i32
  }
  func.func @transform_4(%arg0: i32) -> (i32, i32) {
    %c0_i32 = arith.constant 0 : i32
    %c0_i32_0 = arith.constant 0 : i32
    %c0_i32_1 = arith.constant 0 : i32
    return %c0_i32, %c0_i32_0 : i32, i32
  }
  func.func @transform_5(%arg0: i32) -> (i32, i32) {
    %c0_i32 = arith.constant 0 : i32
    %c0_i32_0 = arith.constant 0 : i32
    %c0_i32_1 = arith.constant 0 : i32
    return %c0_i32, %c0_i32_0 : i32, i32
  }
  func.func @transform_6(%arg0: i32) -> (i32, i32) {
    %c0_i32 = arith.constant 0 : i32
    %c0_i32_0 = arith.constant 0 : i32
    %c0_i32_1 = arith.constant 0 : i32
    return %c0_i32, %c0_i32_0 : i32, i32
  }
  func.func @transform_7(%arg0: i32) -> (i32, i32) {
    %c0_i32 = arith.constant 0 : i32
    %c0_i32_0 = arith.constant 0 : i32
    return %arg0, %c0_i32 : i32, i32
  }
}

module attributes {stable_mosaic.version = 11 : i64} {
  func.func @_emb_mix_kernel(%arg0: i32, %arg1: memref<16x16xf32, #tpu.memory_space<vmem>>, %arg2: memref<16x32xbf16, #tpu.memory_space<vmem>>, %arg3: memref<1x32xf32, #tpu.memory_space<vmem>>, %arg4: memref<1x32xf32, #tpu.memory_space<vmem>>, %arg5: memref<1x32xf32, #tpu.memory_space<vmem>>, %arg6: memref<32x64xbf16, #tpu.memory_space<vmem>>, %arg7: memref<1x64xf32, #tpu.memory_space<vmem>>, %arg8: memref<64x32xbf16, #tpu.memory_space<vmem>>, %arg9: memref<1x32xf32, #tpu.memory_space<vmem>>, %arg10: memref<16x32xf32, #tpu.memory_space<vmem>>) attributes {dimension_semantics = [#tpu.dimension_semantics<parallel>], iteration_bounds = array<i64: 1>, scalar_prefetch = 0 : i64, scratch_operands = 0 : i64, tpu.core_type = #tpu.core_type<tc>, window_params = [{transform_indices = @transform_0, window_bounds = array<i64: 16, 16>}, {pipeline_mode = #tpu.pipeline_mode<synchronous>, transform_indices = @transform_1, window_bounds = array<i64: 16, 32>}, {pipeline_mode = #tpu.pipeline_mode<synchronous>, transform_indices = @transform_2, window_bounds = array<i64: 1, 32>}, {pipeline_mode = #tpu.pipeline_mode<synchronous>, transform_indices = @transform_3, window_bounds = array<i64: 1, 32>}, {pipeline_mode = #tpu.pipeline_mode<synchronous>, transform_indices = @transform_4, window_bounds = array<i64: 1, 32>}, {pipeline_mode = #tpu.pipeline_mode<synchronous>, transform_indices = @transform_5, window_bounds = array<i64: 32, 64>}, {pipeline_mode = #tpu.pipeline_mode<synchronous>, transform_indices = @transform_6, window_bounds = array<i64: 1, 64>}, {pipeline_mode = #tpu.pipeline_mode<synchronous>, transform_indices = @transform_7, window_bounds = array<i64: 64, 32>}, {pipeline_mode = #tpu.pipeline_mode<synchronous>, transform_indices = @transform_8, window_bounds = array<i64: 1, 32>}, {transform_indices = @transform_9, window_bounds = array<i64: 16, 32>}]} {
    %c0 = arith.constant 0 : index
    %c0_0 = arith.constant 0 : index
    %0 = vector.load %arg1[%c0, %c0_0] : memref<16x16xf32, #tpu.memory_space<vmem>>, vector<16x16xf32>
    %1 = arith.truncf %0 : vector<16x16xf32> to vector<16x16xbf16>
    %c0_1 = arith.constant 0 : index
    %c0_2 = arith.constant 0 : index
    %2 = vector.load %arg2[%c0_1, %c0_2] : memref<16x32xbf16, #tpu.memory_space<vmem>>, vector<16x32xbf16>
    %cst = arith.constant dense<0.000000e+00> : vector<16x32xf32>
    %3 = tpu.matmul %1, %2, %cst {dimension_numbers = #tpu.dot_dimension_numbers<[1], [0], [0], [1], [0, 0, 1, 1], [], []>} : vector<16x16xbf16>, vector<16x32xbf16>, vector<16x32xf32> -> vector<16x32xf32>
    %c0_3 = arith.constant 0 : index
    %c0_4 = arith.constant 0 : index
    %4 = vector.load %arg3[%c0_3, %c0_4] : memref<1x32xf32, #tpu.memory_space<vmem>>, vector<1x32xf32>
    %5 = vector.broadcast %4 : vector<1x32xf32> to vector<16x32xf32>
    %6 = arith.addf %3, %5 : vector<16x32xf32>
    %cst_5 = arith.constant dense<0.000000e+00> : vector<16xf32>
    %7 = vector.multi_reduction <add>, %6, %cst_5 [1] : vector<16x32xf32> to vector<16xf32>
    %8 = vector.shape_cast %7 : vector<16xf32> to vector<16x1xf32>
    %cst_6 = arith.constant 3.200000e+01 : f32
    %9 = vector.broadcast %cst_6 : f32 to vector<16x1xf32>
    %10 = arith.divf %8, %9 : vector<16x1xf32>
    %11 = vector.broadcast %10 : vector<16x1xf32> to vector<16x32xf32>
    %12 = arith.subf %6, %11 : vector<16x32xf32>
    %13 = arith.mulf %12, %12 : vector<16x32xf32>
    %cst_7 = arith.constant dense<0.000000e+00> : vector<16xf32>
    %14 = vector.multi_reduction <add>, %13, %cst_7 [1] : vector<16x32xf32> to vector<16xf32>
    %15 = vector.shape_cast %14 : vector<16xf32> to vector<16x1xf32>
    %cst_8 = arith.constant 3.200000e+01 : f32
    %16 = vector.broadcast %cst_8 : f32 to vector<16x1xf32>
    %17 = arith.divf %15, %16 : vector<16x1xf32>
    %cst_9 = arith.constant 9.99999974E-6 : f32
    %18 = vector.broadcast %cst_9 : f32 to vector<16x1xf32>
    %19 = arith.addf %17, %18 : vector<16x1xf32>
    %20 = math.rsqrt %19 : vector<16x1xf32>
    %21 = vector.broadcast %20 : vector<16x1xf32> to vector<16x32xf32>
    %22 = arith.mulf %12, %21 : vector<16x32xf32>
    %c0_10 = arith.constant 0 : index
    %c0_11 = arith.constant 0 : index
    %23 = vector.load %arg4[%c0_10, %c0_11] : memref<1x32xf32, #tpu.memory_space<vmem>>, vector<1x32xf32>
    %24 = vector.broadcast %23 : vector<1x32xf32> to vector<16x32xf32>
    %25 = arith.mulf %22, %24 : vector<16x32xf32>
    %c0_12 = arith.constant 0 : index
    %c0_13 = arith.constant 0 : index
    %26 = vector.load %arg5[%c0_12, %c0_13] : memref<1x32xf32, #tpu.memory_space<vmem>>, vector<1x32xf32>
    %27 = vector.broadcast %26 : vector<1x32xf32> to vector<16x32xf32>
    %28 = arith.addf %25, %27 : vector<16x32xf32>
    %29 = arith.truncf %28 : vector<16x32xf32> to vector<16x32xbf16>
    %c0_14 = arith.constant 0 : index
    %c0_15 = arith.constant 0 : index
    %30 = vector.load %arg6[%c0_14, %c0_15] : memref<32x64xbf16, #tpu.memory_space<vmem>>, vector<32x64xbf16>
    %cst_16 = arith.constant dense<0.000000e+00> : vector<16x64xf32>
    %31 = tpu.matmul %29, %30, %cst_16 {dimension_numbers = #tpu.dot_dimension_numbers<[1], [0], [0], [1], [0, 0, 1, 1], [], []>} : vector<16x32xbf16>, vector<32x64xbf16>, vector<16x64xf32> -> vector<16x64xf32>
    %c0_17 = arith.constant 0 : index
    %c0_18 = arith.constant 0 : index
    %32 = vector.load %arg7[%c0_17, %c0_18] : memref<1x64xf32, #tpu.memory_space<vmem>>, vector<1x64xf32>
    %33 = vector.broadcast %32 : vector<1x64xf32> to vector<16x64xf32>
    %34 = arith.addf %31, %33 : vector<16x64xf32>
    %cst_19 = arith.constant 5.000000e-01 : f32
    %35 = vector.broadcast %cst_19 : f32 to vector<16x64xf32>
    %36 = arith.mulf %35, %34 : vector<16x64xf32>
    %cst_20 = arith.constant 4.471500e-02 : f32
    %37 = vector.broadcast %cst_20 : f32 to vector<16x64xf32>
    %38 = arith.mulf %37, %34 : vector<16x64xf32>
    %39 = arith.mulf %38, %34 : vector<16x64xf32>
    %40 = arith.mulf %39, %34 : vector<16x64xf32>
    %41 = arith.addf %34, %40 : vector<16x64xf32>
    %cst_21 = arith.constant 0.797884583 : f32
    %42 = vector.broadcast %cst_21 : f32 to vector<16x64xf32>
    %43 = arith.mulf %42, %41 : vector<16x64xf32>
    %44 = math.tanh %43 : vector<16x64xf32>
    %cst_22 = arith.constant 1.000000e+00 : f32
    %45 = vector.broadcast %cst_22 : f32 to vector<16x64xf32>
    %46 = arith.addf %45, %44 : vector<16x64xf32>
    %47 = arith.mulf %36, %46 : vector<16x64xf32>
    %48 = arith.truncf %47 : vector<16x64xf32> to vector<16x64xbf16>
    %c0_23 = arith.constant 0 : index
    %c0_24 = arith.constant 0 : index
    %49 = vector.load %arg8[%c0_23, %c0_24] : memref<64x32xbf16, #tpu.memory_space<vmem>>, vector<64x32xbf16>
    %cst_25 = arith.constant dense<0.000000e+00> : vector<16x32xf32>
    %50 = tpu.matmul %48, %49, %cst_25 {dimension_numbers = #tpu.dot_dimension_numbers<[1], [0], [0], [1], [0, 0, 1, 1], [], []>} : vector<16x64xbf16>, vector<64x32xbf16>, vector<16x32xf32> -> vector<16x32xf32>
    %c0_26 = arith.constant 0 : index
    %c0_27 = arith.constant 0 : index
    %51 = vector.load %arg9[%c0_26, %c0_27] : memref<1x32xf32, #tpu.memory_space<vmem>>, vector<1x32xf32>
    %52 = vector.broadcast %51 : vector<1x32xf32> to vector<16x32xf32>
    %53 = arith.addf %50, %52 : vector<16x32xf32>
    %54 = arith.addf %53, %6 : vector<16x32xf32>
    %c0_28 = arith.constant 0 : index
    %c0_29 = arith.constant 0 : index
    %55 = vector.load %arg10[%c0_28, %c0_29] : memref<16x32xf32, #tpu.memory_space<vmem>>, vector<16x32xf32>
    tpu.vector_store %arg10[%c0_28, %c0_29], %54 {strides = array<i32>} : memref<16x32xf32, #tpu.memory_space<vmem>>, vector<16x32xf32>,
    return
  }
  func.func @transform_0(%arg0: i32) -> (i32, i32) {
    %c0_i32 = arith.constant 0 : i32
    %c0_i32_0 = arith.constant 0 : i32
    return %arg0, %c0_i32 : i32, i32
  }
  func.func @transform_1(%arg0: i32) -> (i32, i32) {
    %c0_i32 = arith.constant 0 : i32
    %c0_i32_0 = arith.constant 0 : i32
    %c0_i32_1 = arith.constant 0 : i32
    return %c0_i32, %c0_i32_0 : i32, i32
  }
  func.func @transform_2(%arg0: i32) -> (i32, i32) {
    %c0_i32 = arith.constant 0 : i32
    %c0_i32_0 = arith.constant 0 : i32
    %c0_i32_1 = arith.constant 0 : i32
    return %c0_i32, %c0_i32_0 : i32, i32
  }
  func.func @transform_3(%arg0: i32) -> (i32, i32) {
    %c0_i32 = arith.constant 0 : i32
    %c0_i32_0 = arith.constant 0 : i32
    %c0_i32_1 = arith.constant 0 : i32
    return %c0_i32, %c0_i32_0 : i32, i32
  }
  func.func @transform_4(%arg0: i32) -> (i32, i32) {
    %c0_i32 = arith.constant 0 : i32
    %c0_i32_0 = arith.constant 0 : i32
    %c0_i32_1 = arith.constant 0 : i32
    return %c0_i32, %c0_i32_0 : i32, i32
  }
  func.func @transform_5(%arg0: i32) -> (i32, i32) {
    %c0_i32 = arith.constant 0 : i32
    %c0_i32_0 = arith.constant 0 : i32
    %c0_i32_1 = arith.constant 0 : i32
    return %c0_i32, %c0_i32_0 : i32, i32
  }
  func.func @transform_6(%arg0: i32) -> (i32, i32) {
    %c0_i32 = arith.constant 0 : i32
    %c0_i32_0 = arith.constant 0 : i32
    %c0_i32_1 = arith.constant 0 : i32
    return %c0_i32, %c0_i32_0 : i32, i32
  }
  func.func @transform_7(%arg0: i32) -> (i32, i32) {
    %c0_i32 = arith.constant 0 : i32
    %c0_i32_0 = arith.constant 0 : i32
    %c0_i32_1 = arith.constant 0 : i32
    return %c0_i32, %c0_i32_0 : i32, i32
  }
  func.func @transform_8(%arg0: i32) -> (i32, i32) {
    %c0_i32 = arith.constant 0 : i32
    %c0_i32_0 = arith.constant 0 : i32
    %c0_i32_1 = arith.constant 0 : i32
    return %c0_i32, %c0_i32_0 : i32, i32
  }
  func.func @transform_9(%arg0: i32) -> (i32, i32) {
    %c0_i32 = arith.constant 0 : i32
    %c0_i32_0 = arith.constant 0 : i32
    return %arg0, %c0_i32 : i32, i32
  }
}

module attributes {stable_mosaic.version = 11 : i64} {
  func.func @_linear_bias_kernel(%arg0: i32, %arg1: memref<8x64xf32, #tpu.memory_space<vmem>>, %arg2: memref<64x8xbf16, #tpu.memory_space<vmem>>, %arg3: memref<1x8xf32, #tpu.memory_space<vmem>>, %arg4: memref<8x8xf32, #tpu.memory_space<vmem>>) attributes {dimension_semantics = [#tpu.dimension_semantics<parallel>], iteration_bounds = array<i64: 1>, scalar_prefetch = 0 : i64, scratch_operands = 0 : i64, tpu.core_type = #tpu.core_type<tc>, window_params = [{transform_indices = @transform_0, window_bounds = array<i64: 8, 64>}, {pipeline_mode = #tpu.pipeline_mode<synchronous>, transform_indices = @transform_1, window_bounds = array<i64: 64, 8>}, {pipeline_mode = #tpu.pipeline_mode<synchronous>, transform_indices = @transform_2, window_bounds = array<i64: 1, 8>}, {transform_indices = @transform_3, window_bounds = array<i64: 8, 8>}]} {
    %c0 = arith.constant 0 : index
    %c0_0 = arith.constant 0 : index
    %0 = vector.load %arg1[%c0, %c0_0] : memref<8x64xf32, #tpu.memory_space<vmem>>, vector<8x64xf32>
    %1 = arith.truncf %0 : vector<8x64xf32> to vector<8x64xbf16>
    %c0_1 = arith.constant 0 : index
    %c0_2 = arith.constant 0 : index
    %2 = vector.load %arg2[%c0_1, %c0_2] : memref<64x8xbf16, #tpu.memory_space<vmem>>, vector<64x8xbf16>
    %cst = arith.constant dense<0.000000e+00> : vector<8x8xf32>
    %3 = tpu.matmul %1, %2, %cst {dimension_numbers = #tpu.dot_dimension_numbers<[1], [0], [0], [1], [0, 0, 1, 1], [], []>} : vector<8x64xbf16>, vector<64x8xbf16>, vector<8x8xf32> -> vector<8x8xf32>
    %c0_3 = arith.constant 0 : index
    %c0_4 = arith.constant 0 : index
    %4 = vector.load %arg3[%c0_3, %c0_4] : memref<1x8xf32, #tpu.memory_space<vmem>>, vector<1x8xf32>
    %5 = vector.broadcast %4 : vector<1x8xf32> to vector<8x8xf32>
    %6 = arith.addf %3, %5 : vector<8x8xf32>
    %c0_5 = arith.constant 0 : index
    %c0_6 = arith.constant 0 : index
    %7 = vector.load %arg4[%c0_5, %c0_6] : memref<8x8xf32, #tpu.memory_space<vmem>>, vector<8x8xf32>
    tpu.vector_store %arg4[%c0_5, %c0_6], %6 {strides = array<i32>} : memref<8x8xf32, #tpu.memory_space<vmem>>, vector<8x8xf32>,
    return
  }
  func.func @transform_0(%arg0: i32) -> (i32, i32) {
    %c0_i32 = arith.constant 0 : i32
    %c0_i32_0 = arith.constant 0 : i32
    return %arg0, %c0_i32 : i32, i32
  }
  func.func @transform_1(%arg0: i32) -> (i32, i32) {
    %c0_i32 = arith.constant 0 : i32
    %c0_i32_0 = arith.constant 0 : i32
    %c0_i32_1 = arith.constant 0 : i32
    return %c0_i32, %c0_i32_0 : i32, i32
  }
  func.func @transform_2(%arg0: i32) -> (i32, i32) {
    %c0_i32 = arith.constant 0 : i32
    %c0_i32_0 = arith.constant 0 : i32
    %c0_i32_1 = arith.constant 0 : i32
    return %c0_i32, %c0_i32_0 : i32, i32
  }
  func.func @transform_3(%arg0: i32) -> (i32, i32) {
    %c0_i32 = arith.constant 0 : i32
    %c0_i32_0 = arith.constant 0 : i32
    return %arg0, %c0_i32 : i32, i32
  }
}

module attributes {stable_mosaic.version = 11 : i64} {
  func.func @_emb_mix_kernel(%arg0: i32, %arg1: memref<32x4xf32, #tpu.memory_space<vmem>>, %arg2: memref<4x8xbf16, #tpu.memory_space<vmem>>, %arg3: memref<1x8xf32, #tpu.memory_space<vmem>>, %arg4: memref<1x8xf32, #tpu.memory_space<vmem>>, %arg5: memref<1x8xf32, #tpu.memory_space<vmem>>, %arg6: memref<8x16xbf16, #tpu.memory_space<vmem>>, %arg7: memref<1x16xf32, #tpu.memory_space<vmem>>, %arg8: memref<16x8xbf16, #tpu.memory_space<vmem>>, %arg9: memref<1x8xf32, #tpu.memory_space<vmem>>, %arg10: memref<32x8xf32, #tpu.memory_space<vmem>>) attributes {dimension_semantics = [#tpu.dimension_semantics<parallel>], iteration_bounds = array<i64: 2>, scalar_prefetch = 0 : i64, scratch_operands = 0 : i64, tpu.core_type = #tpu.core_type<tc>, window_params = [{transform_indices = @transform_0, window_bounds = array<i64: 32, 4>}, {pipeline_mode = #tpu.pipeline_mode<synchronous>, transform_indices = @transform_1, window_bounds = array<i64: 4, 8>}, {pipeline_mode = #tpu.pipeline_mode<synchronous>, transform_indices = @transform_2, window_bounds = array<i64: 1, 8>}, {pipeline_mode = #tpu.pipeline_mode<synchronous>, transform_indices = @transform_3, window_bounds = array<i64: 1, 8>}, {pipeline_mode = #tpu.pipeline_mode<synchronous>, transform_indices = @transform_4, window_bounds = array<i64: 1, 8>}, {pipeline_mode = #tpu.pipeline_mode<synchronous>, transform_indices = @transform_5, window_bounds = array<i64: 8, 16>}, {pipeline_mode = #tpu.pipeline_mode<synchronous>, transform_indices = @transform_6, window_bounds = array<i64: 1, 16>}, {pipeline_mode = #tpu.pipeline_mode<synchronous>, transform_indices = @transform_7, window_bounds = array<i64: 16, 8>}, {pipeline_mode = #tpu.pipeline_mode<synchronous>, transform_indices = @transform_8, window_bounds = array<i64: 1, 8>}, {transform_indices = @transform_9, window_bounds = array<i64: 32, 8>}]} {
    %c0 = arith.constant 0 : index
    %c0_0 = arith.constant 0 : index
    %0 = vector.load %arg1[%c0, %c0_0] : memref<32x4xf32, #tpu.memory_space<vmem>>, vector<32x4xf32>
    %1 = arith.truncf %0 : vector<32x4xf32> to vector<32x4xbf16>
    %c0_1 = arith.constant 0 : index
    %c0_2 = arith.constant 0 : index
    %2 = vector.load %arg2[%c0_1, %c0_2] : memref<4x8xbf16, #tpu.memory_space<vmem>>, vector<4x8xbf16>
    %cst = arith.constant dense<0.000000e+00> : vector<32x8xf32>
    %3 = tpu.matmul %1, %2, %cst {dimension_numbers = #tpu.dot_dimension_numbers<[1], [0], [0], [1], [0, 0, 1, 1], [], []>} : vector<32x4xbf16>, vector<4x8xbf16>, vector<32x8xf32> -> vector<32x8xf32>
    %c0_3 = arith.constant 0 : index
    %c0_4 = arith.constant 0 : index
    %4 = vector.load %arg3[%c0_3, %c0_4] : memref<1x8xf32, #tpu.memory_space<vmem>>, vector<1x8xf32>
    %5 = vector.broadcast %4 : vector<1x8xf32> to vector<32x8xf32>
    %6 = arith.addf %3, %5 : vector<32x8xf32>
    %cst_5 = arith.constant dense<0.000000e+00> : vector<32xf32>
    %7 = vector.multi_reduction <add>, %6, %cst_5 [1] : vector<32x8xf32> to vector<32xf32>
    %8 = vector.shape_cast %7 : vector<32xf32> to vector<32x1xf32>
    %cst_6 = arith.constant 8.000000e+00 : f32
    %9 = vector.broadcast %cst_6 : f32 to vector<32x1xf32>
    %10 = arith.divf %8, %9 : vector<32x1xf32>
    %11 = vector.broadcast %10 : vector<32x1xf32> to vector<32x8xf32>
    %12 = arith.subf %6, %11 : vector<32x8xf32>
    %13 = arith.mulf %12, %12 : vector<32x8xf32>
    %cst_7 = arith.constant dense<0.000000e+00> : vector<32xf32>
    %14 = vector.multi_reduction <add>, %13, %cst_7 [1] : vector<32x8xf32> to vector<32xf32>
    %15 = vector.shape_cast %14 : vector<32xf32> to vector<32x1xf32>
    %cst_8 = arith.constant 8.000000e+00 : f32
    %16 = vector.broadcast %cst_8 : f32 to vector<32x1xf32>
    %17 = arith.divf %15, %16 : vector<32x1xf32>
    %cst_9 = arith.constant 9.99999974E-6 : f32
    %18 = vector.broadcast %cst_9 : f32 to vector<32x1xf32>
    %19 = arith.addf %17, %18 : vector<32x1xf32>
    %20 = math.rsqrt %19 : vector<32x1xf32>
    %21 = vector.broadcast %20 : vector<32x1xf32> to vector<32x8xf32>
    %22 = arith.mulf %12, %21 : vector<32x8xf32>
    %c0_10 = arith.constant 0 : index
    %c0_11 = arith.constant 0 : index
    %23 = vector.load %arg4[%c0_10, %c0_11] : memref<1x8xf32, #tpu.memory_space<vmem>>, vector<1x8xf32>
    %24 = vector.broadcast %23 : vector<1x8xf32> to vector<32x8xf32>
    %25 = arith.mulf %22, %24 : vector<32x8xf32>
    %c0_12 = arith.constant 0 : index
    %c0_13 = arith.constant 0 : index
    %26 = vector.load %arg5[%c0_12, %c0_13] : memref<1x8xf32, #tpu.memory_space<vmem>>, vector<1x8xf32>
    %27 = vector.broadcast %26 : vector<1x8xf32> to vector<32x8xf32>
    %28 = arith.addf %25, %27 : vector<32x8xf32>
    %29 = arith.truncf %28 : vector<32x8xf32> to vector<32x8xbf16>
    %c0_14 = arith.constant 0 : index
    %c0_15 = arith.constant 0 : index
    %30 = vector.load %arg6[%c0_14, %c0_15] : memref<8x16xbf16, #tpu.memory_space<vmem>>, vector<8x16xbf16>
    %cst_16 = arith.constant dense<0.000000e+00> : vector<32x16xf32>
    %31 = tpu.matmul %29, %30, %cst_16 {dimension_numbers = #tpu.dot_dimension_numbers<[1], [0], [0], [1], [0, 0, 1, 1], [], []>} : vector<32x8xbf16>, vector<8x16xbf16>, vector<32x16xf32> -> vector<32x16xf32>
    %c0_17 = arith.constant 0 : index
    %c0_18 = arith.constant 0 : index
    %32 = vector.load %arg7[%c0_17, %c0_18] : memref<1x16xf32, #tpu.memory_space<vmem>>, vector<1x16xf32>
    %33 = vector.broadcast %32 : vector<1x16xf32> to vector<32x16xf32>
    %34 = arith.addf %31, %33 : vector<32x16xf32>
    %cst_19 = arith.constant 5.000000e-01 : f32
    %35 = vector.broadcast %cst_19 : f32 to vector<32x16xf32>
    %36 = arith.mulf %35, %34 : vector<32x16xf32>
    %cst_20 = arith.constant 4.471500e-02 : f32
    %37 = vector.broadcast %cst_20 : f32 to vector<32x16xf32>
    %38 = arith.mulf %37, %34 : vector<32x16xf32>
    %39 = arith.mulf %38, %34 : vector<32x16xf32>
    %40 = arith.mulf %39, %34 : vector<32x16xf32>
    %41 = arith.addf %34, %40 : vector<32x16xf32>
    %cst_21 = arith.constant 0.797884583 : f32
    %42 = vector.broadcast %cst_21 : f32 to vector<32x16xf32>
    %43 = arith.mulf %42, %41 : vector<32x16xf32>
    %44 = math.tanh %43 : vector<32x16xf32>
    %cst_22 = arith.constant 1.000000e+00 : f32
    %45 = vector.broadcast %cst_22 : f32 to vector<32x16xf32>
    %46 = arith.addf %45, %44 : vector<32x16xf32>
    %47 = arith.mulf %36, %46 : vector<32x16xf32>
    %48 = arith.truncf %47 : vector<32x16xf32> to vector<32x16xbf16>
    %c0_23 = arith.constant 0 : index
    %c0_24 = arith.constant 0 : index
    %49 = vector.load %arg8[%c0_23, %c0_24] : memref<16x8xbf16, #tpu.memory_space<vmem>>, vector<16x8xbf16>
    %cst_25 = arith.constant dense<0.000000e+00> : vector<32x8xf32>
    %50 = tpu.matmul %48, %49, %cst_25 {dimension_numbers = #tpu.dot_dimension_numbers<[1], [0], [0], [1], [0, 0, 1, 1], [], []>} : vector<32x16xbf16>, vector<16x8xbf16>, vector<32x8xf32> -> vector<32x8xf32>
    %c0_26 = arith.constant 0 : index
    %c0_27 = arith.constant 0 : index
    %51 = vector.load %arg9[%c0_26, %c0_27] : memref<1x8xf32, #tpu.memory_space<vmem>>, vector<1x8xf32>
    %52 = vector.broadcast %51 : vector<1x8xf32> to vector<32x8xf32>
    %53 = arith.addf %50, %52 : vector<32x8xf32>
    %54 = arith.addf %53, %6 : vector<32x8xf32>
    %c0_28 = arith.constant 0 : index
    %c0_29 = arith.constant 0 : index
    %55 = vector.load %arg10[%c0_28, %c0_29] : memref<32x8xf32, #tpu.memory_space<vmem>>, vector<32x8xf32>
    tpu.vector_store %arg10[%c0_28, %c0_29], %54 {strides = array<i32>} : memref<32x8xf32, #tpu.memory_space<vmem>>, vector<32x8xf32>,
    return
  }
  func.func @transform_0(%arg0: i32) -> (i32, i32) {
    %c0_i32 = arith.constant 0 : i32
    %c0_i32_0 = arith.constant 0 : i32
    return %arg0, %c0_i32 : i32, i32
  }
  func.func @transform_1(%arg0: i32) -> (i32, i32) {
    %c0_i32 = arith.constant 0 : i32
    %c0_i32_0 = arith.constant 0 : i32
    %c0_i32_1 = arith.constant 0 : i32
    return %c0_i32, %c0_i32_0 : i32, i32
  }
  func.func @transform_2(%arg0: i32) -> (i32, i32) {
    %c0_i32 = arith.constant 0 : i32
    %c0_i32_0 = arith.constant 0 : i32
    %c0_i32_1 = arith.constant 0 : i32
    return %c0_i32, %c0_i32_0 : i32, i32
  }
  func.func @transform_3(%arg0: i32) -> (i32, i32) {
    %c0_i32 = arith.constant 0 : i32
    %c0_i32_0 = arith.constant 0 : i32
    %c0_i32_1 = arith.constant 0 : i32
    return %c0_i32, %c0_i32_0 : i32, i32
  }
  func.func @transform_4(%arg0: i32) -> (i32, i32) {
    %c0_i32 = arith.constant 0 : i32
    %c0_i32_0 = arith.constant 0 : i32
    %c0_i32_1 = arith.constant 0 : i32
    return %c0_i32, %c0_i32_0 : i32, i32
  }
  func.func @transform_5(%arg0: i32) -> (i32, i32) {
    %c0_i32 = arith.constant 0 : i32
    %c0_i32_0 = arith.constant 0 : i32
    %c0_i32_1 = arith.constant 0 : i32
    return %c0_i32, %c0_i32_0 : i32, i32
  }
  func.func @transform_6(%arg0: i32) -> (i32, i32) {
    %c0_i32 = arith.constant 0 : i32
    %c0_i32_0 = arith.constant 0 : i32
    %c0_i32_1 = arith.constant 0 : i32
    return %c0_i32, %c0_i32_0 : i32, i32
  }
  func.func @transform_7(%arg0: i32) -> (i32, i32) {
    %c0_i32 = arith.constant 0 : i32
    %c0_i32_0 = arith.constant 0 : i32
    %c0_i32_1 = arith.constant 0 : i32
    return %c0_i32, %c0_i32_0 : i32, i32
  }
  func.func @transform_8(%arg0: i32) -> (i32, i32) {
    %c0_i32 = arith.constant 0 : i32
    %c0_i32_0 = arith.constant 0 : i32
    %c0_i32_1 = arith.constant 0 : i32
    return %c0_i32, %c0_i32_0 : i32, i32
  }
  func.func @transform_9(%arg0: i32) -> (i32, i32) {
    %c0_i32 = arith.constant 0 : i32
    %c0_i32_0 = arith.constant 0 : i32
    return %arg0, %c0_i32 : i32, i32
  }
}

module attributes {stable_mosaic.version = 11 : i64} {
  func.func @_ln_mlp_res_kernel(%arg0: i32, %arg1: memref<32x8xf32, #tpu.memory_space<vmem>>, %arg2: memref<1x8xf32, #tpu.memory_space<vmem>>, %arg3: memref<1x8xf32, #tpu.memory_space<vmem>>, %arg4: memref<8x16xbf16, #tpu.memory_space<vmem>>, %arg5: memref<1x16xf32, #tpu.memory_space<vmem>>, %arg6: memref<16x8xbf16, #tpu.memory_space<vmem>>, %arg7: memref<1x8xf32, #tpu.memory_space<vmem>>, %arg8: memref<32x8xf32, #tpu.memory_space<vmem>>) attributes {dimension_semantics = [#tpu.dimension_semantics<parallel>], iteration_bounds = array<i64: 2>, scalar_prefetch = 0 : i64, scratch_operands = 0 : i64, tpu.core_type = #tpu.core_type<tc>, window_params = [{transform_indices = @transform_0, window_bounds = array<i64: 32, 8>}, {pipeline_mode = #tpu.pipeline_mode<synchronous>, transform_indices = @transform_1, window_bounds = array<i64: 1, 8>}, {pipeline_mode = #tpu.pipeline_mode<synchronous>, transform_indices = @transform_2, window_bounds = array<i64: 1, 8>}, {pipeline_mode = #tpu.pipeline_mode<synchronous>, transform_indices = @transform_3, window_bounds = array<i64: 8, 16>}, {pipeline_mode = #tpu.pipeline_mode<synchronous>, transform_indices = @transform_4, window_bounds = array<i64: 1, 16>}, {pipeline_mode = #tpu.pipeline_mode<synchronous>, transform_indices = @transform_5, window_bounds = array<i64: 16, 8>}, {pipeline_mode = #tpu.pipeline_mode<synchronous>, transform_indices = @transform_6, window_bounds = array<i64: 1, 8>}, {transform_indices = @transform_7, window_bounds = array<i64: 32, 8>}]} {
    %c0 = arith.constant 0 : index
    %c0_0 = arith.constant 0 : index
    %0 = vector.load %arg1[%c0, %c0_0] : memref<32x8xf32, #tpu.memory_space<vmem>>, vector<32x8xf32>
    %cst = arith.constant dense<0.000000e+00> : vector<32xf32>
    %1 = vector.multi_reduction <add>, %0, %cst [1] : vector<32x8xf32> to vector<32xf32>
    %2 = vector.shape_cast %1 : vector<32xf32> to vector<32x1xf32>
    %cst_1 = arith.constant 8.000000e+00 : f32
    %3 = vector.broadcast %cst_1 : f32 to vector<32x1xf32>
    %4 = arith.divf %2, %3 : vector<32x1xf32>
    %5 = vector.broadcast %4 : vector<32x1xf32> to vector<32x8xf32>
    %6 = arith.subf %0, %5 : vector<32x8xf32>
    %7 = arith.mulf %6, %6 : vector<32x8xf32>
    %cst_2 = arith.constant dense<0.000000e+00> : vector<32xf32>
    %8 = vector.multi_reduction <add>, %7, %cst_2 [1] : vector<32x8xf32> to vector<32xf32>
    %9 = vector.shape_cast %8 : vector<32xf32> to vector<32x1xf32>
    %cst_3 = arith.constant 8.000000e+00 : f32
    %10 = vector.broadcast %cst_3 : f32 to vector<32x1xf32>
    %11 = arith.divf %9, %10 : vector<32x1xf32>
    %cst_4 = arith.constant 9.99999974E-6 : f32
    %12 = vector.broadcast %cst_4 : f32 to vector<32x1xf32>
    %13 = arith.addf %11, %12 : vector<32x1xf32>
    %14 = math.rsqrt %13 : vector<32x1xf32>
    %15 = vector.broadcast %14 : vector<32x1xf32> to vector<32x8xf32>
    %16 = arith.mulf %6, %15 : vector<32x8xf32>
    %c0_5 = arith.constant 0 : index
    %c0_6 = arith.constant 0 : index
    %17 = vector.load %arg2[%c0_5, %c0_6] : memref<1x8xf32, #tpu.memory_space<vmem>>, vector<1x8xf32>
    %18 = vector.broadcast %17 : vector<1x8xf32> to vector<32x8xf32>
    %19 = arith.mulf %16, %18 : vector<32x8xf32>
    %c0_7 = arith.constant 0 : index
    %c0_8 = arith.constant 0 : index
    %20 = vector.load %arg3[%c0_7, %c0_8] : memref<1x8xf32, #tpu.memory_space<vmem>>, vector<1x8xf32>
    %21 = vector.broadcast %20 : vector<1x8xf32> to vector<32x8xf32>
    %22 = arith.addf %19, %21 : vector<32x8xf32>
    %23 = arith.truncf %22 : vector<32x8xf32> to vector<32x8xbf16>
    %c0_9 = arith.constant 0 : index
    %c0_10 = arith.constant 0 : index
    %24 = vector.load %arg4[%c0_9, %c0_10] : memref<8x16xbf16, #tpu.memory_space<vmem>>, vector<8x16xbf16>
    %cst_11 = arith.constant dense<0.000000e+00> : vector<32x16xf32>
    %25 = tpu.matmul %23, %24, %cst_11 {dimension_numbers = #tpu.dot_dimension_numbers<[1], [0], [0], [1], [0, 0, 1, 1], [], []>} : vector<32x8xbf16>, vector<8x16xbf16>, vector<32x16xf32> -> vector<32x16xf32>
    %c0_12 = arith.constant 0 : index
    %c0_13 = arith.constant 0 : index
    %26 = vector.load %arg5[%c0_12, %c0_13] : memref<1x16xf32, #tpu.memory_space<vmem>>, vector<1x16xf32>
    %27 = vector.broadcast %26 : vector<1x16xf32> to vector<32x16xf32>
    %28 = arith.addf %25, %27 : vector<32x16xf32>
    %cst_14 = arith.constant 5.000000e-01 : f32
    %29 = vector.broadcast %cst_14 : f32 to vector<32x16xf32>
    %30 = arith.mulf %29, %28 : vector<32x16xf32>
    %cst_15 = arith.constant 4.471500e-02 : f32
    %31 = vector.broadcast %cst_15 : f32 to vector<32x16xf32>
    %32 = arith.mulf %31, %28 : vector<32x16xf32>
    %33 = arith.mulf %32, %28 : vector<32x16xf32>
    %34 = arith.mulf %33, %28 : vector<32x16xf32>
    %35 = arith.addf %28, %34 : vector<32x16xf32>
    %cst_16 = arith.constant 0.797884583 : f32
    %36 = vector.broadcast %cst_16 : f32 to vector<32x16xf32>
    %37 = arith.mulf %36, %35 : vector<32x16xf32>
    %38 = math.tanh %37 : vector<32x16xf32>
    %cst_17 = arith.constant 1.000000e+00 : f32
    %39 = vector.broadcast %cst_17 : f32 to vector<32x16xf32>
    %40 = arith.addf %39, %38 : vector<32x16xf32>
    %41 = arith.mulf %30, %40 : vector<32x16xf32>
    %42 = arith.truncf %41 : vector<32x16xf32> to vector<32x16xbf16>
    %c0_18 = arith.constant 0 : index
    %c0_19 = arith.constant 0 : index
    %43 = vector.load %arg6[%c0_18, %c0_19] : memref<16x8xbf16, #tpu.memory_space<vmem>>, vector<16x8xbf16>
    %cst_20 = arith.constant dense<0.000000e+00> : vector<32x8xf32>
    %44 = tpu.matmul %42, %43, %cst_20 {dimension_numbers = #tpu.dot_dimension_numbers<[1], [0], [0], [1], [0, 0, 1, 1], [], []>} : vector<32x16xbf16>, vector<16x8xbf16>, vector<32x8xf32> -> vector<32x8xf32>
    %c0_21 = arith.constant 0 : index
    %c0_22 = arith.constant 0 : index
    %45 = vector.load %arg7[%c0_21, %c0_22] : memref<1x8xf32, #tpu.memory_space<vmem>>, vector<1x8xf32>
    %46 = vector.broadcast %45 : vector<1x8xf32> to vector<32x8xf32>
    %47 = arith.addf %44, %46 : vector<32x8xf32>
    %48 = arith.addf %47, %0 : vector<32x8xf32>
    %c0_23 = arith.constant 0 : index
    %c0_24 = arith.constant 0 : index
    %49 = vector.load %arg8[%c0_23, %c0_24] : memref<32x8xf32, #tpu.memory_space<vmem>>, vector<32x8xf32>
    tpu.vector_store %arg8[%c0_23, %c0_24], %48 {strides = array<i32>} : memref<32x8xf32, #tpu.memory_space<vmem>>, vector<32x8xf32>,
    return
  }
  func.func @transform_0(%arg0: i32) -> (i32, i32) {
    %c0_i32 = arith.constant 0 : i32
    %c0_i32_0 = arith.constant 0 : i32
    return %arg0, %c0_i32 : i32, i32
  }
  func.func @transform_1(%arg0: i32) -> (i32, i32) {
    %c0_i32 = arith.constant 0 : i32
    %c0_i32_0 = arith.constant 0 : i32
    %c0_i32_1 = arith.constant 0 : i32
    return %c0_i32, %c0_i32_0 : i32, i32
  }
  func.func @transform_2(%arg0: i32) -> (i32, i32) {
    %c0_i32 = arith.constant 0 : i32
    %c0_i32_0 = arith.constant 0 : i32
    %c0_i32_1 = arith.constant 0 : i32
    return %c0_i32, %c0_i32_0 : i32, i32
  }
  func.func @transform_3(%arg0: i32) -> (i32, i32) {
    %c0_i32 = arith.constant 0 : i32
    %c0_i32_0 = arith.constant 0 : i32
    %c0_i32_1 = arith.constant 0 : i32
    return %c0_i32, %c0_i32_0 : i32, i32
  }
  func.func @transform_4(%arg0: i32) -> (i32, i32) {
    %c0_i32 = arith.constant 0 : i32
    %c0_i32_0 = arith.constant 0 : i32
    %c0_i32_1 = arith.constant 0 : i32
    return %c0_i32, %c0_i32_0 : i32, i32
  }
  func.func @transform_5(%arg0: i32) -> (i32, i32) {
    %c0_i32 = arith.constant 0 : i32
    %c0_i32_0 = arith.constant 0 : i32
    %c0_i32_1 = arith.constant 0 : i32
    return %c0_i32, %c0_i32_0 : i32, i32
  }
  func.func @transform_6(%arg0: i32) -> (i32, i32) {
    %c0_i32 = arith.constant 0 : i32
    %c0_i32_0 = arith.constant 0 : i32
    %c0_i32_1 = arith.constant 0 : i32
    return %c0_i32, %c0_i32_0 : i32, i32
  }
  func.func @transform_7(%arg0: i32) -> (i32, i32) {
    %c0_i32 = arith.constant 0 : i32
    %c0_i32_0 = arith.constant 0 : i32
    return %arg0, %c0_i32 : i32, i32
  }
}

module attributes {stable_mosaic.version = 11 : i64} {
  func.func @_emb_mix_kernel(%arg0: i32, %arg1: memref<16x8xf32, #tpu.memory_space<vmem>>, %arg2: memref<8x16xbf16, #tpu.memory_space<vmem>>, %arg3: memref<1x16xf32, #tpu.memory_space<vmem>>, %arg4: memref<1x16xf32, #tpu.memory_space<vmem>>, %arg5: memref<1x16xf32, #tpu.memory_space<vmem>>, %arg6: memref<16x32xbf16, #tpu.memory_space<vmem>>, %arg7: memref<1x32xf32, #tpu.memory_space<vmem>>, %arg8: memref<32x16xbf16, #tpu.memory_space<vmem>>, %arg9: memref<1x16xf32, #tpu.memory_space<vmem>>, %arg10: memref<16x16xf32, #tpu.memory_space<vmem>>) attributes {dimension_semantics = [#tpu.dimension_semantics<parallel>], iteration_bounds = array<i64: 2>, scalar_prefetch = 0 : i64, scratch_operands = 0 : i64, tpu.core_type = #tpu.core_type<tc>, window_params = [{transform_indices = @transform_0, window_bounds = array<i64: 16, 8>}, {pipeline_mode = #tpu.pipeline_mode<synchronous>, transform_indices = @transform_1, window_bounds = array<i64: 8, 16>}, {pipeline_mode = #tpu.pipeline_mode<synchronous>, transform_indices = @transform_2, window_bounds = array<i64: 1, 16>}, {pipeline_mode = #tpu.pipeline_mode<synchronous>, transform_indices = @transform_3, window_bounds = array<i64: 1, 16>}, {pipeline_mode = #tpu.pipeline_mode<synchronous>, transform_indices = @transform_4, window_bounds = array<i64: 1, 16>}, {pipeline_mode = #tpu.pipeline_mode<synchronous>, transform_indices = @transform_5, window_bounds = array<i64: 16, 32>}, {pipeline_mode = #tpu.pipeline_mode<synchronous>, transform_indices = @transform_6, window_bounds = array<i64: 1, 32>}, {pipeline_mode = #tpu.pipeline_mode<synchronous>, transform_indices = @transform_7, window_bounds = array<i64: 32, 16>}, {pipeline_mode = #tpu.pipeline_mode<synchronous>, transform_indices = @transform_8, window_bounds = array<i64: 1, 16>}, {transform_indices = @transform_9, window_bounds = array<i64: 16, 16>}]} {
    %c0 = arith.constant 0 : index
    %c0_0 = arith.constant 0 : index
    %0 = vector.load %arg1[%c0, %c0_0] : memref<16x8xf32, #tpu.memory_space<vmem>>, vector<16x8xf32>
    %1 = arith.truncf %0 : vector<16x8xf32> to vector<16x8xbf16>
    %c0_1 = arith.constant 0 : index
    %c0_2 = arith.constant 0 : index
    %2 = vector.load %arg2[%c0_1, %c0_2] : memref<8x16xbf16, #tpu.memory_space<vmem>>, vector<8x16xbf16>
    %cst = arith.constant dense<0.000000e+00> : vector<16x16xf32>
    %3 = tpu.matmul %1, %2, %cst {dimension_numbers = #tpu.dot_dimension_numbers<[1], [0], [0], [1], [0, 0, 1, 1], [], []>} : vector<16x8xbf16>, vector<8x16xbf16>, vector<16x16xf32> -> vector<16x16xf32>
    %c0_3 = arith.constant 0 : index
    %c0_4 = arith.constant 0 : index
    %4 = vector.load %arg3[%c0_3, %c0_4] : memref<1x16xf32, #tpu.memory_space<vmem>>, vector<1x16xf32>
    %5 = vector.broadcast %4 : vector<1x16xf32> to vector<16x16xf32>
    %6 = arith.addf %3, %5 : vector<16x16xf32>
    %cst_5 = arith.constant dense<0.000000e+00> : vector<16xf32>
    %7 = vector.multi_reduction <add>, %6, %cst_5 [1] : vector<16x16xf32> to vector<16xf32>
    %8 = vector.shape_cast %7 : vector<16xf32> to vector<16x1xf32>
    %cst_6 = arith.constant 1.600000e+01 : f32
    %9 = vector.broadcast %cst_6 : f32 to vector<16x1xf32>
    %10 = arith.divf %8, %9 : vector<16x1xf32>
    %11 = vector.broadcast %10 : vector<16x1xf32> to vector<16x16xf32>
    %12 = arith.subf %6, %11 : vector<16x16xf32>
    %13 = arith.mulf %12, %12 : vector<16x16xf32>
    %cst_7 = arith.constant dense<0.000000e+00> : vector<16xf32>
    %14 = vector.multi_reduction <add>, %13, %cst_7 [1] : vector<16x16xf32> to vector<16xf32>
    %15 = vector.shape_cast %14 : vector<16xf32> to vector<16x1xf32>
    %cst_8 = arith.constant 1.600000e+01 : f32
    %16 = vector.broadcast %cst_8 : f32 to vector<16x1xf32>
    %17 = arith.divf %15, %16 : vector<16x1xf32>
    %cst_9 = arith.constant 9.99999974E-6 : f32
    %18 = vector.broadcast %cst_9 : f32 to vector<16x1xf32>
    %19 = arith.addf %17, %18 : vector<16x1xf32>
    %20 = math.rsqrt %19 : vector<16x1xf32>
    %21 = vector.broadcast %20 : vector<16x1xf32> to vector<16x16xf32>
    %22 = arith.mulf %12, %21 : vector<16x16xf32>
    %c0_10 = arith.constant 0 : index
    %c0_11 = arith.constant 0 : index
    %23 = vector.load %arg4[%c0_10, %c0_11] : memref<1x16xf32, #tpu.memory_space<vmem>>, vector<1x16xf32>
    %24 = vector.broadcast %23 : vector<1x16xf32> to vector<16x16xf32>
    %25 = arith.mulf %22, %24 : vector<16x16xf32>
    %c0_12 = arith.constant 0 : index
    %c0_13 = arith.constant 0 : index
    %26 = vector.load %arg5[%c0_12, %c0_13] : memref<1x16xf32, #tpu.memory_space<vmem>>, vector<1x16xf32>
    %27 = vector.broadcast %26 : vector<1x16xf32> to vector<16x16xf32>
    %28 = arith.addf %25, %27 : vector<16x16xf32>
    %29 = arith.truncf %28 : vector<16x16xf32> to vector<16x16xbf16>
    %c0_14 = arith.constant 0 : index
    %c0_15 = arith.constant 0 : index
    %30 = vector.load %arg6[%c0_14, %c0_15] : memref<16x32xbf16, #tpu.memory_space<vmem>>, vector<16x32xbf16>
    %cst_16 = arith.constant dense<0.000000e+00> : vector<16x32xf32>
    %31 = tpu.matmul %29, %30, %cst_16 {dimension_numbers = #tpu.dot_dimension_numbers<[1], [0], [0], [1], [0, 0, 1, 1], [], []>} : vector<16x16xbf16>, vector<16x32xbf16>, vector<16x32xf32> -> vector<16x32xf32>
    %c0_17 = arith.constant 0 : index
    %c0_18 = arith.constant 0 : index
    %32 = vector.load %arg7[%c0_17, %c0_18] : memref<1x32xf32, #tpu.memory_space<vmem>>, vector<1x32xf32>
    %33 = vector.broadcast %32 : vector<1x32xf32> to vector<16x32xf32>
    %34 = arith.addf %31, %33 : vector<16x32xf32>
    %cst_19 = arith.constant 5.000000e-01 : f32
    %35 = vector.broadcast %cst_19 : f32 to vector<16x32xf32>
    %36 = arith.mulf %35, %34 : vector<16x32xf32>
    %cst_20 = arith.constant 4.471500e-02 : f32
    %37 = vector.broadcast %cst_20 : f32 to vector<16x32xf32>
    %38 = arith.mulf %37, %34 : vector<16x32xf32>
    %39 = arith.mulf %38, %34 : vector<16x32xf32>
    %40 = arith.mulf %39, %34 : vector<16x32xf32>
    %41 = arith.addf %34, %40 : vector<16x32xf32>
    %cst_21 = arith.constant 0.797884583 : f32
    %42 = vector.broadcast %cst_21 : f32 to vector<16x32xf32>
    %43 = arith.mulf %42, %41 : vector<16x32xf32>
    %44 = math.tanh %43 : vector<16x32xf32>
    %cst_22 = arith.constant 1.000000e+00 : f32
    %45 = vector.broadcast %cst_22 : f32 to vector<16x32xf32>
    %46 = arith.addf %45, %44 : vector<16x32xf32>
    %47 = arith.mulf %36, %46 : vector<16x32xf32>
    %48 = arith.truncf %47 : vector<16x32xf32> to vector<16x32xbf16>
    %c0_23 = arith.constant 0 : index
    %c0_24 = arith.constant 0 : index
    %49 = vector.load %arg8[%c0_23, %c0_24] : memref<32x16xbf16, #tpu.memory_space<vmem>>, vector<32x16xbf16>
    %cst_25 = arith.constant dense<0.000000e+00> : vector<16x16xf32>
    %50 = tpu.matmul %48, %49, %cst_25 {dimension_numbers = #tpu.dot_dimension_numbers<[1], [0], [0], [1], [0, 0, 1, 1], [], []>} : vector<16x32xbf16>, vector<32x16xbf16>, vector<16x16xf32> -> vector<16x16xf32>
    %c0_26 = arith.constant 0 : index
    %c0_27 = arith.constant 0 : index
    %51 = vector.load %arg9[%c0_26, %c0_27] : memref<1x16xf32, #tpu.memory_space<vmem>>, vector<1x16xf32>
    %52 = vector.broadcast %51 : vector<1x16xf32> to vector<16x16xf32>
    %53 = arith.addf %50, %52 : vector<16x16xf32>
    %54 = arith.addf %53, %6 : vector<16x16xf32>
    %c0_28 = arith.constant 0 : index
    %c0_29 = arith.constant 0 : index
    %55 = vector.load %arg10[%c0_28, %c0_29] : memref<16x16xf32, #tpu.memory_space<vmem>>, vector<16x16xf32>
    tpu.vector_store %arg10[%c0_28, %c0_29], %54 {strides = array<i32>} : memref<16x16xf32, #tpu.memory_space<vmem>>, vector<16x16xf32>,
    return
  }
  func.func @transform_0(%arg0: i32) -> (i32, i32) {
    %c0_i32 = arith.constant 0 : i32
    %c0_i32_0 = arith.constant 0 : i32
    return %arg0, %c0_i32 : i32, i32
  }
  func.func @transform_1(%arg0: i32) -> (i32, i32) {
    %c0_i32 = arith.constant 0 : i32
    %c0_i32_0 = arith.constant 0 : i32
    %c0_i32_1 = arith.constant 0 : i32
    return %c0_i32, %c0_i32_0 : i32, i32
  }
  func.func @transform_2(%arg0: i32) -> (i32, i32) {
    %c0_i32 = arith.constant 0 : i32
    %c0_i32_0 = arith.constant 0 : i32
    %c0_i32_1 = arith.constant 0 : i32
    return %c0_i32, %c0_i32_0 : i32, i32
  }
  func.func @transform_3(%arg0: i32) -> (i32, i32) {
    %c0_i32 = arith.constant 0 : i32
    %c0_i32_0 = arith.constant 0 : i32
    %c0_i32_1 = arith.constant 0 : i32
    return %c0_i32, %c0_i32_0 : i32, i32
  }
  func.func @transform_4(%arg0: i32) -> (i32, i32) {
    %c0_i32 = arith.constant 0 : i32
    %c0_i32_0 = arith.constant 0 : i32
    %c0_i32_1 = arith.constant 0 : i32
    return %c0_i32, %c0_i32_0 : i32, i32
  }
  func.func @transform_5(%arg0: i32) -> (i32, i32) {
    %c0_i32 = arith.constant 0 : i32
    %c0_i32_0 = arith.constant 0 : i32
    %c0_i32_1 = arith.constant 0 : i32
    return %c0_i32, %c0_i32_0 : i32, i32
  }
  func.func @transform_6(%arg0: i32) -> (i32, i32) {
    %c0_i32 = arith.constant 0 : i32
    %c0_i32_0 = arith.constant 0 : i32
    %c0_i32_1 = arith.constant 0 : i32
    return %c0_i32, %c0_i32_0 : i32, i32
  }
  func.func @transform_7(%arg0: i32) -> (i32, i32) {
    %c0_i32 = arith.constant 0 : i32
    %c0_i32_0 = arith.constant 0 : i32
    %c0_i32_1 = arith.constant 0 : i32
    return %c0_i32, %c0_i32_0 : i32, i32
  }
  func.func @transform_8(%arg0: i32) -> (i32, i32) {
    %c0_i32 = arith.constant 0 : i32
    %c0_i32_0 = arith.constant 0 : i32
    %c0_i32_1 = arith.constant 0 : i32
    return %c0_i32, %c0_i32_0 : i32, i32
  }
  func.func @transform_9(%arg0: i32) -> (i32, i32) {
    %c0_i32 = arith.constant 0 : i32
    %c0_i32_0 = arith.constant 0 : i32
    return %arg0, %c0_i32 : i32, i32
  }
}

module attributes {stable_mosaic.version = 11 : i64} {
  func.func @_ln_mlp_res_kernel(%arg0: i32, %arg1: memref<64x4xf32, #tpu.memory_space<vmem>>, %arg2: memref<1x4xf32, #tpu.memory_space<vmem>>, %arg3: memref<1x4xf32, #tpu.memory_space<vmem>>, %arg4: memref<4x8xbf16, #tpu.memory_space<vmem>>, %arg5: memref<1x8xf32, #tpu.memory_space<vmem>>, %arg6: memref<8x4xbf16, #tpu.memory_space<vmem>>, %arg7: memref<1x4xf32, #tpu.memory_space<vmem>>, %arg8: memref<64x4xf32, #tpu.memory_space<vmem>>) attributes {dimension_semantics = [#tpu.dimension_semantics<parallel>], iteration_bounds = array<i64: 2>, scalar_prefetch = 0 : i64, scratch_operands = 0 : i64, tpu.core_type = #tpu.core_type<tc>, window_params = [{transform_indices = @transform_0, window_bounds = array<i64: 64, 4>}, {pipeline_mode = #tpu.pipeline_mode<synchronous>, transform_indices = @transform_1, window_bounds = array<i64: 1, 4>}, {pipeline_mode = #tpu.pipeline_mode<synchronous>, transform_indices = @transform_2, window_bounds = array<i64: 1, 4>}, {pipeline_mode = #tpu.pipeline_mode<synchronous>, transform_indices = @transform_3, window_bounds = array<i64: 4, 8>}, {pipeline_mode = #tpu.pipeline_mode<synchronous>, transform_indices = @transform_4, window_bounds = array<i64: 1, 8>}, {pipeline_mode = #tpu.pipeline_mode<synchronous>, transform_indices = @transform_5, window_bounds = array<i64: 8, 4>}, {pipeline_mode = #tpu.pipeline_mode<synchronous>, transform_indices = @transform_6, window_bounds = array<i64: 1, 4>}, {transform_indices = @transform_7, window_bounds = array<i64: 64, 4>}]} {
    %c0 = arith.constant 0 : index
    %c0_0 = arith.constant 0 : index
    %0 = vector.load %arg1[%c0, %c0_0] : memref<64x4xf32, #tpu.memory_space<vmem>>, vector<64x4xf32>
    %cst = arith.constant dense<0.000000e+00> : vector<64xf32>
    %1 = vector.multi_reduction <add>, %0, %cst [1] : vector<64x4xf32> to vector<64xf32>
    %2 = vector.shape_cast %1 : vector<64xf32> to vector<64x1xf32>
    %cst_1 = arith.constant 4.000000e+00 : f32
    %3 = vector.broadcast %cst_1 : f32 to vector<64x1xf32>
    %4 = arith.divf %2, %3 : vector<64x1xf32>
    %5 = vector.broadcast %4 : vector<64x1xf32> to vector<64x4xf32>
    %6 = arith.subf %0, %5 : vector<64x4xf32>
    %7 = arith.mulf %6, %6 : vector<64x4xf32>
    %cst_2 = arith.constant dense<0.000000e+00> : vector<64xf32>
    %8 = vector.multi_reduction <add>, %7, %cst_2 [1] : vector<64x4xf32> to vector<64xf32>
    %9 = vector.shape_cast %8 : vector<64xf32> to vector<64x1xf32>
    %cst_3 = arith.constant 4.000000e+00 : f32
    %10 = vector.broadcast %cst_3 : f32 to vector<64x1xf32>
    %11 = arith.divf %9, %10 : vector<64x1xf32>
    %cst_4 = arith.constant 9.99999974E-6 : f32
    %12 = vector.broadcast %cst_4 : f32 to vector<64x1xf32>
    %13 = arith.addf %11, %12 : vector<64x1xf32>
    %14 = math.rsqrt %13 : vector<64x1xf32>
    %15 = vector.broadcast %14 : vector<64x1xf32> to vector<64x4xf32>
    %16 = arith.mulf %6, %15 : vector<64x4xf32>
    %c0_5 = arith.constant 0 : index
    %c0_6 = arith.constant 0 : index
    %17 = vector.load %arg2[%c0_5, %c0_6] : memref<1x4xf32, #tpu.memory_space<vmem>>, vector<1x4xf32>
    %18 = vector.broadcast %17 : vector<1x4xf32> to vector<64x4xf32>
    %19 = arith.mulf %16, %18 : vector<64x4xf32>
    %c0_7 = arith.constant 0 : index
    %c0_8 = arith.constant 0 : index
    %20 = vector.load %arg3[%c0_7, %c0_8] : memref<1x4xf32, #tpu.memory_space<vmem>>, vector<1x4xf32>
    %21 = vector.broadcast %20 : vector<1x4xf32> to vector<64x4xf32>
    %22 = arith.addf %19, %21 : vector<64x4xf32>
    %23 = arith.truncf %22 : vector<64x4xf32> to vector<64x4xbf16>
    %c0_9 = arith.constant 0 : index
    %c0_10 = arith.constant 0 : index
    %24 = vector.load %arg4[%c0_9, %c0_10] : memref<4x8xbf16, #tpu.memory_space<vmem>>, vector<4x8xbf16>
    %cst_11 = arith.constant dense<0.000000e+00> : vector<64x8xf32>
    %25 = tpu.matmul %23, %24, %cst_11 {dimension_numbers = #tpu.dot_dimension_numbers<[1], [0], [0], [1], [0, 0, 1, 1], [], []>} : vector<64x4xbf16>, vector<4x8xbf16>, vector<64x8xf32> -> vector<64x8xf32>
    %c0_12 = arith.constant 0 : index
    %c0_13 = arith.constant 0 : index
    %26 = vector.load %arg5[%c0_12, %c0_13] : memref<1x8xf32, #tpu.memory_space<vmem>>, vector<1x8xf32>
    %27 = vector.broadcast %26 : vector<1x8xf32> to vector<64x8xf32>
    %28 = arith.addf %25, %27 : vector<64x8xf32>
    %cst_14 = arith.constant 5.000000e-01 : f32
    %29 = vector.broadcast %cst_14 : f32 to vector<64x8xf32>
    %30 = arith.mulf %29, %28 : vector<64x8xf32>
    %cst_15 = arith.constant 4.471500e-02 : f32
    %31 = vector.broadcast %cst_15 : f32 to vector<64x8xf32>
    %32 = arith.mulf %31, %28 : vector<64x8xf32>
    %33 = arith.mulf %32, %28 : vector<64x8xf32>
    %34 = arith.mulf %33, %28 : vector<64x8xf32>
    %35 = arith.addf %28, %34 : vector<64x8xf32>
    %cst_16 = arith.constant 0.797884583 : f32
    %36 = vector.broadcast %cst_16 : f32 to vector<64x8xf32>
    %37 = arith.mulf %36, %35 : vector<64x8xf32>
    %38 = math.tanh %37 : vector<64x8xf32>
    %cst_17 = arith.constant 1.000000e+00 : f32
    %39 = vector.broadcast %cst_17 : f32 to vector<64x8xf32>
    %40 = arith.addf %39, %38 : vector<64x8xf32>
    %41 = arith.mulf %30, %40 : vector<64x8xf32>
    %42 = arith.truncf %41 : vector<64x8xf32> to vector<64x8xbf16>
    %c0_18 = arith.constant 0 : index
    %c0_19 = arith.constant 0 : index
    %43 = vector.load %arg6[%c0_18, %c0_19] : memref<8x4xbf16, #tpu.memory_space<vmem>>, vector<8x4xbf16>
    %cst_20 = arith.constant dense<0.000000e+00> : vector<64x4xf32>
    %44 = tpu.matmul %42, %43, %cst_20 {dimension_numbers = #tpu.dot_dimension_numbers<[1], [0], [0], [1], [0, 0, 1, 1], [], []>} : vector<64x8xbf16>, vector<8x4xbf16>, vector<64x4xf32> -> vector<64x4xf32>
    %c0_21 = arith.constant 0 : index
    %c0_22 = arith.constant 0 : index
    %45 = vector.load %arg7[%c0_21, %c0_22] : memref<1x4xf32, #tpu.memory_space<vmem>>, vector<1x4xf32>
    %46 = vector.broadcast %45 : vector<1x4xf32> to vector<64x4xf32>
    %47 = arith.addf %44, %46 : vector<64x4xf32>
    %48 = arith.addf %47, %0 : vector<64x4xf32>
    %c0_23 = arith.constant 0 : index
    %c0_24 = arith.constant 0 : index
    %49 = vector.load %arg8[%c0_23, %c0_24] : memref<64x4xf32, #tpu.memory_space<vmem>>, vector<64x4xf32>
    tpu.vector_store %arg8[%c0_23, %c0_24], %48 {strides = array<i32>} : memref<64x4xf32, #tpu.memory_space<vmem>>, vector<64x4xf32>,
    return
  }
  func.func @transform_0(%arg0: i32) -> (i32, i32) {
    %c0_i32 = arith.constant 0 : i32
    %c0_i32_0 = arith.constant 0 : i32
    return %arg0, %c0_i32 : i32, i32
  }
  func.func @transform_1(%arg0: i32) -> (i32, i32) {
    %c0_i32 = arith.constant 0 : i32
    %c0_i32_0 = arith.constant 0 : i32
    %c0_i32_1 = arith.constant 0 : i32
    return %c0_i32, %c0_i32_0 : i32, i32
  }
  func.func @transform_2(%arg0: i32) -> (i32, i32) {
    %c0_i32 = arith.constant 0 : i32
    %c0_i32_0 = arith.constant 0 : i32
    %c0_i32_1 = arith.constant 0 : i32
    return %c0_i32, %c0_i32_0 : i32, i32
  }
  func.func @transform_3(%arg0: i32) -> (i32, i32) {
    %c0_i32 = arith.constant 0 : i32
    %c0_i32_0 = arith.constant 0 : i32
    %c0_i32_1 = arith.constant 0 : i32
    return %c0_i32, %c0_i32_0 : i32, i32
  }
  func.func @transform_4(%arg0: i32) -> (i32, i32) {
    %c0_i32 = arith.constant 0 : i32
    %c0_i32_0 = arith.constant 0 : i32
    %c0_i32_1 = arith.constant 0 : i32
    return %c0_i32, %c0_i32_0 : i32, i32
  }
  func.func @transform_5(%arg0: i32) -> (i32, i32) {
    %c0_i32 = arith.constant 0 : i32
    %c0_i32_0 = arith.constant 0 : i32
    %c0_i32_1 = arith.constant 0 : i32
    return %c0_i32, %c0_i32_0 : i32, i32
  }
  func.func @transform_6(%arg0: i32) -> (i32, i32) {
    %c0_i32 = arith.constant 0 : i32
    %c0_i32_0 = arith.constant 0 : i32
    %c0_i32_1 = arith.constant 0 : i32
    return %c0_i32, %c0_i32_0 : i32, i32
  }
  func.func @transform_7(%arg0: i32) -> (i32, i32) {
    %c0_i32 = arith.constant 0 : i32
    %c0_i32_0 = arith.constant 0 : i32
    return %arg0, %c0_i32 : i32, i32
  }
}

</mosaic_0001>

<llo_original>
// kernel: a_call__.17
$region0: #{a_call__.17}
  #allocation0 [shape = 'u32[]', space=smem, size = 0x4, offset = 0x4, fixed_abs, tag = 'smem constant byte address 0x4 - core index']
  #allocation1 [shape = 'u32[144,128]{1,0:T(1,128)}', space=vmem, size = 0x12000, scoped, tag = 'internal scratch']
  %s0 = inlined_call_operand.vmem [shape: f32[8,64], index: 0, kind: input, shape index: {}]
  %s1 = inlined_call_operand.vmem [shape: bf16[64,8], index: 1, kind: input, shape index: {}]
  %s2 = inlined_call_operand.vmem [shape: f32[1,8], index: 2, kind: input, shape index: {}]
  %s3 = inlined_call_operand.vmem [shape: f32[8,8], index: 3, kind: output, shape index: {}]
  %s4 = sld [smem:[#allocation0]]
  $region22: #{a_call__.17} parent=0
    _
  %s6 = ssub.s32 1, %s4
  %s7 = scalar_select 0, %s6, %s4
  // Predicated region
  $region2: #{a_call__.17} parent=0 // pred_check
    _
  $region3: #{a_call__.17} parent=0 // pred_check_branch
    %9 = sbr.rel (0) target = $region5
  $region4: #{a_call__.17} parent=0 // pred_region
    _
  $region5: #{a_call__.17} parent=0 // pred_fallthru
    _
  // Predicated region
  $region6: #{a_call__.17} parent=0 // pred_check
    _
  $region7: #{a_call__.17} parent=0 // pred_check_branch
    %11 = sbr.rel (0) target = $region9
  $region8: #{a_call__.17} parent=0 // pred_region
    _
  $region9: #{a_call__.17} parent=0 // pred_fallthru
    _
  // Predicated region
  $region10: #{a_call__.17} parent=0 // pred_check
    _
  $region11: #{a_call__.17} parent=0 // pred_check_branch
    %13 = sbr.rel (0) target = $region13
  $region12: #{a_call__.17} parent=0 // pred_region
    _
  $region13: #{a_call__.17} parent=0 // pred_fallthru
    _
  %v15 = vld [vmem:[%s0] sm:$0xff]
  %v16 = vpack.c.bf16 %v15, %v15
  %v17 = vld [vmem:[%s1] sm:$0xf]
  %v18 = vld [vmem:[%s1 + $0x4] sm:$0xf]
  %v19 = vld [vmem:[%s1 + $0x8] sm:$0xf]
  %v20 = vld [vmem:[%s1 + $0xc] sm:$0xf]
  %v21 = vld [vmem:[%s1 + $0x10] sm:$0xf]
  %v22 = vld [vmem:[%s1 + $0x14] sm:$0xf]
  %v23 = vld [vmem:[%s1 + $0x18] sm:$0xf]
  %v24 = vld [vmem:[%s1 + $0x1c] sm:$0xf]
  %v25 = vld [vmem:[%s2] sm:$0x1]
  %v27 = vlaneseq
  %v28 = vshrl.u32 %v27, 7
  %v29 = vsub.s32 0, %v28
  %v30 = vrot.slane %v25, %v29
  %v40 = vunpack.c.l.b16 %v17
  %v41 = vunpack.c.l.b16 %v18
  %v42 = vunpack.c.l.b16 %v19
  %v43 = vunpack.c.l.b16 %v20
  %v44 = vunpack.c.l.b16 %v21
  %v45 = vunpack.c.l.b16 %v22
  %v46 = vunpack.c.l.b16 %v23
  %v47 = vunpack.c.l.b16 %v24
  %v48 = vpack.c.b16 %v41, %v40
  %v49 = vpack.c.b16 %v43, %v42
  %v50 = vpack.c.b16 %v45, %v44
  %v51 = vpack.c.b16 %v47, %v46
  %vm56 = vcmask 523264
  %v58 = vsel %vm56, %v16, 0
  %60 = vmatprep.subr.bf16.mxu0 0
  %61 = vmatpush1.bf16.msra.mxu0 %v48
  %62 = vmatprep.subr.bf16.mxu0 0
  %63 = vmatpush1.bf16.msra.mxu0 %v49
  %64 = vmatprep.subr.bf16.mxu0 0
  %65 = vmatpush1.bf16.msra.mxu0 %v50
  %66 = vmatprep.subr.bf16.mxu0 0
  %67 = vmatpush1.bf16.msra.mxu0 %v51
  %68 = vmatprep.subr.bf16.mxu0 0
  %69 = vmatpush1.bf16.msra.mxu0 0
  %70 = vmatprep.subr.bf16.mxu0 0
  %71 = vmatpush1.bf16.msra.mxu0 0
  %72 = vmatprep.subr.bf16.mxu0 0
  %73 = vmatpush1.bf16.msra.mxu0 0
  %74 = vmatprep.subr.bf16.mxu0 0
  %75 = vmatpush1.bf16.msra.mxu0 0
  %76 = vmatprep.subr.bf16.mxu0 0
  %77 = vmatpush1.bf16.msra.mxu0 0
  %78 = vmatprep.subr.bf16.mxu0 0
  %79 = vmatpush1.bf16.msra.mxu0 0
  %80 = vmatprep.subr.bf16.mxu0 0
  %81 = vmatpush1.bf16.msra.mxu0 0
  %82 = vmatprep.subr.bf16.mxu0 0
  %83 = vmatpush1.bf16.msra.mxu0 0
  %84 = vmatprep.subr.bf16.mxu0 0
  %85 = vmatpush1.bf16.msra.mxu0 0
  %86 = vmatprep.subr.bf16.mxu0 0
  %87 = vmatpush1.bf16.msra.mxu0 0
  %88 = vmatprep.subr.bf16.mxu0 0
  %89 = vmatpush1.bf16.msra.mxu0 0
  %90 = vmatprep.subr.bf16.mxu0 0
  %91 = vmatpush1.bf16.msra.mxu0 0
  %92 = vmatprep.mubr.bf16.mxu0 0
  %93 = vmatmul.mubr.bf16.gmra.mrb[0].mxu0 %v58
  %v94 = vpop.f32.mrb[0].mxu0
  %v95 = vadd.f32 %v30, %v94
  %v96 = vpop.f32.mrb[0].mxu0
  %v97 = vpop.f32.mrb[0].mxu0
  %v98 = vpop.f32.mrb[0].mxu0
  %99 = vdwg.mxu0
  %vm100 = vcmask 64512
  %101 = vst.msk [vmem:[%s3] sm:$0xff] %vm100, %v95
  // Predicated region
  $region14: #{a_call__.17} parent=0 // pred_check
    _
  $region15: #{a_call__.17} parent=0 // pred_check_branch
    %103 = sbr.rel (0) target = $region17
  $region16: #{a_call__.17} parent=0 // pred_region
    _
  $region17: #{a_call__.17} parent=0 // pred_fallthru
    _
  // Predicated region
  $region18: #{a_call__.17} parent=0 // pred_check
    _
  $region19: #{a_call__.17} parent=0 // pred_check_branch
    %105 = sbr.rel (0) target = $region21
  $region20: #{a_call__.17} parent=0 // pred_region
    _
  $region21: #{a_call__.17} parent=0 // pred_fallthru
    _

// kernel: a_call__.15
$region0: #{a_call__.15}
  #allocation0 [shape = 'u32[]', space=smem, size = 0x4, offset = 0x4, fixed_abs, tag = 'smem constant byte address 0x4 - core index']
  #allocation1 [shape = 'u32[144,128]{1,0:T(1,128)}', space=vmem, size = 0x12000, scoped, tag = 'internal scratch']
  %s0 = inlined_call_operand.vmem [shape: f32[16,16], index: 0, kind: input, shape index: {}]
  %s1 = inlined_call_operand.vmem [shape: bf16[16,32], index: 1, kind: input, shape index: {}]
  %s2 = inlined_call_operand.vmem [shape: f32[1,32], index: 2, kind: input, shape index: {}]
  %s3 = inlined_call_operand.vmem [shape: f32[1,32], index: 3, kind: input, shape index: {}]
  %s4 = inlined_call_operand.vmem [shape: f32[1,32], index: 4, kind: input, shape index: {}]
  %s5 = inlined_call_operand.vmem [shape: bf16[32,64], index: 5, kind: input, shape index: {}]
  %s6 = inlined_call_operand.vmem [shape: f32[1,64], index: 6, kind: input, shape index: {}]
  %s7 = inlined_call_operand.vmem [shape: bf16[64,32], index: 7, kind: input, shape index: {}]
  %s8 = inlined_call_operand.vmem [shape: f32[1,32], index: 8, kind: input, shape index: {}]
  %s9 = inlined_call_operand.vmem [shape: f32[16,32], index: 9, kind: output, shape index: {}]
  %s10 = sld [smem:[#allocation0]]
  $region46: #{a_call__.15} parent=0
    _
  %s12 = ssub.s32 1, %s10
  %s13 = scalar_select 0, %s12, %s10
  // Predicated region
  $region2: #{a_call__.15} parent=0 // pred_check
    _
  $region3: #{a_call__.15} parent=0 // pred_check_branch
    %15 = sbr.rel (0) target = $region5
  $region4: #{a_call__.15} parent=0 // pred_region
    _
  $region5: #{a_call__.15} parent=0 // pred_fallthru
    _
  // Predicated region
  $region6: #{a_call__.15} parent=0 // pred_check
    _
  $region7: #{a_call__.15} parent=0 // pred_check_branch
    %17 = sbr.rel (0) target = $region9
  $region8: #{a_call__.15} parent=0 // pred_region
    _
  $region9: #{a_call__.15} parent=0 // pred_fallthru
    _
  // Predicated region
  $region10: #{a_call__.15} parent=0 // pred_check
    _
  $region11: #{a_call__.15} parent=0 // pred_check_branch
    %19 = sbr.rel (0) target = $region13
  $region12: #{a_call__.15} parent=0 // pred_region
    _
  $region13: #{a_call__.15} parent=0 // pred_fallthru
    _
  // Predicated region
  $region14: #{a_call__.15} parent=0 // pred_check
    _
  $region15: #{a_call__.15} parent=0 // pred_check_branch
    %21 = sbr.rel (0) target = $region17
  $region16: #{a_call__.15} parent=0 // pred_region
    _
  $region17: #{a_call__.15} parent=0 // pred_fallthru
    _
  // Predicated region
  $region18: #{a_call__.15} parent=0 // pred_check
    _
  $region19: #{a_call__.15} parent=0 // pred_check_branch
    %23 = sbr.rel (0) target = $region21
  $region20: #{a_call__.15} parent=0 // pred_region
    _
  $region21: #{a_call__.15} parent=0 // pred_fallthru
    _
  // Predicated region
  $region22: #{a_call__.15} parent=0 // pred_check
    _
  $region23: #{a_call__.15} parent=0 // pred_check_branch
    %25 = sbr.rel (0) target = $region25
  $region24: #{a_call__.15} parent=0 // pred_region
    _
  $region25: #{a_call__.15} parent=0 // pred_fallthru
    _
  // Predicated region
  $region26: #{a_call__.15} parent=0 // pred_check
    _
  $region27: #{a_call__.15} parent=0 // pred_check_branch
    %27 = sbr.rel (0) target = $region29
  $region28: #{a_call__.15} parent=0 // pred_region
    _
  $region29: #{a_call__.15} parent=0 // pred_fallthru
    _
  // Predicated region
  $region30: #{a_call__.15} parent=0 // pred_check
    _
  $region31: #{a_call__.15} parent=0 // pred_check_branch
    %29 = sbr.rel (0) target = $region33
  $region32: #{a_call__.15} parent=0 // pred_region
    _
  $region33: #{a_call__.15} parent=0 // pred_fallthru
    _
  // Predicated region
  $region34: #{a_call__.15} parent=0 // pred_check
    _
  $region35: #{a_call__.15} parent=0 // pred_check_branch
    %31 = sbr.rel (0) target = $region37
  $region36: #{a_call__.15} parent=0 // pred_region
    _
  $region37: #{a_call__.15} parent=0 // pred_fallthru
    _
  %v33 = vld [vmem:[%s0] sm:$0xff]
  %v34 = vld [vmem:[%s0 + $0x8] sm:$0xff]
  %v35 = vpack.c.bf16 %v34, %v33
  %v36 = vld [vmem:[%s1] sm:$0xf]
  %v37 = vld [vmem:[%s1 + $0x4] sm:$0xf]
  %v38 = vld [vmem:[%s2] sm:$0x1]
  %v40 = vlaneseq
  %v41 = vshrl.u32 %v40, 7
  %v42 = vsub.s32 0, %v41
  %v43 = vrot.slane %v38, %v42
  %v47 = vunpack.c.l.b16 %v36
  %v48 = vunpack.c.l.b16 %v37
  %v49 = vpack.c.b16 %v48, %v47
  %vm51 = vcmask 130048
  %v53 = vsel %vm51, %v35, 0
  %55 = vmatprep.subr.bf16.mxu0 0
  %56 = vmatpush1.bf16.msra.mxu0 %v49
  %57 = vmatprep.subr.bf16.mxu0 0
  %58 = vmatpush1.bf16.msra.mxu0 0
  %59 = vmatprep.subr.bf16.mxu0 0
  %60 = vmatpush1.bf16.msra.mxu0 0
  %61 = vmatprep.subr.bf16.mxu0 0
  %62 = vmatpush1.bf16.msra.mxu0 0
  %63 = vmatprep.subr.bf16.mxu0 0
  %64 = vmatpush1.bf16.msra.mxu0 0
  %65 = vmatprep.subr.bf16.mxu0 0
  %66 = vmatpush1.bf16.msra.mxu0 0
  %67 = vmatprep.subr.bf16.mxu0 0
  %68 = vmatpush1.bf16.msra.mxu0 0
  %69 = vmatprep.subr.bf16.mxu0 0
  %70 = vmatpush1.bf16.msra.mxu0 0
  %71 = vmatprep.subr.bf16.mxu0 0
  %72 = vmatpush1.bf16.msra.mxu0 0
  %73 = vmatprep.subr.bf16.mxu0 0
  %74 = vmatpush1.bf16.msra.mxu0 0
  %75 = vmatprep.subr.bf16.mxu0 0
  %76 = vmatpush1.bf16.msra.mxu0 0
  %77 = vmatprep.subr.bf16.mxu0 0
  %78 = vmatpush1.bf16.msra.mxu0 0
  %79 = vmatprep.subr.bf16.mxu0 0
  %80 = vmatpush1.bf16.msra.mxu0 0
  %81 = vmatprep.subr.bf16.mxu0 0
  %82 = vmatpush1.bf16.msra.mxu0 0
  %83 = vmatprep.subr.bf16.mxu0 0
  %84 = vmatpush1.bf16.msra.mxu0 0
  %85 = vmatprep.subr.bf16.mxu0 0
  %86 = vmatpush1.bf16.msra.mxu0 0
  %87 = vmatprep.mubr.bf16.mxu0 0
  %88 = vmatmul.mubr.bf16.gmra.mrb[0].mxu0 %v53
  %v89 = vpop.f32.mrb[0].mxu0
  %v90 = vadd.f32 %v43, %v89
  %v91 = vpop.f32.mrb[0].mxu0
  %v92 = vpop.f32.mrb[0].mxu0
  %v93 = vadd.f32 %v43, %v92
  %v94 = vpop.f32.mrb[0].mxu0
  %95 = vdwg.mxu0
  %vm96 = vcmask 261120
  %v97 = vsel %vm96, %v90, 0.0
  %98 = vadd.xlane.f32.xlu0 %v97
  %v99 = vpop.xlane.xlu0 %98
  %v100 = vsel %vm96, %v93, 0.0
  %101 = vadd.xlane.f32.xlu0 %v100
  %v102 = vpop.xlane.xlu0 %101
  %v103 = vrcp.pop 32.0
  %v104 = vmul.f32 %v99, %v103
  %v105 = vmul.f32 %v102, %v103
  %v106 = vsub.f32 %v90, %v104
  %v107 = vsub.f32 %v93, %v105
  %v108 = vmul.f32 %v106, %v106
  %v109 = vmul.f32 %v107, %v107
  %v110 = vsel %vm96, %v108, 0.0
  %111 = vadd.xlane.f32.xlu0 %v110
  %v112 = vpop.xlane.xlu0 %111
  %v113 = vsel %vm96, %v109, 0.0
  %114 = vadd.xlane.f32.xlu0 %v113
  %v115 = vpop.xlane.xlu0 %114
  %v116 = vmul.f32 %v112, %v103
  %v117 = vmul.f32 %v115, %v103
  %v118 = vadd.f32 %v116, 1e-05
  %v119 = vadd.f32 %v117, 1e-05
  %v120 = vrsqrt.pop %v118
  %v121 = vrsqrt.pop %v119
  %v122 = vmul.f32 %v106, %v120
  %v123 = vmul.f32 %v107, %v121
  %v124 = vld [vmem:[%s3] sm:$0x1]
  %v126 = vlaneseq
  %v127 = vshrl.u32 %v126, 7
  %v128 = vsub.s32 0, %v127
  %v129 = vrot.slane %v124, %v128
  %v131 = vmul.f32 %v122, %v129
  %v132 = vmul.f32 %v123, %v129
  %v133 = vld [vmem:[%s4] sm:$0x1]
  %v135 = vlaneseq
  %v136 = vshrl.u32 %v135, 7
  %v137 = vsub.s32 0, %v136
  %v138 = vrot.slane %v133, %v137
  %v140 = vadd.f32 %v131, %v138
  %v141 = vadd.f32 %v132, %v138
  %v142 = vpack.c.bf16 %v141, %v140
  %v143 = vld [vmem:[%s5] sm:$0xf]
  %v144 = vld [vmem:[%s5 + $0x4] sm:$0xf]
  %v145 = vld [vmem:[%s5 + $0x8] sm:$0xf]
  %v146 = vld [vmem:[%s5 + $0xc] sm:$0xf]
  %v147 = vld [vmem:[%s6] sm:$0x1]
  %v149 = vlaneseq
  %v150 = vshrl.u32 %v149, 7
  %v151 = vsub.s32 0, %v150
  %v152 = vrot.slane %v147, %v151
  %v158 = vunpack.c.l.b16 %v143
  %v159 = vunpack.c.l.b16 %v144
  %v160 = vunpack.c.l.b16 %v145
  %v161 = vunpack.c.l.b16 %v146
  %v162 = vpack.c.b16 %v159, %v158
  %v163 = vpack.c.b16 %v161, %v160
  %v167 = vsel %vm96, %v142, 0
  %169 = vmatprep.subr.bf16.mxu0 0
  %170 = vmatpush1.bf16.msra.mxu0 %v162
  %171 = vmatprep.subr.bf16.mxu0 0
  %172 = vmatpush1.bf16.msra.mxu0 %v163
  %173 = vmatprep.subr.bf16.mxu0 0
  %174 = vmatpush1.bf16.msra.mxu0 0
  %175 = vmatprep.subr.bf16.mxu0 0
  %176 = vmatpush1.bf16.msra.mxu0 0
  %177 = vmatprep.subr.bf16.mxu0 0
  %178 = vmatpush1.bf16.msra.mxu0 0
  %179 = vmatprep.subr.bf16.mxu0 0
  %180 = vmatpush1.bf16.msra.mxu0 0
  %181 = vmatprep.subr.bf16.mxu0 0
  %182 = vmatpush1.bf16.msra.mxu0 0
  %183 = vmatprep.subr.bf16.mxu0 0
  %184 = vmatpush1.bf16.msra.mxu0 0
  %185 = vmatprep.subr.bf16.mxu0 0
  %186 = vmatpush1.bf16.msra.mxu0 0
  %187 = vmatprep.subr.bf16.mxu0 0
  %188 = vmatpush1.bf16.msra.mxu0 0
  %189 = vmatprep.subr.bf16.mxu0 0
  %190 = vmatpush1.bf16.msra.mxu0 0
  %191 = vmatprep.subr.bf16.mxu0 0
  %192 = vmatpush1.bf16.msra.mxu0 0
  %193 = vmatprep.subr.bf16.mxu0 0
  %194 = vmatpush1.bf16.msra.mxu0 0
  %195 = vmatprep.subr.bf16.mxu0 0
  %196 = vmatpush1.bf16.msra.mxu0 0
  %197 = vmatprep.subr.bf16.mxu0 0
  %198 = vmatpush1.bf16.msra.mxu0 0
  %199 = vmatprep.subr.bf16.mxu0 0
  %200 = vmatpush1.bf16.msra.mxu0 0
  %201 = vmatprep.mubr.bf16.mxu0 0
  %202 = vmatmul.mubr.bf16.gmra.mrb[0].mxu0 %v167
  %v203 = vpop.f32.mrb[0].mxu0
  %v204 = vadd.f32 %v152, %v203
  %v205 = vpop.f32.mrb[0].mxu0
  %v206 = vpop.f32.mrb[0].mxu0
  %v207 = vadd.f32 %v152, %v206
  %v208 = vpop.f32.mrb[0].mxu0
  %209 = vdwg.mxu0
  %v210 = vmul.f32 %v204, 0.5
  %v211 = vmul.f32 %v207, 0.5
  %v212 = vmul.f32 %v204, 0.044715
  %v213 = vmul.f32 %v207, 0.044715
  %v214 = vmul.f32 %v212, %v204
  %v215 = vmul.f32 %v213, %v207
  %v216 = vmul.f32 %v214, %v204
  %v217 = vmul.f32 %v215, %v207
  %v218 = vadd.f32 %v204, %v216
  %v219 = vadd.f32 %v207, %v217
  %v220 = vmul.f32 %v218, 0.7978846
  %v221 = vmul.f32 %v219, 0.7978846
  %v222 = vtanh.pop %v220
  %v223 = vtanh.pop %v221
  %v224 = vadd.f32 %v222, 1.0
  %v225 = vadd.f32 %v223, 1.0
  %v226 = vmul.f32 %v210, %v224
  %v227 = vmul.f32 %v211, %v225
  %v228 = vpack.c.bf16 %v227, %v226
  %v229 = vld [vmem:[%s7] sm:$0xf]
  %v230 = vld [vmem:[%s7 + $0x4] sm:$0xf]
  %v231 = vld [vmem:[%s7 + $0x8] sm:$0xf]
  %v232 = vld [vmem:[%s7 + $0xc] sm:$0xf]
  %v233 = vld [vmem:[%s7 + $0x10] sm:$0xf]
  %v234 = vld [vmem:[%s7 + $0x14] sm:$0xf]
  %v235 = vld [vmem:[%s7 + $0x18] sm:$0xf]
  %v236 = vld [vmem:[%s7 + $0x1c] sm:$0xf]
  %v237 = vld [vmem:[%s8] sm:$0x1]
  %v239 = vlaneseq
  %v240 = vshrl.u32 %v239, 7
  %v241 = vsub.s32 0, %v240
  %v242 = vrot.slane %v237, %v241
  %v252 = vunpack.c.l.b16 %v229
  %v253 = vunpack.c.l.b16 %v230
  %v254 = vunpack.c.l.b16 %v231
  %v255 = vunpack.c.l.b16 %v232
  %v256 = vunpack.c.l.b16 %v233
  %v257 = vunpack.c.l.b16 %v234
  %v258 = vunpack.c.l.b16 %v235
  %v259 = vunpack.c.l.b16 %v236
  %v260 = vpack.c.b16 %v253, %v252
  %v261 = vpack.c.b16 %v255, %v254
  %v262 = vpack.c.b16 %v257, %v256
  %v263 = vpack.c.b16 %v259, %v258
  %vm268 = vcmask 523264
  %v270 = vsel %vm268, %v228, 0
  %272 = vmatprep.subr.bf16.mxu0 0
  %273 = vmatpush1.bf16.msra.mxu0 %v260
  %274 = vmatprep.subr.bf16.mxu0 0
  %275 = vmatpush1.bf16.msra.mxu0 %v261
  %276 = vmatprep.subr.bf16.mxu0 0
  %277 = vmatpush1.bf16.msra.mxu0 %v262
  %278 = vmatprep.subr.bf16.mxu0 0
  %279 = vmatpush1.bf16.msra.mxu0 %v263
  %280 = vmatprep.subr.bf16.mxu0 0
  %281 = vmatpush1.bf16.msra.mxu0 0
  %282 = vmatprep.subr.bf16.mxu0 0
  %283 = vmatpush1.bf16.msra.mxu0 0
  %284 = vmatprep.subr.bf16.mxu0 0
  %285 = vmatpush1.bf16.msra.mxu0 0
  %286 = vmatprep.subr.bf16.mxu0 0
  %287 = vmatpush1.bf16.msra.mxu0 0
  %288 = vmatprep.subr.bf16.mxu0 0
  %289 = vmatpush1.bf16.msra.mxu0 0
  %290 = vmatprep.subr.bf16.mxu0 0
  %291 = vmatpush1.bf16.msra.mxu0 0
  %292 = vmatprep.subr.bf16.mxu0 0
  %293 = vmatpush1.bf16.msra.mxu0 0
  %294 = vmatprep.subr.bf16.mxu0 0
  %295 = vmatpush1.bf16.msra.mxu0 0
  %296 = vmatprep.subr.bf16.mxu0 0
  %297 = vmatpush1.bf16.msra.mxu0 0
  %298 = vmatprep.subr.bf16.mxu0 0
  %299 = vmatpush1.bf16.msra.mxu0 0
  %300 = vmatprep.subr.bf16.mxu0 0
  %301 = vmatpush1.bf16.msra.mxu0 0
  %302 = vmatprep.subr.bf16.mxu0 0
  %303 = vmatpush1.bf16.msra.mxu0 0
  %304 = vmatprep.mubr.bf16.mxu0 0
  %305 = vmatmul.mubr.bf16.gmra.mrb[0].mxu0 %v270
  %v306 = vpop.f32.mrb[0].mxu0
  %v307 = vadd.f32 %v242, %v306
  %v308 = vpop.f32.mrb[0].mxu0
  %v309 = vpop.f32.mrb[0].mxu0
  %v310 = vadd.f32 %v242, %v309
  %v311 = vpop.f32.mrb[0].mxu0
  %312 = vdwg.mxu0
  %v313 = vadd.f32 %v307, %v90
  %v314 = vadd.f32 %v310, %v93
  %315 = vst.msk [vmem:[%s9] sm:$0xff] %vm96, %v313
  %316 = vst.msk [vmem:[%s9 + $0x8] sm:$0xff] %vm96, %v314
  // Predicated region
  $region38: #{a_call__.15} parent=0 // pred_check
    _
  $region39: #{a_call__.15} parent=0 // pred_check_branch
    %318 = sbr.rel (0) target = $region41
  $region40: #{a_call__.15} parent=0 // pred_region
    _
  $region41: #{a_call__.15} parent=0 // pred_fallthru
    _
  // Predicated region
  $region42: #{a_call__.15} parent=0 // pred_check
    _
  $region43: #{a_call__.15} parent=0 // pred_check_branch
    %320 = sbr.rel (0) target = $region45
  $region44: #{a_call__.15} parent=0 // pred_region
    _
  $region45: #{a_call__.15} parent=0 // pred_fallthru
    _

// kernel: a_call__.16
$region0: #{a_call__.16}
  #allocation0 [shape = 'u32[]', space=smem, size = 0x4, offset = 0x4, fixed_abs, tag = 'smem constant byte address 0x4 - core index']
  #allocation1 [shape = 'u32[144,128]{1,0:T(1,128)}', space=vmem, size = 0x12000, scoped, tag = 'internal scratch']
  %s0 = inlined_call_operand.vmem [shape: f32[256,2], index: 0, kind: input, shape index: {}]
  %s1 = inlined_call_operand.vmem [shape: f32[1,2], index: 1, kind: input, shape index: {}]
  %s2 = inlined_call_operand.vmem [shape: f32[1,2], index: 2, kind: input, shape index: {}]
  %s3 = inlined_call_operand.vmem [shape: bf16[2,4], index: 3, kind: input, shape index: {}]
  %s4 = inlined_call_operand.vmem [shape: f32[1,4], index: 4, kind: input, shape index: {}]
  %s5 = inlined_call_operand.vmem [shape: bf16[4,2], index: 5, kind: input, shape index: {}]
  %s6 = inlined_call_operand.vmem [shape: f32[1,2], index: 6, kind: input, shape index: {}]
  %s7 = inlined_call_operand.vmem [shape: f32[256,2], index: 7, kind: output, shape index: {}]
  %s8 = sld [smem:[#allocation0]]
  $region61: #{a_call__.16} parent=0
    _
  %s10 = ssub.s32 1, %s8
  %s11 = scalar_select 0, %s10, %s8
  loop: start=0, step=1, limit=4
  $region2: #{a_call__.16} parent=0 // loop_pre_header
    _
  $region3: #{a_call__.16} parent=0 // loop_header
    %s13 = sphi 0, %s17
    %p14 = scmp.ge.s32.totalorder %s13, 4
    %s23 = sphi 0, %s25
    %s26 = sphi 0, %s23
    %s27 = sphi 0, %s26
    %s43 = sphi 0, %s27
    %s47 = sphi 0, %s47
    %s49 = sphi 0, %s47
    %s50 = sphi 0, %s49
    %s64 = sphi 0, %s50
    %s68 = sphi 0, %s68
    %s70 = sphi 0, %s68
    %s71 = sphi 0, %s70
    %s85 = sphi 0, %s71
    %s89 = sphi 0, %s89
    %s91 = sphi 0, %s89
    %s92 = sphi 0, %s91
    %s106 = sphi 0, %s92
    %s110 = sphi 0, %s110
    %s112 = sphi 0, %s110
    %s113 = sphi 0, %s112
    %s127 = sphi 0, %s113
    %s131 = sphi 0, %s131
    %s133 = sphi 0, %s131
    %s134 = sphi 0, %s133
    %s148 = sphi 0, %s134
    %s152 = sphi 0, %s152
    %s154 = sphi 0, %s152
    %s155 = sphi 0, %s154
    %s169 = sphi 0, %s155
    %s175 = sphi 0, %s177
    %s178 = sphi 0, %s175
    %s179 = sphi 0, %s178
    %s195 = sphi 0, %s179
  $region4: #{a_call__.16} parent=0 // loop_header_branch
    %16 = sbr.rel (%p14) target = $region8
  $region5: #{a_call__.16} parent=0 // loop_body
    %s18 = ssub.s32 %s13, 1
    %s19 = ssub.s32 %s13, 2
    %s20 = sadd.s32 %s13, 1
    %s21 = ssub.s32 %s13, %s20
    %p22 = scmp.eq.s32.totalorder %s21, 0
    %s24 = sadd.s32 %s23, 1
    %s25 = scalar_select %p22, %s23, %s24
    %p28 = pneg %p22
    %p29 = scmp.eq.s32.totalorder %s13, 1
    %p30 = por %p28, %p29
    %p31 = scmp.ne.s32.totalorder %s23, %s26
    %p32 = scmp.eq.s32.totalorder %s13, 0
    %p33 = por %p31, %p32
    %p34 = scmp.ne.s32.totalorder %s23, %s26
    %p35 = scmp.eq.s32.totalorder %s18, 1
    %p36 = por %p34, %p35
    %p37 = scmp.ne.s32.totalorder %s26, %s27
    %p38 = scmp.eq.s32.totalorder %s18, 0
    %p39 = por %p37, %p38
    %p40 = scmp.ne.s32.totalorder %s26, %s27
    %p41 = scmp.eq.s32.totalorder %s19, 1
    %p42 = por %p40, %p41
    %p44 = scmp.ne.s32.totalorder %s27, %s43
    %p45 = scmp.eq.s32.totalorder %s19, 0
    %p46 = por %p44, %p45
    %s48 = sadd.s32 %s47, 1
    %p51 = scmp.eq.s32.totalorder %s13, 1
    %p52 = scmp.ne.s32.totalorder %s47, %s49
    %p53 = scmp.eq.s32.totalorder %s13, 0
    %p54 = por %p52, %p53
    %p55 = scmp.ne.s32.totalorder %s47, %s49
    %p56 = scmp.eq.s32.totalorder %s18, 1
    %p57 = por %p55, %p56
    %p58 = scmp.ne.s32.totalorder %s49, %s50
    %p59 = scmp.eq.s32.totalorder %s18, 0
    %p60 = por %p58, %p59
    %p61 = scmp.ne.s32.totalorder %s49, %s50
    %p62 = scmp.eq.s32.totalorder %s19, 1
    %p63 = por %p61, %p62
    %p65 = scmp.ne.s32.totalorder %s50, %s64
    %p66 = scmp.eq.s32.totalorder %s19, 0
    %p67 = por %p65, %p66
    %s69 = sadd.s32 %s68, 1
    %p72 = scmp.eq.s32.totalorder %s13, 1
    %p73 = scmp.ne.s32.totalorder %s68, %s70
    %p74 = scmp.eq.s32.totalorder %s13, 0
    %p75 = por %p73, %p74
    %p76 = scmp.ne.s32.totalorder %s68, %s70
    %p77 = scmp.eq.s32.totalorder %s18, 1
    %p78 = por %p76, %p77
    %p79 = scmp.ne.s32.totalorder %s70, %s71
    %p80 = scmp.eq.s32.totalorder %s18, 0
    %p81 = por %p79, %p80
    %p82 = scmp.ne.s32.totalorder %s70, %s71
    %p83 = scmp.eq.s32.totalorder %s19, 1
    %p84 = por %p82, %p83
    %p86 = scmp.ne.s32.totalorder %s71, %s85
    %p87 = scmp.eq.s32.totalorder %s19, 0
    %p88 = por %p86, %p87
    %s90 = sadd.s32 %s89, 1
    %p93 = scmp.eq.s32.totalorder %s13, 1
    %p94 = scmp.ne.s32.totalorder %s89, %s91
    %p95 = scmp.eq.s32.totalorder %s13, 0
    %p96 = por %p94, %p95
    %p97 = scmp.ne.s32.totalorder %s89, %s91
    %p98 = scmp.eq.s32.totalorder %s18, 1
    %p99 = por %p97, %p98
    %p100 = scmp.ne.s32.totalorder %s91, %s92
    %p101 = scmp.eq.s32.totalorder %s18, 0
    %p102 = por %p100, %p101
    %p103 = scmp.ne.s32.totalorder %s91, %s92
    %p104 = scmp.eq.s32.totalorder %s19, 1
    %p105 = por %p103, %p104
    %p107 = scmp.ne.s32.totalorder %s92, %s106
    %p108 = scmp.eq.s32.totalorder %s19, 0
    %p109 = por %p107, %p108
    %s111 = sadd.s32 %s110, 1
    %p114 = scmp.eq.s32.totalorder %s13, 1
    %p115 = scmp.ne.s32.totalorder %s110, %s112
    %p116 = scmp.eq.s32.totalorder %s13, 0
    %p117 = por %p115, %p116
    %p118 = scmp.ne.s32.totalorder %s110, %s112
    %p119 = scmp.eq.s32.totalorder %s18, 1
    %p120 = por %p118, %p119
    %p121 = scmp.ne.s32.totalorder %s112, %s113
    %p122 = scmp.eq.s32.totalorder %s18, 0
    %p123 = por %p121, %p122
    %p124 = scmp.ne.s32.totalorder %s112, %s113
    %p125 = scmp.eq.s32.totalorder %s19, 1
    %p126 = por %p124, %p125
    %p128 = scmp.ne.s32.totalorder %s113, %s127
    %p129 = scmp.eq.s32.totalorder %s19, 0
    %p130 = por %p128, %p129
    %s132 = sadd.s32 %s131, 1
    %p135 = scmp.eq.s32.totalorder %s13, 1
    %p136 = scmp.ne.s32.totalorder %s131, %s133
    %p137 = scmp.eq.s32.totalorder %s13, 0
    %p138 = por %p136, %p137
    %p139 = scmp.ne.s32.totalorder %s131, %s133
    %p140 = scmp.eq.s32.totalorder %s18, 1
    %p141 = por %p139, %p140
    %p142 = scmp.ne.s32.totalorder %s133, %s134
    %p143 = scmp.eq.s32.totalorder %s18, 0
    %p144 = por %p142, %p143
    %p145 = scmp.ne.s32.totalorder %s133, %s134
    %p146 = scmp.eq.s32.totalorder %s19, 1
    %p147 = por %p145, %p146
    %p149 = scmp.ne.s32.totalorder %s134, %s148
    %p150 = scmp.eq.s32.totalorder %s19, 0
    %p151 = por %p149, %p150
    %s153 = sadd.s32 %s152, 1
    %p156 = scmp.eq.s32.totalorder %s13, 1
    %p157 = scmp.ne.s32.totalorder %s152, %s154
    %p158 = scmp.eq.s32.totalorder %s13, 0
    %p159 = por %p157, %p158
    %p160 = scmp.ne.s32.totalorder %s152, %s154
    %p161 = scmp.eq.s32.totalorder %s18, 1
    %p162 = por %p160, %p161
    %p163 = scmp.ne.s32.totalorder %s154, %s155
    %p164 = scmp.eq.s32.totalorder %s18, 0
    %p165 = por %p163, %p164
    %p166 = scmp.ne.s32.totalorder %s154, %s155
    %p167 = scmp.eq.s32.totalorder %s19, 1
    %p168 = por %p166, %p167
    %p170 = scmp.ne.s32.totalorder %s155, %s169
    %p171 = scmp.eq.s32.totalorder %s19, 0
    %p172 = por %p170, %p171
    %s173 = ssub.s32 %s13, %s20
    %p174 = scmp.eq.s32.totalorder %s173, 0
    %s176 = sadd.s32 %s175, 1
    %s177 = scalar_select %p174, %s175, %s176
    %p180 = pneg %p174
    %p181 = scmp.eq.s32.totalorder %s13, 1
    %p182 = por %p180, %p181
    %p183 = scmp.ne.s32.totalorder %s175, %s178
    %p184 = scmp.eq.s32.totalorder %s13, 0
    %p185 = por %p183, %p184
    %p186 = scmp.ne.s32.totalorder %s175, %s178
    %p187 = scmp.eq.s32.totalorder %s18, 1
    %p188 = por %p186, %p187
    %p189 = scmp.ne.s32.totalorder %s178, %s179
    %p190 = scmp.eq.s32.totalorder %s18, 0
    %p191 = por %p189, %p190
    %p192 = scmp.ne.s32.totalorder %s178, %s179
    %p193 = scmp.eq.s32.totalorder %s19, 1
    %p194 = por %p192, %p193
    %p196 = scmp.ne.s32.totalorder %s179, %s195
    %p197 = scmp.eq.s32.totalorder %s19, 0
    %p198 = por %p196, %p197
    %p199 = scmp.le.s32.totalorder 1, %s13
    %p200 = scmp.lt.s32.totalorder %s13, 3
    %p201 = pnand %p199, %p200
    %p202 = pneg %p201
    // Predicated region
    $region9: #{a_call__.16} parent=5 // pred_check
      _
    $region10: #{a_call__.16} parent=5 // pred_check_branch
      %204 = sbr.rel (%p201) target = $region12
    $region11: #{a_call__.16} parent=5 // pred_region
      %s205 = ssub.s32 %s13, 1
      // Predicated region
      $region13: #{a_call__.16} parent=11 // pred_check
        %p206 = pneg %p60
      $region14: #{a_call__.16} parent=11 // pred_check_branch
        %208 = sbr.rel (%p206) target = $region16
      $region15: #{a_call__.16} parent=11 // pred_region
        _
      $region16: #{a_call__.16} parent=11 // pred_fallthru
        _
      // Predicated region
      $region17: #{a_call__.16} parent=11 // pred_check
        %p209 = pneg %p81
      $region18: #{a_call__.16} parent=11 // pred_check_branch
        %211 = sbr.rel (%p209) target = $region20
      $region19: #{a_call__.16} parent=11 // pred_region
        _
      $region20: #{a_call__.16} parent=11 // pred_fallthru
        _
      // Predicated region
      $region21: #{a_call__.16} parent=11 // pred_check
        %p212 = pneg %p102
      $region22: #{a_call__.16} parent=11 // pred_check_branch
        %214 = sbr.rel (%p212) target = $region24
      $region23: #{a_call__.16} parent=11 // pred_region
        _
      $region24: #{a_call__.16} parent=11 // pred_fallthru
        _
      // Predicated region
      $region25: #{a_call__.16} parent=11 // pred_check
        %p215 = pneg %p123
      $region26: #{a_call__.16} parent=11 // pred_check_branch
        %217 = sbr.rel (%p215) target = $region28
      $region27: #{a_call__.16} parent=11 // pred_region
        _
      $region28: #{a_call__.16} parent=11 // pred_fallthru
        _
      // Predicated region
      $region29: #{a_call__.16} parent=11 // pred_check
        %p218 = pneg %p144
      $region30: #{a_call__.16} parent=11 // pred_check_branch
        %220 = sbr.rel (%p218) target = $region32
      $region31: #{a_call__.16} parent=11 // pred_region
        _
      $region32: #{a_call__.16} parent=11 // pred_fallthru
        _
      // Predicated region
      $region33: #{a_call__.16} parent=11 // pred_check
        %p221 = pneg %p165
      $region34: #{a_call__.16} parent=11 // pred_check_branch
        %223 = sbr.rel (%p221) target = $region36
      $region35: #{a_call__.16} parent=11 // pred_region
        _
      $region36: #{a_call__.16} parent=11 // pred_fallthru
        _
    $region12: #{a_call__.16} parent=5 // pred_fallthru
      _
    %p224 = scmp.lt.s32.totalorder %s13, 2
    // Predicated region
    $region37: #{a_call__.16} parent=5 // pred_check
      %p225 = pneg %p224
    $region38: #{a_call__.16} parent=5 // pred_check_branch
      %227 = sbr.rel (%p225) target = $region40
    $region39: #{a_call__.16} parent=5 // pred_region
      // Predicated region
      $region41: #{a_call__.16} parent=39 // pred_check
        %p228 = pneg %p33
      $region42: #{a_call__.16} parent=39 // pred_check_branch
        %230 = sbr.rel (%p228) target = $region44
      $region43: #{a_call__.16} parent=39 // pred_region
        %s231 = smul.u32 16, %s13
        %p232 = scmp.lt.s32.totalorder %s231, 31
        %s233 = scalar_select %p232, %s231, 31
        %s234 = smul.addr %s233, 8
        %s235 = scalar_lea.vmem %s0, %s234
        %s236 = smul.u32 16, %s13
      $region44: #{a_call__.16} parent=39 // pred_fallthru
        _
    $region40: #{a_call__.16} parent=5 // pred_fallthru
      _
    %p237 = scmp.le.s32.totalorder 1, %s13
    %p238 = scmp.lt.s32.totalorder %s13, 3
    %p239 = pnand %p237, %p238
    %p240 = pneg %p239
    // Predicated region
    $region45: #{a_call__.16} parent=5 // pred_check
      _
    $region46: #{a_call__.16} parent=5 // pred_check_branch
      %242 = sbr.rel (%p239) target = $region48
    $region47: #{a_call__.16} parent=5 // pred_region
      %s243 = ssub.s32 %s13, 1
      %s244 = smul.u32 16, %s18
      %p245 = scmp.lt.s32.totalorder %s244, 31
      %s246 = scalar_select %p245, %s244, 31
      %s247 = smul.addr %s246, 8
      %s248 = scalar_lea.vmem %s0, %s247
      %p249 = pneg %p39
      %p250 = pneg %p36
      %p251 = pneg %p60
      %p252 = pneg %p57
      %p253 = pneg %p81
      %p254 = pneg %p78
      %p255 = pneg %p102
      %p256 = pneg %p99
      %p257 = pneg %p123
      %p258 = pneg %p120
      %p259 = pneg %p144
      %p260 = pneg %p141
      %p261 = pneg %p165
      %p262 = pneg %p162
      %p263 = pneg %p191
      %p264 = pneg %p188
      %s265 = smul.u32 16, %s18
      %p266 = scmp.lt.s32.totalorder %s265, 31
      %s267 = scalar_select %p266, %s265, 31
      %s268 = smul.addr %s267, 8
      %s269 = scalar_lea.vmem %s7, %s268
      %s270 = smul.u32 16, %s18
      %p271 = scmp.lt.s32.totalorder %s270, 31
      %s272 = scalar_select %p271, %s270, 31
      %s273 = smul.addr %s272, 8
      %s274 = scalar_lea.vmem %s0, %s273
      %s275 = smul.u32 16, %s18
      %s276 = smul.u32 16, %s18
      %p277 = scmp.lt.s32.totalorder %s276, 31
      %s278 = scalar_select %p277, %s276, 31
      %s279 = smul.addr %s278, 8
      %s280 = scalar_lea.vmem %s7, %s279
      %s281 = smul.u32 16, %s18
      %v283 = vld [vmem:[%s274] sm:$0xff]
      %v284 = vld [vmem:[%s274 + $0x8] sm:$0xff]
      %v285 = vld [vmem:[%s274 + $0x10] sm:$0xff]
      %v286 = vld [vmem:[%s274 + $0x18] sm:$0xff]
      %v287 = vld [vmem:[%s274 + $0x20] sm:$0xff]
      %v288 = vld [vmem:[%s274 + $0x28] sm:$0xff]
      %v289 = vld [vmem:[%s274 + $0x30] sm:$0xff]
      %v290 = vld [vmem:[%s274 + $0x38] sm:$0xff]
      %v291 = vld [vmem:[%s274 + $0x40] sm:$0xff]
      %v292 = vld [vmem:[%s274 + $0x48] sm:$0xff]
      %v293 = vld [vmem:[%s274 + $0x50] sm:$0xff]
      %v294 = vld [vmem:[%s274 + $0x58] sm:$0xff]
      %v295 = vld [vmem:[%s274 + $0x60] sm:$0xff]
      %v296 = vld [vmem:[%s274 + $0x68] sm:$0xff]
      %v297 = vld [vmem:[%s274 + $0x70] sm:$0xff]
      %v298 = vld [vmem:[%s274 + $0x78] sm:$0xff]
      %vm299 = vcmask 15360
      %v300 = vsel %vm299, %v283, 0.0
      %301 = vadd.xlane.f32.xlu0 %v300
      %v302 = vpop.xlane.xlu0 %301
      %v303 = vsel %vm299, %v284, 0.0
      %304 = vadd.xlane.f32.xlu0 %v303
      %v305 = vpop.xlane.xlu0 %304
      %v306 = vsel %vm299, %v285, 0.0
      %307 = vadd.xlane.f32.xlu0 %v306
      %v308 = vpop.xlane.xlu0 %307
      %v309 = vsel %vm299, %v286, 0.0
      %310 = vadd.xlane.f32.xlu0 %v309
      %v311 = vpop.xlane.xlu0 %310
      %v312 = vsel %vm299, %v287, 0.0
      %313 = vadd.xlane.f32.xlu0 %v312
      %v314 = vpop.xlane.xlu0 %313
      %v315 = vsel %vm299, %v288, 0.0
      %316 = vadd.xlane.f32.xlu0 %v315
      %v317 = vpop.xlane.xlu0 %316
      %v318 = vsel %vm299, %v289, 0.0
      %319 = vadd.xlane.f32.xlu0 %v318
      %v320 = vpop.xlane.xlu0 %319
      %v321 = vsel %vm299, %v290, 0.0
      %322 = vadd.xlane.f32.xlu0 %v321
      %v323 = vpop.xlane.xlu0 %322
      %v324 = vsel %vm299, %v291, 0.0
      %325 = vadd.xlane.f32.xlu0 %v324
      %v326 = vpop.xlane.xlu0 %325
      %v327 = vsel %vm299, %v292, 0.0
      %328 = vadd.xlane.f32.xlu0 %v327
      %v329 = vpop.xlane.xlu0 %328
      %v330 = vsel %vm299, %v293, 0.0
      %331 = vadd.xlane.f32.xlu0 %v330
      %v332 = vpop.xlane.xlu0 %331
      %v333 = vsel %vm299, %v294, 0.0
      %334 = vadd.xlane.f32.xlu0 %v333
      %v335 = vpop.xlane.xlu0 %334
      %v336 = vsel %vm299, %v295, 0.0
      %337 = vadd.xlane.f32.xlu0 %v336
      %v338 = vpop.xlane.xlu0 %337
      %v339 = vsel %vm299, %v296, 0.0
      %340 = vadd.xlane.f32.xlu0 %v339
      %v341 = vpop.xlane.xlu0 %340
      %v342 = vsel %vm299, %v297, 0.0
      %343 = vadd.xlane.f32.xlu0 %v342
      %v344 = vpop.xlane.xlu0 %343
      %v345 = vsel %vm299, %v298, 0.0
      %346 = vadd.xlane.f32.xlu0 %v345
      %v347 = vpop.xlane.xlu0 %346
      %v348 = vrcp.pop 2.0
      %v349 = vmul.f32 %v302, %v348
      %v350 = vmul.f32 %v305, %v348
      %v351 = vmul.f32 %v308, %v348
      %v352 = vmul.f32 %v311, %v348
      %v353 = vmul.f32 %v314, %v348
      %v354 = vmul.f32 %v317, %v348
      %v355 = vmul.f32 %v320, %v348
      %v356 = vmul.f32 %v323, %v348
      %v357 = vmul.f32 %v326, %v348
      %v358 = vmul.f32 %v329, %v348
      %v359 = vmul.f32 %v332, %v348
      %v360 = vmul.f32 %v335, %v348
      %v361 = vmul.f32 %v338, %v348
      %v362 = vmul.f32 %v341, %v348
      %v363 = vmul.f32 %v344, %v348
      %v364 = vmul.f32 %v347, %v348
      %v365 = vsub.f32 %v283, %v349
      %v366 = vsub.f32 %v284, %v350
      %v367 = vsub.f32 %v285, %v351
      %v368 = vsub.f32 %v286, %v352
      %v369 = vsub.f32 %v287, %v353
      %v370 = vsub.f32 %v288, %v354
      %v371 = vsub.f32 %v289, %v355
      %v372 = vsub.f32 %v290, %v356
      %v373 = vsub.f32 %v291, %v357
      %v374 = vsub.f32 %v292, %v358
      %v375 = vsub.f32 %v293, %v359
      %v376 = vsub.f32 %v294, %v360
      %v377 = vsub.f32 %v295, %v361
      %v378 = vsub.f32 %v296, %v362
      %v379 = vsub.f32 %v297, %v363
      %v380 = vsub.f32 %v298, %v364
      %v381 = vmul.f32 %v365, %v365
      %v382 = vmul.f32 %v366, %v366
      %v383 = vmul.f32 %v367, %v367
      %v384 = vmul.f32 %v368, %v368
      %v385 = vmul.f32 %v369, %v369
      %v386 = vmul.f32 %v370, %v370
      %v387 = vmul.f32 %v371, %v371
      %v388 = vmul.f32 %v372, %v372
      %v389 = vmul.f32 %v373, %v373
      %v390 = vmul.f32 %v374, %v374
      %v391 = vmul.f32 %v375, %v375
      %v392 = vmul.f32 %v376, %v376
      %v393 = vmul.f32 %v377, %v377
      %v394 = vmul.f32 %v378, %v378
      %v395 = vmul.f32 %v379, %v379
      %v396 = vmul.f32 %v380, %v380
      %v397 = vsel %vm299, %v381, 0.0
      %398 = vadd.xlane.f32.xlu0 %v397
      %v399 = vpop.xlane.xlu0 %398
      %v400 = vsel %vm299, %v382, 0.0
      %401 = vadd.xlane.f32.xlu0 %v400
      %v402 = vpop.xlane.xlu0 %401
      %v403 = vsel %vm299, %v383, 0.0
      %404 = vadd.xlane.f32.xlu0 %v403
      %v405 = vpop.xlane.xlu0 %404
      %v406 = vsel %vm299, %v384, 0.0
      %407 = vadd.xlane.f32.xlu0 %v406
      %v408 = vpop.xlane.xlu0 %407
      %v409 = vsel %vm299, %v385, 0.0
      %410 = vadd.xlane.f32.xlu0 %v409
      %v411 = vpop.xlane.xlu0 %410
      %v412 = vsel %vm299, %v386, 0.0
      %413 = vadd.xlane.f32.xlu0 %v412
      %v414 = vpop.xlane.xlu0 %413
      %v415 = vsel %vm299, %v387, 0.0
      %416 = vadd.xlane.f32.xlu0 %v415
      %v417 = vpop.xlane.xlu0 %416
      %v418 = vsel %vm299, %v388, 0.0
      %419 = vadd.xlane.f32.xlu0 %v418
      %v420 = vpop.xlane.xlu0 %419
      %v421 = vsel %vm299, %v389, 0.0
      %422 = vadd.xlane.f32.xlu0 %v421
      %v423 = vpop.xlane.xlu0 %422
      %v424 = vsel %vm299, %v390, 0.0
      %425 = vadd.xlane.f32.xlu0 %v424
      %v426 = vpop.xlane.xlu0 %425
      %v427 = vsel %vm299, %v391, 0.0
      %428 = vadd.xlane.f32.xlu0 %v427
      %v429 = vpop.xlane.xlu0 %428
      %v430 = vsel %vm299, %v392, 0.0
      %431 = vadd.xlane.f32.xlu0 %v430
      %v432 = vpop.xlane.xlu0 %431
      %v433 = vsel %vm299, %v393, 0.0
      %434 = vadd.xlane.f32.xlu0 %v433
      %v435 = vpop.xlane.xlu0 %434
      %v436 = vsel %vm299, %v394, 0.0
      %437 = vadd.xlane.f32.xlu0 %v436
      %v438 = vpop.xlane.xlu0 %437
      %v439 = vsel %vm299, %v395, 0.0
      %440 = vadd.xlane.f32.xlu0 %v439
      %v441 = vpop.xlane.xlu0 %440
      %v442 = vsel %vm299, %v396, 0.0
      %443 = vadd.xlane.f32.xlu0 %v442
      %v444 = vpop.xlane.xlu0 %443
      %v445 = vmul.f32 %v399, %v348
      %v446 = vmul.f32 %v402, %v348
      %v447 = vmul.f32 %v405, %v348
      %v448 = vmul.f32 %v408, %v348
      %v449 = vmul.f32 %v411, %v348
      %v450 = vmul.f32 %v414, %v348
      %v451 = vmul.f32 %v417, %v348
      %v452 = vmul.f32 %v420, %v348
      %v453 = vmul.f32 %v423, %v348
      %v454 = vmul.f32 %v426, %v348
      %v455 = vmul.f32 %v429, %v348
      %v456 = vmul.f32 %v432, %v348
      %v457 = vmul.f32 %v435, %v348
      %v458 = vmul.f32 %v438, %v348
      %v459 = vmul.f32 %v441, %v348
      %v460 = vmul.f32 %v444, %v348
      %v461 = vadd.f32 %v445, 1e-05
      %v462 = vadd.f32 %v446, 1e-05
      %v463 = vadd.f32 %v447, 1e-05
      %v464 = vadd.f32 %v448, 1e-05
      %v465 = vadd.f32 %v449, 1e-05
      %v466 = vadd.f32 %v450, 1e-05
      %v467 = vadd.f32 %v451, 1e-05
      %v468 = vadd.f32 %v452, 1e-05
      %v469 = vadd.f32 %v453, 1e-05
      %v470 = vadd.f32 %v454, 1e-05
      %v471 = vadd.f32 %v455, 1e-05
      %v472 = vadd.f32 %v456, 1e-05
      %v473 = vadd.f32 %v457, 1e-05
      %v474 = vadd.f32 %v458, 1e-05
      %v475 = vadd.f32 %v459, 1e-05
      %v476 = vadd.f32 %v460, 1e-05
      %v477 = vrsqrt.pop %v461
      %v478 = vrsqrt.pop %v462
      %v479 = vrsqrt.pop %v463
      %v480 = vrsqrt.pop %v464
      %v481 = vrsqrt.pop %v465
      %v482 = vrsqrt.pop %v466
      %v483 = vrsqrt.pop %v467
      %v484 = vrsqrt.pop %v468
      %v485 = vrsqrt.pop %v469
      %v486 = vrsqrt.pop %v470
      %v487 = vrsqrt.pop %v471
      %v488 = vrsqrt.pop %v472
      %v489 = vrsqrt.pop %v473
      %v490 = vrsqrt.pop %v474
      %v491 = vrsqrt.pop %v475
      %v492 = vrsqrt.pop %v476
      %v493 = vmul.f32 %v365, %v477
      %v494 = vmul.f32 %v366, %v478
      %v495 = vmul.f32 %v367, %v479
      %v496 = vmul.f32 %v368, %v480
      %v497 = vmul.f32 %v369, %v481
      %v498 = vmul.f32 %v370, %v482
      %v499 = vmul.f32 %v371, %v483
      %v500 = vmul.f32 %v372, %v484
      %v501 = vmul.f32 %v373, %v485
      %v502 = vmul.f32 %v374, %v486
      %v503 = vmul.f32 %v375, %v487
      %v504 = vmul.f32 %v376, %v488
      %v505 = vmul.f32 %v377, %v489
      %v506 = vmul.f32 %v378, %v490
      %v507 = vmul.f32 %v379, %v491
      %v508 = vmul.f32 %v380, %v492
      %v509 = vld [vmem:[%s1] sm:$0x1]
      %v511 = vlaneseq
      %v512 = vshrl.u32 %v511, 7
      %v513 = vsub.s32 0, %v512
      %v514 = vrot.slane %v509, %v513
      %v516 = vmul.f32 %v493, %v514
      %v517 = vmul.f32 %v494, %v514
      %v518 = vmul.f32 %v495, %v514
      %v519 = vmul.f32 %v496, %v514
      %v520 = vmul.f32 %v497, %v514
      %v521 = vmul.f32 %v498, %v514
      %v522 = vmul.f32 %v499, %v514
      %v523 = vmul.f32 %v500, %v514
      %v524 = vmul.f32 %v501, %v514
      %v525 = vmul.f32 %v502, %v514
      %v526 = vmul.f32 %v503, %v514
      %v527 = vmul.f32 %v504, %v514
      %v528 = vmul.f32 %v505, %v514
      %v529 = vmul.f32 %v506, %v514
      %v530 = vmul.f32 %v507, %v514
      %v531 = vmul.f32 %v508, %v514
      %v532 = vld [vmem:[%s2] sm:$0x1]
      %v534 = vlaneseq
      %v535 = vshrl.u32 %v534, 7
      %v536 = vsub.s32 0, %v535
      %v537 = vrot.slane %v532, %v536
      %v539 = vadd.f32 %v516, %v537
      %v540 = vadd.f32 %v517, %v537
      %v541 = vadd.f32 %v518, %v537
      %v542 = vadd.f32 %v519, %v537
      %v543 = vadd.f32 %v520, %v537
      %v544 = vadd.f32 %v521, %v537
      %v545 = vadd.f32 %v522, %v537
      %v546 = vadd.f32 %v523, %v537
      %v547 = vadd.f32 %v524, %v537
      %v548 = vadd.f32 %v525, %v537
      %v549 = vadd.f32 %v526, %v537
      %v550 = vadd.f32 %v527, %v537
      %v551 = vadd.f32 %v528, %v537
      %v552 = vadd.f32 %v529, %v537
      %v553 = vadd.f32 %v530, %v537
      %v554 = vadd.f32 %v531, %v537
      %v555 = vpack.c.bf16 %v540, %v539
      %v556 = vpack.c.bf16 %v542, %v541
      %v557 = vpack.c.bf16 %v544, %v543
      %v558 = vpack.c.bf16 %v546, %v545
      %v559 = vpack.c.bf16 %v548, %v547
      %v560 = vpack.c.bf16 %v550, %v549
      %v561 = vpack.c.bf16 %v552, %v551
      %v562 = vpack.c.bf16 %v554, %v553
      %v563 = vld [vmem:[%s3] sm:$0x1]
      %v564 = vld [vmem:[%s4] sm:$0x1]
      %v566 = vlaneseq
      %v567 = vshrl.u32 %v566, 7
      %v568 = vsub.s32 0, %v567
      %v569 = vrot.slane %v564, %v568
      %v572 = vsel %vm299, %v555, 0
      %v575 = vsel %vm299, %v556, 0
      %v578 = vsel %vm299, %v557, 0
      %v581 = vsel %vm299, %v558, 0
      %v584 = vsel %vm299, %v559, 0
      %v587 = vsel %vm299, %v560, 0
      %v590 = vsel %vm299, %v561, 0
      %v593 = vsel %vm299, %v562, 0
      %vm595 = vcmask 1040384
      %v597 = vsel %vm595, %v563, 0
      %599 = vmatprep.subr.bf16.mxu0 0
      %600 = vmatpush1.bf16.msra.mxu0 %v597
      %601 = vmatprep.subr.bf16.mxu0 0
      %602 = vmatpush1.bf16.msra.mxu0 0
      %603 = vmatprep.subr.bf16.mxu0 0
      %604 = vmatpush1.bf16.msra.mxu0 0
      %605 = vmatprep.subr.bf16.mxu0 0
      %606 = vmatpush1.bf16.msra.mxu0 0
      %607 = vmatprep.subr.bf16.mxu0 0
      %608 = vmatpush1.bf16.msra.mxu0 0
      %609 = vmatprep.subr.bf16.mxu0 0
      %610 = vmatpush1.bf16.msra.mxu0 0
      %611 = vmatprep.subr.bf16.mxu0 0
      %612 = vmatpush1.bf16.msra.mxu0 0
      %613 = vmatprep.subr.bf16.mxu0 0
      %614 = vmatpush1.bf16.msra.mxu0 0
      %615 = vmatprep.subr.bf16.mxu0 0
      %616 = vmatpush1.bf16.msra.mxu0 0
      %617 = vmatprep.subr.bf16.mxu0 0
      %618 = vmatpush1.bf16.msra.mxu0 0
      %619 = vmatprep.subr.bf16.mxu0 0
      %620 = vmatpush1.bf16.msra.mxu0 0
      %621 = vmatprep.subr.bf16.mxu0 0
      %622 = vmatpush1.bf16.msra.mxu0 0
      %623 = vmatprep.subr.bf16.mxu0 0
      %624 = vmatpush1.bf16.msra.mxu0 0
      %625 = vmatprep.subr.bf16.mxu0 0
      %626 = vmatpush1.bf16.msra.mxu0 0
      %627 = vmatprep.subr.bf16.mxu0 0
      %628 = vmatpush1.bf16.msra.mxu0 0
      %629 = vmatprep.subr.bf16.mxu0 0
      %630 = vmatpush1.bf16.msra.mxu0 0
      %631 = vmatprep.mubr.bf16.mxu0 0
      %632 = vmatmul.mubr.bf16.gmra.mrb[0].mxu0 %v572
      %v633 = vpop.f32.mrb[0].mxu0
      %v634 = vadd.f32 %v569, %v633
      %v635 = vpop.f32.mrb[0].mxu0
      %v636 = vpop.f32.mrb[0].mxu0
      %v637 = vadd.f32 %v569, %v636
      %v638 = vpop.f32.mrb[0].mxu0
      %639 = vmatprep.mubr.bf16.mxu0 0
      %640 = vmatmul.mubr.bf16.gmra.mrb[0].mxu0 %v575
      %v641 = vpop.f32.mrb[0].mxu0
      %v642 = vadd.f32 %v569, %v641
      %v643 = vpop.f32.mrb[0].mxu0
      %v644 = vpop.f32.mrb[0].mxu0
      %v645 = vadd.f32 %v569, %v644
      %v646 = vpop.f32.mrb[0].mxu0
      %647 = vmatprep.mubr.bf16.mxu0 0
      %648 = vmatmul.mubr.bf16.gmra.mrb[0].mxu0 %v578
      %v649 = vpop.f32.mrb[0].mxu0
      %v650 = vadd.f32 %v569, %v649
      %v651 = vpop.f32.mrb[0].mxu0
      %v652 = vpop.f32.mrb[0].mxu0
      %v653 = vadd.f32 %v569, %v652
      %v654 = vpop.f32.mrb[0].mxu0
      %655 = vmatprep.mubr.bf16.mxu0 0
      %656 = vmatmul.mubr.bf16.gmra.mrb[0].mxu0 %v581
      %v657 = vpop.f32.mrb[0].mxu0
      %v658 = vadd.f32 %v569, %v657
      %v659 = vpop.f32.mrb[0].mxu0
      %v660 = vpop.f32.mrb[0].mxu0
      %v661 = vadd.f32 %v569, %v660
      %v662 = vpop.f32.mrb[0].mxu0
      %663 = vmatprep.mubr.bf16.mxu0 0
      %664 = vmatmul.mubr.bf16.gmra.mrb[0].mxu0 %v584
      %v665 = vpop.f32.mrb[0].mxu0
      %v666 = vadd.f32 %v569, %v665
      %v667 = vpop.f32.mrb[0].mxu0
      %v668 = vpop.f32.mrb[0].mxu0
      %v669 = vadd.f32 %v569, %v668
      %v670 = vpop.f32.mrb[0].mxu0
      %671 = vmatprep.mubr.bf16.mxu0 0
      %672 = vmatmul.mubr.bf16.gmra.mrb[0].mxu0 %v587
      %v673 = vpop.f32.mrb[0].mxu0
      %v674 = vadd.f32 %v569, %v673
      %v675 = vpop.f32.mrb[0].mxu0
      %v676 = vpop.f32.mrb[0].mxu0
      %v677 = vadd.f32 %v569, %v676
      %v678 = vpop.f32.mrb[0].mxu0
      %679 = vmatprep.mubr.bf16.mxu0 0
      %680 = vmatmul.mubr.bf16.gmra.mrb[0].mxu0 %v590
      %v681 = vpop.f32.mrb[0].mxu0
      %v682 = vadd.f32 %v569, %v681
      %v683 = vpop.f32.mrb[0].mxu0
      %v684 = vpop.f32.mrb[0].mxu0
      %v685 = vadd.f32 %v569, %v684
      %v686 = vpop.f32.mrb[0].mxu0
      %687 = vmatprep.mubr.bf16.mxu0 0
      %688 = vmatmul.mubr.bf16.gmra.mrb[0].mxu0 %v593
      %v689 = vpop.f32.mrb[0].mxu0
      %v690 = vadd.f32 %v569, %v689
      %v691 = vpop.f32.mrb[0].mxu0
      %v692 = vpop.f32.mrb[0].mxu0
      %v693 = vadd.f32 %v569, %v692
      %v694 = vpop.f32.mrb[0].mxu0
      %695 = vdwg.mxu0
      %v696 = vmul.f32 %v634, 0.5
      %v697 = vmul.f32 %v637, 0.5
      %v698 = vmul.f32 %v642, 0.5
      %v699 = vmul.f32 %v645, 0.5
      %v700 = vmul.f32 %v650, 0.5
      %v701 = vmul.f32 %v653, 0.5
      %v702 = vmul.f32 %v658, 0.5
      %v703 = vmul.f32 %v661, 0.5
      %v704 = vmul.f32 %v666, 0.5
      %v705 = vmul.f32 %v669, 0.5
      %v706 = vmul.f32 %v674, 0.5
      %v707 = vmul.f32 %v677, 0.5
      %v708 = vmul.f32 %v682, 0.5
      %v709 = vmul.f32 %v685, 0.5
      %v710 = vmul.f32 %v690, 0.5
      %v711 = vmul.f32 %v693, 0.5
      %v712 = vmul.f32 %v634, 0.044715
      %v713 = vmul.f32 %v637, 0.044715
      %v714 = vmul.f32 %v642, 0.044715
      %v715 = vmul.f32 %v645, 0.044715
      %v716 = vmul.f32 %v650, 0.044715
      %v717 = vmul.f32 %v653, 0.044715
      %v718 = vmul.f32 %v658, 0.044715
      %v719 = vmul.f32 %v661, 0.044715
      %v720 = vmul.f32 %v666, 0.044715
      %v721 = vmul.f32 %v669, 0.044715
      %v722 = vmul.f32 %v674, 0.044715
      %v723 = vmul.f32 %v677, 0.044715
      %v724 = vmul.f32 %v682, 0.044715
      %v725 = vmul.f32 %v685, 0.044715
      %v726 = vmul.f32 %v690, 0.044715
      %v727 = vmul.f32 %v693, 0.044715
      %v728 = vmul.f32 %v712, %v634
      %v729 = vmul.f32 %v713, %v637
      %v730 = vmul.f32 %v714, %v642
      %v731 = vmul.f32 %v715, %v645
      %v732 = vmul.f32 %v716, %v650
      %v733 = vmul.f32 %v717, %v653
      %v734 = vmul.f32 %v718, %v658
      %v735 = vmul.f32 %v719, %v661
      %v736 = vmul.f32 %v720, %v666
      %v737 = vmul.f32 %v721, %v669
      %v738 = vmul.f32 %v722, %v674
      %v739 = vmul.f32 %v723, %v677
      %v740 = vmul.f32 %v724, %v682
      %v741 = vmul.f32 %v725, %v685
      %v742 = vmul.f32 %v726, %v690
      %v743 = vmul.f32 %v727, %v693
      %v744 = vmul.f32 %v728, %v634
      %v745 = vmul.f32 %v729, %v637
      %v746 = vmul.f32 %v730, %v642
      %v747 = vmul.f32 %v731, %v645
      %v748 = vmul.f32 %v732, %v650
      %v749 = vmul.f32 %v733, %v653
      %v750 = vmul.f32 %v734, %v658
      %v751 = vmul.f32 %v735, %v661
      %v752 = vmul.f32 %v736, %v666
      %v753 = vmul.f32 %v737, %v669
      %v754 = vmul.f32 %v738, %v674
      %v755 = vmul.f32 %v739, %v677
      %v756 = vmul.f32 %v740, %v682
      %v757 = vmul.f32 %v741, %v685
      %v758 = vmul.f32 %v742, %v690
      %v759 = vmul.f32 %v743, %v693
      %v760 = vadd.f32 %v634, %v744
      %v761 = vadd.f32 %v637, %v745
      %v762 = vadd.f32 %v642, %v746
      %v763 = vadd.f32 %v645, %v747
      %v764 = vadd.f32 %v650, %v748
      %v765 = vadd.f32 %v653, %v749
      %v766 = vadd.f32 %v658, %v750
      %v767 = vadd.f32 %v661, %v751
      %v768 = vadd.f32 %v666, %v752
      %v769 = vadd.f32 %v669, %v753
      %v770 = vadd.f32 %v674, %v754
      %v771 = vadd.f32 %v677, %v755
      %v772 = vadd.f32 %v682, %v756
      %v773 = vadd.f32 %v685, %v757
      %v774 = vadd.f32 %v690, %v758
      %v775 = vadd.f32 %v693, %v759
      %v776 = vmul.f32 %v760, 0.7978846
      %v777 = vmul.f32 %v761, 0.7978846
      %v778 = vmul.f32 %v762, 0.7978846
      %v779 = vmul.f32 %v763, 0.7978846
      %v780 = vmul.f32 %v764, 0.7978846
      %v781 = vmul.f32 %v765, 0.7978846
      %v782 = vmul.f32 %v766, 0.7978846
      %v783 = vmul.f32 %v767, 0.7978846
      %v784 = vmul.f32 %v768, 0.7978846
      %v785 = vmul.f32 %v769, 0.7978846
      %v786 = vmul.f32 %v770, 0.7978846
      %v787 = vmul.f32 %v771, 0.7978846
      %v788 = vmul.f32 %v772, 0.7978846
      %v789 = vmul.f32 %v773, 0.7978846
      %v790 = vmul.f32 %v774, 0.7978846
      %v791 = vmul.f32 %v775, 0.7978846
      %v792 = vtanh.pop %v776
      %v793 = vtanh.pop %v777
      %v794 = vtanh.pop %v778
      %v795 = vtanh.pop %v779
      %v796 = vtanh.pop %v780
      %v797 = vtanh.pop %v781
      %v798 = vtanh.pop %v782
      %v799 = vtanh.pop %v783
      %v800 = vtanh.pop %v784
      %v801 = vtanh.pop %v785
      %v802 = vtanh.pop %v786
      %v803 = vtanh.pop %v787
      %v804 = vtanh.pop %v788
      %v805 = vtanh.pop %v789
      %v806 = vtanh.pop %v790
      %v807 = vtanh.pop %v791
      %v808 = vadd.f32 %v792, 1.0
      %v809 = vadd.f32 %v793, 1.0
      %v810 = vadd.f32 %v794, 1.0
      %v811 = vadd.f32 %v795, 1.0
      %v812 = vadd.f32 %v796, 1.0
      %v813 = vadd.f32 %v797, 1.0
      %v814 = vadd.f32 %v798, 1.0
      %v815 = vadd.f32 %v799, 1.0
      %v816 = vadd.f32 %v800, 1.0
      %v817 = vadd.f32 %v801, 1.0
      %v818 = vadd.f32 %v802, 1.0
      %v819 = vadd.f32 %v803, 1.0
      %v820 = vadd.f32 %v804, 1.0
      %v821 = vadd.f32 %v805, 1.0
      %v822 = vadd.f32 %v806, 1.0
      %v823 = vadd.f32 %v807, 1.0
      %v824 = vmul.f32 %v696, %v808
      %v825 = vmul.f32 %v697, %v809
      %v826 = vmul.f32 %v698, %v810
      %v827 = vmul.f32 %v699, %v811
      %v828 = vmul.f32 %v700, %v812
      %v829 = vmul.f32 %v701, %v813
      %v830 = vmul.f32 %v702, %v814
      %v831 = vmul.f32 %v703, %v815
      %v832 = vmul.f32 %v704, %v816
      %v833 = vmul.f32 %v705, %v817
      %v834 = vmul.f32 %v706, %v818
      %v835 = vmul.f32 %v707, %v819
      %v836 = vmul.f32 %v708, %v820
      %v837 = vmul.f32 %v709, %v821
      %v838 = vmul.f32 %v710, %v822
      %v839 = vmul.f32 %v711, %v823
      %v840 = vpack.c.bf16 %v825, %v824
      %v841 = vpack.c.bf16 %v827, %v826
      %v842 = vpack.c.bf16 %v829, %v828
      %v843 = vpack.c.bf16 %v831, %v830
      %v844 = vpack.c.bf16 %v833, %v832
      %v845 = vpack.c.bf16 %v835, %v834
      %v846 = vpack.c.bf16 %v837, %v836
      %v847 = vpack.c.bf16 %v839, %v838
      %v848 = vld [vmem:[%s5] sm:$0x3]
      %v849 = vld [vmem:[%s6] sm:$0x1]
      %v851 = vlaneseq
      %v852 = vshrl.u32 %v851, 7
      %v853 = vsub.s32 0, %v852
      %v854 = vrot.slane %v849, %v853
      %vm856 = vcmask 31744
      %v858 = vsel %vm856, %v840, 0
      %v861 = vsel %vm856, %v841, 0
      %v864 = vsel %vm856, %v842, 0
      %v867 = vsel %vm856, %v843, 0
      %v870 = vsel %vm856, %v844, 0
      %v873 = vsel %vm856, %v845, 0
      %v876 = vsel %vm856, %v846, 0
      %v879 = vsel %vm856, %v847, 0
      %vm881 = vcmask 1041408
      %v883 = vsel %vm881, %v848, 0
      %885 = vmatprep.subr.bf16.mxu0 0
      %886 = vmatpush1.bf16.msra.mxu0 %v883
      %887 = vmatprep.subr.bf16.mxu0 0
      %888 = vmatpush1.bf16.msra.mxu0 0
      %889 = vmatprep.subr.bf16.mxu0 0
      %890 = vmatpush1.bf16.msra.mxu0 0
      %891 = vmatprep.subr.bf16.mxu0 0
      %892 = vmatpush1.bf16.msra.mxu0 0
      %893 = vmatprep.subr.bf16.mxu0 0
      %894 = vmatpush1.bf16.msra.mxu0 0
      %895 = vmatprep.subr.bf16.mxu0 0
      %896 = vmatpush1.bf16.msra.mxu0 0
      %897 = vmatprep.subr.bf16.mxu0 0
      %898 = vmatpush1.bf16.msra.mxu0 0
      %899 = vmatprep.subr.bf16.mxu0 0
      %900 = vmatpush1.bf16.msra.mxu0 0
      %901 = vmatprep.subr.bf16.mxu0 0
      %902 = vmatpush1.bf16.msra.mxu0 0
      %903 = vmatprep.subr.bf16.mxu0 0
      %904 = vmatpush1.bf16.msra.mxu0 0
      %905 = vmatprep.subr.bf16.mxu0 0
      %906 = vmatpush1.bf16.msra.mxu0 0
      %907 = vmatprep.subr.bf16.mxu0 0
      %908 = vmatpush1.bf16.msra.mxu0 0
      %909 = vmatprep.subr.bf16.mxu0 0
      %910 = vmatpush1.bf16.msra.mxu0 0
      %911 = vmatprep.subr.bf16.mxu0 0
      %912 = vmatpush1.bf16.msra.mxu0 0
      %913 = vmatprep.subr.bf16.mxu0 0
      %914 = vmatpush1.bf16.msra.mxu0 0
      %915 = vmatprep.subr.bf16.mxu0 0
      %916 = vmatpush1.bf16.msra.mxu0 0
      %917 = vmatprep.mubr.bf16.mxu0 0
      %918 = vmatmul.mubr.bf16.gmra.mrb[0].mxu0 %v858
      %v919 = vpop.f32.mrb[0].mxu0
      %v920 = vadd.f32 %v854, %v919
      %v921 = vpop.f32.mrb[0].mxu0
      %v922 = vpop.f32.mrb[0].mxu0
      %v923 = vadd.f32 %v854, %v922
      %v924 = vpop.f32.mrb[0].mxu0
      %925 = vmatprep.mubr.bf16.mxu0 0
      %926 = vmatmul.mubr.bf16.gmra.mrb[0].mxu0 %v861
      %v927 = vpop.f32.mrb[0].mxu0
      %v928 = vadd.f32 %v854, %v927
      %v929 = vpop.f32.mrb[0].mxu0
      %v930 = vpop.f32.mrb[0].mxu0
      %v931 = vadd.f32 %v854, %v930
      %v932 = vpop.f32.mrb[0].mxu0
      %933 = vmatprep.mubr.bf16.mxu0 0
      %934 = vmatmul.mubr.bf16.gmra.mrb[0].mxu0 %v864
      %v935 = vpop.f32.mrb[0].mxu0
      %v936 = vadd.f32 %v854, %v935
      %v937 = vpop.f32.mrb[0].mxu0
      %v938 = vpop.f32.mrb[0].mxu0
      %v939 = vadd.f32 %v854, %v938
      %v940 = vpop.f32.mrb[0].mxu0
      %941 = vmatprep.mubr.bf16.mxu0 0
      %942 = vmatmul.mubr.bf16.gmra.mrb[0].mxu0 %v867
      %v943 = vpop.f32.mrb[0].mxu0
      %v944 = vadd.f32 %v854, %v943
      %v945 = vpop.f32.mrb[0].mxu0
      %v946 = vpop.f32.mrb[0].mxu0
      %v947 = vadd.f32 %v854, %v946
      %v948 = vpop.f32.mrb[0].mxu0
      %949 = vmatprep.mubr.bf16.mxu0 0
      %950 = vmatmul.mubr.bf16.gmra.mrb[0].mxu0 %v870
      %v951 = vpop.f32.mrb[0].mxu0
      %v952 = vadd.f32 %v854, %v951
      %v953 = vpop.f32.mrb[0].mxu0
      %v954 = vpop.f32.mrb[0].mxu0
      %v955 = vadd.f32 %v854, %v954
      %v956 = vpop.f32.mrb[0].mxu0
      %957 = vmatprep.mubr.bf16.mxu0 0
      %958 = vmatmul.mubr.bf16.gmra.mrb[0].mxu0 %v873
      %v959 = vpop.f32.mrb[0].mxu0
      %v960 = vadd.f32 %v854, %v959
      %v961 = vpop.f32.mrb[0].mxu0
      %v962 = vpop.f32.mrb[0].mxu0
      %v963 = vadd.f32 %v854, %v962
      %v964 = vpop.f32.mrb[0].mxu0
      %965 = vmatprep.mubr.bf16.mxu0 0
      %966 = vmatmul.mubr.bf16.gmra.mrb[0].mxu0 %v876
      %v967 = vpop.f32.mrb[0].mxu0
      %v968 = vadd.f32 %v854, %v967
      %v969 = vpop.f32.mrb[0].mxu0
      %v970 = vpop.f32.mrb[0].mxu0
      %v971 = vadd.f32 %v854, %v970
      %v972 = vpop.f32.mrb[0].mxu0
      %973 = vmatprep.mubr.bf16.mxu0 0
      %974 = vmatmul.mubr.bf16.gmra.mrb[0].mxu0 %v879
      %v975 = vpop.f32.mrb[0].mxu0
      %v976 = vadd.f32 %v854, %v975
      %v977 = vpop.f32.mrb[0].mxu0
      %v978 = vpop.f32.mrb[0].mxu0
      %v979 = vadd.f32 %v854, %v978
      %v980 = vpop.f32.mrb[0].mxu0
      %981 = vdwg.mxu0
      %v982 = vadd.f32 %v920, %v283
      %v983 = vadd.f32 %v923, %v284
      %v984 = vadd.f32 %v928, %v285
      %v985 = vadd.f32 %v931, %v286
      %v986 = vadd.f32 %v936, %v287
      %v987 = vadd.f32 %v939, %v288
      %v988 = vadd.f32 %v944, %v289
      %v989 = vadd.f32 %v947, %v290
      %v990 = vadd.f32 %v952, %v291
      %v991 = vadd.f32 %v955, %v292
      %v992 = vadd.f32 %v960, %v293
      %v993 = vadd.f32 %v963, %v294
      %v994 = vadd.f32 %v968, %v295
      %v995 = vadd.f32 %v971, %v296
      %v996 = vadd.f32 %v976, %v297
      %v997 = vadd.f32 %v979, %v298
      %998 = vst.msk [vmem:[%s280] sm:$0xff] %vm299, %v982
      %999 = vst.msk [vmem:[%s280 + $0x8] sm:$0xff] %vm299, %v983
      %1000 = vst.msk [vmem:[%s280 + $0x10] sm:$0xff] %vm299, %v984
      %1001 = vst.msk [vmem:[%s280 + $0x18] sm:$0xff] %vm299, %v985
      %1002 = vst.msk [vmem:[%s280 + $0x20] sm:$0xff] %vm299, %v986
      %1003 = vst.msk [vmem:[%s280 + $0x28] sm:$0xff] %vm299, %v987
      %1004 = vst.msk [vmem:[%s280 + $0x30] sm:$0xff] %vm299, %v988
      %1005 = vst.msk [vmem:[%s280 + $0x38] sm:$0xff] %vm299, %v989
      %1006 = vst.msk [vmem:[%s280 + $0x40] sm:$0xff] %vm299, %v990
      %1007 = vst.msk [vmem:[%s280 + $0x48] sm:$0xff] %vm299, %v991
      %1008 = vst.msk [vmem:[%s280 + $0x50] sm:$0xff] %vm299, %v992
      %1009 = vst.msk [vmem:[%s280 + $0x58] sm:$0xff] %vm299, %v993
      %1010 = vst.msk [vmem:[%s280 + $0x60] sm:$0xff] %vm299, %v994
      %1011 = vst.msk [vmem:[%s280 + $0x68] sm:$0xff] %vm299, %v995
      %1012 = vst.msk [vmem:[%s280 + $0x70] sm:$0xff] %vm299, %v996
      %1013 = vst.msk [vmem:[%s280 + $0x78] sm:$0xff] %vm299, %v997
      %s1014 = smul.u32 16, %s18
      %p1015 = scmp.lt.s32.totalorder %s1014, 31
      %s1016 = scalar_select %p1015, %s1014, 31
      %s1017 = smul.addr %s1016, 8
      %s1018 = scalar_lea.vmem %s7, %s1017
      // Predicated region
      $region49: #{a_call__.16} parent=47 // pred_check
        %p1019 = pneg %p188
      $region50: #{a_call__.16} parent=47 // pred_check_branch
        %1021 = sbr.rel (%p1019) target = $region52
      $region51: #{a_call__.16} parent=47 // pred_region
        %s1022 = smul.u32 16, %s18
      $region52: #{a_call__.16} parent=47 // pred_fallthru
        _
    $region48: #{a_call__.16} parent=5 // pred_fallthru
      _
    %p1023 = scmp.le.s32.totalorder 2, %s13
    // Predicated region
    $region53: #{a_call__.16} parent=5 // pred_check
      %p1024 = pneg %p1023
    $region54: #{a_call__.16} parent=5 // pred_check_branch
      %1026 = sbr.rel (%p1024) target = $region56
    $region55: #{a_call__.16} parent=5 // pred_region
      %s1027 = ssub.s32 %s13, 2
      // Predicated region
      $region57: #{a_call__.16} parent=55 // pred_check
        %p1028 = pneg %p194
      $region58: #{a_call__.16} parent=55 // pred_check_branch
        %1030 = sbr.rel (%p1028) target = $region60
      $region59: #{a_call__.16} parent=55 // pred_region
        %s1031 = smul.u32 16, %s19
        %p1032 = scmp.lt.s32.totalorder %s1031, 31
        %s1033 = scalar_select %p1032, %s1031, 31
        %s1034 = smul.addr %s1033, 8
        %s1035 = scalar_lea.vmem %s7, %s1034
      $region60: #{a_call__.16} parent=55 // pred_fallthru
        _
    $region56: #{a_call__.16} parent=5 // pred_fallthru
      _
  $region6: #{a_call__.16} parent=0 // loop_footer
    %s17 = sadd.s32 1, %s13
  $region7: #{a_call__.16} parent=0 // loop_footer_branch
    %12 = sbr.rel target = $region3
  $region8: #{a_call__.16} parent=0 // loop_exit
    _

// kernel: a_call__.9
$region0: #{a_call__.9}
  #allocation0 [shape = 'u32[]', space=smem, size = 0x4, offset = 0x4, fixed_abs, tag = 'smem constant byte address 0x4 - core index']
  #allocation1 [shape = 'u32[144,128]{1,0:T(1,128)}', space=vmem, size = 0x12000, scoped, tag = 'internal scratch']
  %s0 = inlined_call_operand.vmem [shape: f32[64,4], index: 0, kind: input, shape index: {}]
  %s1 = inlined_call_operand.vmem [shape: bf16[4,8], index: 1, kind: input, shape index: {}]
  %s2 = inlined_call_operand.vmem [shape: f32[1,8], index: 2, kind: input, shape index: {}]
  %s3 = inlined_call_operand.vmem [shape: f32[1,8], index: 3, kind: input, shape index: {}]
  %s4 = inlined_call_operand.vmem [shape: f32[1,8], index: 4, kind: input, shape index: {}]
  %s5 = inlined_call_operand.vmem [shape: bf16[8,16], index: 5, kind: input, shape index: {}]
  %s6 = inlined_call_operand.vmem [shape: f32[1,16], index: 6, kind: input, shape index: {}]
  %s7 = inlined_call_operand.vmem [shape: bf16[16,8], index: 7, kind: input, shape index: {}]
  %s8 = inlined_call_operand.vmem [shape: f32[1,8], index: 8, kind: input, shape index: {}]
  %s9 = inlined_call_operand.vmem [shape: f32[64,8], index: 9, kind: output, shape index: {}]
  %s10 = sld [smem:[#allocation0]]
  $region69: #{a_call__.9} parent=0
    _
  %s12 = ssub.s32 1, %s10
  %s13 = scalar_select 0, %s12, %s10
  loop: start=0, step=1, limit=4
  $region2: #{a_call__.9} parent=0 // loop_pre_header
    _
  $region3: #{a_call__.9} parent=0 // loop_header
    %s15 = sphi 0, %s19
    %p16 = scmp.ge.s32.totalorder %s15, 4
    %s25 = sphi 0, %s27
    %s28 = sphi 0, %s25
    %s29 = sphi 0, %s28
    %s45 = sphi 0, %s29
    %s49 = sphi 0, %s49
    %s51 = sphi 0, %s49
    %s52 = sphi 0, %s51
    %s66 = sphi 0, %s52
    %s70 = sphi 0, %s70
    %s72 = sphi 0, %s70
    %s73 = sphi 0, %s72
    %s87 = sphi 0, %s73
    %s91 = sphi 0, %s91
    %s93 = sphi 0, %s91
    %s94 = sphi 0, %s93
    %s108 = sphi 0, %s94
    %s112 = sphi 0, %s112
    %s114 = sphi 0, %s112
    %s115 = sphi 0, %s114
    %s129 = sphi 0, %s115
    %s133 = sphi 0, %s133
    %s135 = sphi 0, %s133
    %s136 = sphi 0, %s135
    %s150 = sphi 0, %s136
    %s154 = sphi 0, %s154
    %s156 = sphi 0, %s154
    %s157 = sphi 0, %s156
    %s171 = sphi 0, %s157
    %s175 = sphi 0, %s175
    %s177 = sphi 0, %s175
    %s178 = sphi 0, %s177
    %s192 = sphi 0, %s178
    %s196 = sphi 0, %s196
    %s198 = sphi 0, %s196
    %s199 = sphi 0, %s198
    %s213 = sphi 0, %s199
    %s219 = sphi 0, %s221
    %s222 = sphi 0, %s219
    %s223 = sphi 0, %s222
    %s239 = sphi 0, %s223
  $region4: #{a_call__.9} parent=0 // loop_header_branch
    %18 = sbr.rel (%p16) target = $region8
  $region5: #{a_call__.9} parent=0 // loop_body
    %s20 = ssub.s32 %s15, 1
    %s21 = ssub.s32 %s15, 2
    %s22 = sadd.s32 %s15, 1
    %s23 = ssub.s32 %s15, %s22
    %p24 = scmp.eq.s32.totalorder %s23, 0
    %s26 = sadd.s32 %s25, 1
    %s27 = scalar_select %p24, %s25, %s26
    %p30 = pneg %p24
    %p31 = scmp.eq.s32.totalorder %s15, 1
    %p32 = por %p30, %p31
    %p33 = scmp.ne.s32.totalorder %s25, %s28
    %p34 = scmp.eq.s32.totalorder %s15, 0
    %p35 = por %p33, %p34
    %p36 = scmp.ne.s32.totalorder %s25, %s28
    %p37 = scmp.eq.s32.totalorder %s20, 1
    %p38 = por %p36, %p37
    %p39 = scmp.ne.s32.totalorder %s28, %s29
    %p40 = scmp.eq.s32.totalorder %s20, 0
    %p41 = por %p39, %p40
    %p42 = scmp.ne.s32.totalorder %s28, %s29
    %p43 = scmp.eq.s32.totalorder %s21, 1
    %p44 = por %p42, %p43
    %p46 = scmp.ne.s32.totalorder %s29, %s45
    %p47 = scmp.eq.s32.totalorder %s21, 0
    %p48 = por %p46, %p47
    %s50 = sadd.s32 %s49, 1
    %p53 = scmp.eq.s32.totalorder %s15, 1
    %p54 = scmp.ne.s32.totalorder %s49, %s51
    %p55 = scmp.eq.s32.totalorder %s15, 0
    %p56 = por %p54, %p55
    %p57 = scmp.ne.s32.totalorder %s49, %s51
    %p58 = scmp.eq.s32.totalorder %s20, 1
    %p59 = por %p57, %p58
    %p60 = scmp.ne.s32.totalorder %s51, %s52
    %p61 = scmp.eq.s32.totalorder %s20, 0
    %p62 = por %p60, %p61
    %p63 = scmp.ne.s32.totalorder %s51, %s52
    %p64 = scmp.eq.s32.totalorder %s21, 1
    %p65 = por %p63, %p64
    %p67 = scmp.ne.s32.totalorder %s52, %s66
    %p68 = scmp.eq.s32.totalorder %s21, 0
    %p69 = por %p67, %p68
    %s71 = sadd.s32 %s70, 1
    %p74 = scmp.eq.s32.totalorder %s15, 1
    %p75 = scmp.ne.s32.totalorder %s70, %s72
    %p76 = scmp.eq.s32.totalorder %s15, 0
    %p77 = por %p75, %p76
    %p78 = scmp.ne.s32.totalorder %s70, %s72
    %p79 = scmp.eq.s32.totalorder %s20, 1
    %p80 = por %p78, %p79
    %p81 = scmp.ne.s32.totalorder %s72, %s73
    %p82 = scmp.eq.s32.totalorder %s20, 0
    %p83 = por %p81, %p82
    %p84 = scmp.ne.s32.totalorder %s72, %s73
    %p85 = scmp.eq.s32.totalorder %s21, 1
    %p86 = por %p84, %p85
    %p88 = scmp.ne.s32.totalorder %s73, %s87
    %p89 = scmp.eq.s32.totalorder %s21, 0
    %p90 = por %p88, %p89
    %s92 = sadd.s32 %s91, 1
    %p95 = scmp.eq.s32.totalorder %s15, 1
    %p96 = scmp.ne.s32.totalorder %s91, %s93
    %p97 = scmp.eq.s32.totalorder %s15, 0
    %p98 = por %p96, %p97
    %p99 = scmp.ne.s32.totalorder %s91, %s93
    %p100 = scmp.eq.s32.totalorder %s20, 1
    %p101 = por %p99, %p100
    %p102 = scmp.ne.s32.totalorder %s93, %s94
    %p103 = scmp.eq.s32.totalorder %s20, 0
    %p104 = por %p102, %p103
    %p105 = scmp.ne.s32.totalorder %s93, %s94
    %p106 = scmp.eq.s32.totalorder %s21, 1
    %p107 = por %p105, %p106
    %p109 = scmp.ne.s32.totalorder %s94, %s108
    %p110 = scmp.eq.s32.totalorder %s21, 0
    %p111 = por %p109, %p110
    %s113 = sadd.s32 %s112, 1
    %p116 = scmp.eq.s32.totalorder %s15, 1
    %p117 = scmp.ne.s32.totalorder %s112, %s114
    %p118 = scmp.eq.s32.totalorder %s15, 0
    %p119 = por %p117, %p118
    %p120 = scmp.ne.s32.totalorder %s112, %s114
    %p121 = scmp.eq.s32.totalorder %s20, 1
    %p122 = por %p120, %p121
    %p123 = scmp.ne.s32.totalorder %s114, %s115
    %p124 = scmp.eq.s32.totalorder %s20, 0
    %p125 = por %p123, %p124
    %p126 = scmp.ne.s32.totalorder %s114, %s115
    %p127 = scmp.eq.s32.totalorder %s21, 1
    %p128 = por %p126, %p127
    %p130 = scmp.ne.s32.totalorder %s115, %s129
    %p131 = scmp.eq.s32.totalorder %s21, 0
    %p132 = por %p130, %p131
    %s134 = sadd.s32 %s133, 1
    %p137 = scmp.eq.s32.totalorder %s15, 1
    %p138 = scmp.ne.s32.totalorder %s133, %s135
    %p139 = scmp.eq.s32.totalorder %s15, 0
    %p140 = por %p138, %p139
    %p141 = scmp.ne.s32.totalorder %s133, %s135
    %p142 = scmp.eq.s32.totalorder %s20, 1
    %p143 = por %p141, %p142
    %p144 = scmp.ne.s32.totalorder %s135, %s136
    %p145 = scmp.eq.s32.totalorder %s20, 0
    %p146 = por %p144, %p145
    %p147 = scmp.ne.s32.totalorder %s135, %s136
    %p148 = scmp.eq.s32.totalorder %s21, 1
    %p149 = por %p147, %p148
    %p151 = scmp.ne.s32.totalorder %s136, %s150
    %p152 = scmp.eq.s32.totalorder %s21, 0
    %p153 = por %p151, %p152
    %s155 = sadd.s32 %s154, 1
    %p158 = scmp.eq.s32.totalorder %s15, 1
    %p159 = scmp.ne.s32.totalorder %s154, %s156
    %p160 = scmp.eq.s32.totalorder %s15, 0
    %p161 = por %p159, %p160
    %p162 = scmp.ne.s32.totalorder %s154, %s156
    %p163 = scmp.eq.s32.totalorder %s20, 1
    %p164 = por %p162, %p163
    %p165 = scmp.ne.s32.totalorder %s156, %s157
    %p166 = scmp.eq.s32.totalorder %s20, 0
    %p167 = por %p165, %p166
    %p168 = scmp.ne.s32.totalorder %s156, %s157
    %p169 = scmp.eq.s32.totalorder %s21, 1
    %p170 = por %p168, %p169
    %p172 = scmp.ne.s32.totalorder %s157, %s171
    %p173 = scmp.eq.s32.totalorder %s21, 0
    %p174 = por %p172, %p173
    %s176 = sadd.s32 %s175, 1
    %p179 = scmp.eq.s32.totalorder %s15, 1
    %p180 = scmp.ne.s32.totalorder %s175, %s177
    %p181 = scmp.eq.s32.totalorder %s15, 0
    %p182 = por %p180, %p181
    %p183 = scmp.ne.s32.totalorder %s175, %s177
    %p184 = scmp.eq.s32.totalorder %s20, 1
    %p185 = por %p183, %p184
    %p186 = scmp.ne.s32.totalorder %s177, %s178
    %p187 = scmp.eq.s32.totalorder %s20, 0
    %p188 = por %p186, %p187
    %p189 = scmp.ne.s32.totalorder %s177, %s178
    %p190 = scmp.eq.s32.totalorder %s21, 1
    %p191 = por %p189, %p190
    %p193 = scmp.ne.s32.totalorder %s178, %s192
    %p194 = scmp.eq.s32.totalorder %s21, 0
    %p195 = por %p193, %p194
    %s197 = sadd.s32 %s196, 1
    %p200 = scmp.eq.s32.totalorder %s15, 1
    %p201 = scmp.ne.s32.totalorder %s196, %s198
    %p202 = scmp.eq.s32.totalorder %s15, 0
    %p203 = por %p201, %p202
    %p204 = scmp.ne.s32.totalorder %s196, %s198
    %p205 = scmp.eq.s32.totalorder %s20, 1
    %p206 = por %p204, %p205
    %p207 = scmp.ne.s32.totalorder %s198, %s199
    %p208 = scmp.eq.s32.totalorder %s20, 0
    %p209 = por %p207, %p208
    %p210 = scmp.ne.s32.totalorder %s198, %s199
    %p211 = scmp.eq.s32.totalorder %s21, 1
    %p212 = por %p210, %p211
    %p214 = scmp.ne.s32.totalorder %s199, %s213
    %p215 = scmp.eq.s32.totalorder %s21, 0
    %p216 = por %p214, %p215
    %s217 = ssub.s32 %s15, %s22
    %p218 = scmp.eq.s32.totalorder %s217, 0
    %s220 = sadd.s32 %s219, 1
    %s221 = scalar_select %p218, %s219, %s220
    %p224 = pneg %p218
    %p225 = scmp.eq.s32.totalorder %s15, 1
    %p226 = por %p224, %p225
    %p227 = scmp.ne.s32.totalorder %s219, %s222
    %p228 = scmp.eq.s32.totalorder %s15, 0
    %p229 = por %p227, %p228
    %p230 = scmp.ne.s32.totalorder %s219, %s222
    %p231 = scmp.eq.s32.totalorder %s20, 1
    %p232 = por %p230, %p231
    %p233 = scmp.ne.s32.totalorder %s222, %s223
    %p234 = scmp.eq.s32.totalorder %s20, 0
    %p235 = por %p233, %p234
    %p236 = scmp.ne.s32.totalorder %s222, %s223
    %p237 = scmp.eq.s32.totalorder %s21, 1
    %p238 = por %p236, %p237
    %p240 = scmp.ne.s32.totalorder %s223, %s239
    %p241 = scmp.eq.s32.totalorder %s21, 0
    %p242 = por %p240, %p241
    %p243 = scmp.le.s32.totalorder 1, %s15
    %p244 = scmp.lt.s32.totalorder %s15, 3
    %p245 = pnand %p243, %p244
    %p246 = pneg %p245
    // Predicated region
    $region9: #{a_call__.9} parent=5 // pred_check
      _
    $region10: #{a_call__.9} parent=5 // pred_check_branch
      %248 = sbr.rel (%p245) target = $region12
    $region11: #{a_call__.9} parent=5 // pred_region
      %s249 = ssub.s32 %s15, 1
      // Predicated region
      $region13: #{a_call__.9} parent=11 // pred_check
        %p250 = pneg %p62
      $region14: #{a_call__.9} parent=11 // pred_check_branch
        %252 = sbr.rel (%p250) target = $region16
      $region15: #{a_call__.9} parent=11 // pred_region
        _
      $region16: #{a_call__.9} parent=11 // pred_fallthru
        _
      // Predicated region
      $region17: #{a_call__.9} parent=11 // pred_check
        %p253 = pneg %p83
      $region18: #{a_call__.9} parent=11 // pred_check_branch
        %255 = sbr.rel (%p253) target = $region20
      $region19: #{a_call__.9} parent=11 // pred_region
        _
      $region20: #{a_call__.9} parent=11 // pred_fallthru
        _
      // Predicated region
      $region21: #{a_call__.9} parent=11 // pred_check
        %p256 = pneg %p104
      $region22: #{a_call__.9} parent=11 // pred_check_branch
        %258 = sbr.rel (%p256) target = $region24
      $region23: #{a_call__.9} parent=11 // pred_region
        _
      $region24: #{a_call__.9} parent=11 // pred_fallthru
        _
      // Predicated region
      $region25: #{a_call__.9} parent=11 // pred_check
        %p259 = pneg %p125
      $region26: #{a_call__.9} parent=11 // pred_check_branch
        %261 = sbr.rel (%p259) target = $region28
      $region27: #{a_call__.9} parent=11 // pred_region
        _
      $region28: #{a_call__.9} parent=11 // pred_fallthru
        _
      // Predicated region
      $region29: #{a_call__.9} parent=11 // pred_check
        %p262 = pneg %p146
      $region30: #{a_call__.9} parent=11 // pred_check_branch
        %264 = sbr.rel (%p262) target = $region32
      $region31: #{a_call__.9} parent=11 // pred_region
        _
      $region32: #{a_call__.9} parent=11 // pred_fallthru
        _
      // Predicated region
      $region33: #{a_call__.9} parent=11 // pred_check
        %p265 = pneg %p167
      $region34: #{a_call__.9} parent=11 // pred_check_branch
        %267 = sbr.rel (%p265) target = $region36
      $region35: #{a_call__.9} parent=11 // pred_region
        _
      $region36: #{a_call__.9} parent=11 // pred_fallthru
        _
      // Predicated region
      $region37: #{a_call__.9} parent=11 // pred_check
        %p268 = pneg %p188
      $region38: #{a_call__.9} parent=11 // pred_check_branch
        %270 = sbr.rel (%p268) target = $region40
      $region39: #{a_call__.9} parent=11 // pred_region
        _
      $region40: #{a_call__.9} parent=11 // pred_fallthru
        _
      // Predicated region
      $region41: #{a_call__.9} parent=11 // pred_check
        %p271 = pneg %p209
      $region42: #{a_call__.9} parent=11 // pred_check_branch
        %273 = sbr.rel (%p271) target = $region44
      $region43: #{a_call__.9} parent=11 // pred_region
        _
      $region44: #{a_call__.9} parent=11 // pred_fallthru
        _
    $region12: #{a_call__.9} parent=5 // pred_fallthru
      _
    %p274 = scmp.lt.s32.totalorder %s15, 2
    // Predicated region
    $region45: #{a_call__.9} parent=5 // pred_check
      %p275 = pneg %p274
    $region46: #{a_call__.9} parent=5 // pred_check_branch
      %277 = sbr.rel (%p275) target = $region48
    $region47: #{a_call__.9} parent=5 // pred_region
      // Predicated region
      $region49: #{a_call__.9} parent=47 // pred_check
        %p278 = pneg %p35
      $region50: #{a_call__.9} parent=47 // pred_check_branch
        %280 = sbr.rel (%p278) target = $region52
      $region51: #{a_call__.9} parent=47 // pred_region
        %s281 = smul.u32 4, %s15
        %p282 = scmp.lt.s32.totalorder %s281, 7
        %s283 = scalar_select %p282, %s281, 7
        %s284 = smul.addr %s283, 8
        %s285 = scalar_lea.vmem %s0, %s284
        %s286 = smul.u32 4, %s15
      $region52: #{a_call__.9} parent=47 // pred_fallthru
        _
    $region48: #{a_call__.9} parent=5 // pred_fallthru
      _
    %p287 = scmp.le.s32.totalorder 1, %s15
    %p288 = scmp.lt.s32.totalorder %s15, 3
    %p289 = pnand %p287, %p288
    %p290 = pneg %p289
    // Predicated region
    $region53: #{a_call__.9} parent=5 // pred_check
      _
    $region54: #{a_call__.9} parent=5 // pred_check_branch
      %292 = sbr.rel (%p289) target = $region56
    $region55: #{a_call__.9} parent=5 // pred_region
      %s293 = ssub.s32 %s15, 1
      %s294 = smul.u32 4, %s20
      %p295 = scmp.lt.s32.totalorder %s294, 7
      %s296 = scalar_select %p295, %s294, 7
      %s297 = smul.addr %s296, 8
      %s298 = scalar_lea.vmem %s0, %s297
      %p299 = pneg %p41
      %p300 = pneg %p38
      %p301 = pneg %p62
      %p302 = pneg %p59
      %p303 = pneg %p83
      %p304 = pneg %p80
      %p305 = pneg %p104
      %p306 = pneg %p101
      %p307 = pneg %p125
      %p308 = pneg %p122
      %p309 = pneg %p146
      %p310 = pneg %p143
      %p311 = pneg %p167
      %p312 = pneg %p164
      %p313 = pneg %p188
      %p314 = pneg %p185
      %p315 = pneg %p209
      %p316 = pneg %p206
      %p317 = pneg %p235
      %p318 = pneg %p232
      %s319 = smul.u32 4, %s20
      %p320 = scmp.lt.s32.totalorder %s319, 7
      %s321 = scalar_select %p320, %s319, 7
      %s322 = smul.addr %s321, 8
      %s323 = scalar_lea.vmem %s9, %s322
      %s324 = smul.u32 4, %s20
      %p325 = scmp.lt.s32.totalorder %s324, 7
      %s326 = scalar_select %p325, %s324, 7
      %s327 = smul.addr %s326, 8
      %s328 = scalar_lea.vmem %s0, %s327
      %s329 = smul.u32 4, %s20
      %s330 = smul.u32 4, %s20
      %p331 = scmp.lt.s32.totalorder %s330, 7
      %s332 = scalar_select %p331, %s330, 7
      %s333 = smul.addr %s332, 8
      %s334 = scalar_lea.vmem %s9, %s333
      %s335 = smul.u32 4, %s20
      %v337 = vld [vmem:[%s328] sm:$0xff]
      %v338 = vld [vmem:[%s328 + $0x8] sm:$0xff]
      %v339 = vld [vmem:[%s328 + $0x10] sm:$0xff]
      %v340 = vld [vmem:[%s328 + $0x18] sm:$0xff]
      %v341 = vpack.c.bf16 %v338, %v337
      %v342 = vpack.c.bf16 %v340, %v339
      %v343 = vld [vmem:[%s1] sm:$0x3]
      %v344 = vld [vmem:[%s2] sm:$0x1]
      %v346 = vlaneseq
      %v347 = vshrl.u32 %v346, 7
      %v348 = vsub.s32 0, %v347
      %v349 = vrot.slane %v344, %v348
      %vm351 = vcmask 31744
      %v353 = vsel %vm351, %v341, 0
      %v356 = vsel %vm351, %v342, 0
      %vm358 = vcmask 1041408
      %v360 = vsel %vm358, %v343, 0
      %362 = vmatprep.subr.bf16.mxu0 0
      %363 = vmatpush1.bf16.msra.mxu0 %v360
      %364 = vmatprep.subr.bf16.mxu0 0
      %365 = vmatpush1.bf16.msra.mxu0 0
      %366 = vmatprep.subr.bf16.mxu0 0
      %367 = vmatpush1.bf16.msra.mxu0 0
      %368 = vmatprep.subr.bf16.mxu0 0
      %369 = vmatpush1.bf16.msra.mxu0 0
      %370 = vmatprep.subr.bf16.mxu0 0
      %371 = vmatpush1.bf16.msra.mxu0 0
      %372 = vmatprep.subr.bf16.mxu0 0
      %373 = vmatpush1.bf16.msra.mxu0 0
      %374 = vmatprep.subr.bf16.mxu0 0
      %375 = vmatpush1.bf16.msra.mxu0 0
      %376 = vmatprep.subr.bf16.mxu0 0
      %377 = vmatpush1.bf16.msra.mxu0 0
      %378 = vmatprep.subr.bf16.mxu0 0
      %379 = vmatpush1.bf16.msra.mxu0 0
      %380 = vmatprep.subr.bf16.mxu0 0
      %381 = vmatpush1.bf16.msra.mxu0 0
      %382 = vmatprep.subr.bf16.mxu0 0
      %383 = vmatpush1.bf16.msra.mxu0 0
      %384 = vmatprep.subr.bf16.mxu0 0
      %385 = vmatpush1.bf16.msra.mxu0 0
      %386 = vmatprep.subr.bf16.mxu0 0
      %387 = vmatpush1.bf16.msra.mxu0 0
      %388 = vmatprep.subr.bf16.mxu0 0
      %389 = vmatpush1.bf16.msra.mxu0 0
      %390 = vmatprep.subr.bf16.mxu0 0
      %391 = vmatpush1.bf16.msra.mxu0 0
      %392 = vmatprep.subr.bf16.mxu0 0
      %393 = vmatpush1.bf16.msra.mxu0 0
      %394 = vmatprep.mubr.bf16.mxu0 0
      %395 = vmatmul.mubr.bf16.gmra.mrb[0].mxu0 %v353
      %v396 = vpop.f32.mrb[0].mxu0
      %v397 = vadd.f32 %v349, %v396
      %v398 = vpop.f32.mrb[0].mxu0
      %v399 = vpop.f32.mrb[0].mxu0
      %v400 = vadd.f32 %v349, %v399
      %v401 = vpop.f32.mrb[0].mxu0
      %402 = vmatprep.mubr.bf16.mxu0 0
      %403 = vmatmul.mubr.bf16.gmra.mrb[0].mxu0 %v356
      %v404 = vpop.f32.mrb[0].mxu0
      %v405 = vadd.f32 %v349, %v404
      %v406 = vpop.f32.mrb[0].mxu0
      %v407 = vpop.f32.mrb[0].mxu0
      %v408 = vadd.f32 %v349, %v407
      %v409 = vpop.f32.mrb[0].mxu0
      %410 = vdwg.mxu0
      %vm411 = vcmask 64512
      %v412 = vsel %vm411, %v397, 0.0
      %413 = vadd.xlane.f32.xlu0 %v412
      %v414 = vpop.xlane.xlu0 %413
      %v415 = vsel %vm411, %v400, 0.0
      %416 = vadd.xlane.f32.xlu0 %v415
      %v417 = vpop.xlane.xlu0 %416
      %v418 = vsel %vm411, %v405, 0.0
      %419 = vadd.xlane.f32.xlu0 %v418
      %v420 = vpop.xlane.xlu0 %419
      %v421 = vsel %vm411, %v408, 0.0
      %422 = vadd.xlane.f32.xlu0 %v421
      %v423 = vpop.xlane.xlu0 %422
      %v424 = vrcp.pop 8.0
      %v425 = vmul.f32 %v414, %v424
      %v426 = vmul.f32 %v417, %v424
      %v427 = vmul.f32 %v420, %v424
      %v428 = vmul.f32 %v423, %v424
      %v429 = vsub.f32 %v397, %v425
      %v430 = vsub.f32 %v400, %v426
      %v431 = vsub.f32 %v405, %v427
      %v432 = vsub.f32 %v408, %v428
      %v433 = vmul.f32 %v429, %v429
      %v434 = vmul.f32 %v430, %v430
      %v435 = vmul.f32 %v431, %v431
      %v436 = vmul.f32 %v432, %v432
      %v437 = vsel %vm411, %v433, 0.0
      %438 = vadd.xlane.f32.xlu0 %v437
      %v439 = vpop.xlane.xlu0 %438
      %v440 = vsel %vm411, %v434, 0.0
      %441 = vadd.xlane.f32.xlu0 %v440
      %v442 = vpop.xlane.xlu0 %441
      %v443 = vsel %vm411, %v435, 0.0
      %444 = vadd.xlane.f32.xlu0 %v443
      %v445 = vpop.xlane.xlu0 %444
      %v446 = vsel %vm411, %v436, 0.0
      %447 = vadd.xlane.f32.xlu0 %v446
      %v448 = vpop.xlane.xlu0 %447
      %v449 = vmul.f32 %v439, %v424
      %v450 = vmul.f32 %v442, %v424
      %v451 = vmul.f32 %v445, %v424
      %v452 = vmul.f32 %v448, %v424
      %v453 = vadd.f32 %v449, 1e-05
      %v454 = vadd.f32 %v450, 1e-05
      %v455 = vadd.f32 %v451, 1e-05
      %v456 = vadd.f32 %v452, 1e-05
      %v457 = vrsqrt.pop %v453
      %v458 = vrsqrt.pop %v454
      %v459 = vrsqrt.pop %v455
      %v460 = vrsqrt.pop %v456
      %v461 = vmul.f32 %v429, %v457
      %v462 = vmul.f32 %v430, %v458
      %v463 = vmul.f32 %v431, %v459
      %v464 = vmul.f32 %v432, %v460
      %v465 = vld [vmem:[%s3] sm:$0x1]
      %v467 = vlaneseq
      %v468 = vshrl.u32 %v467, 7
      %v469 = vsub.s32 0, %v468
      %v470 = vrot.slane %v465, %v469
      %v472 = vmul.f32 %v461, %v470
      %v473 = vmul.f32 %v462, %v470
      %v474 = vmul.f32 %v463, %v470
      %v475 = vmul.f32 %v464, %v470
      %v476 = vld [vmem:[%s4] sm:$0x1]
      %v478 = vlaneseq
      %v479 = vshrl.u32 %v478, 7
      %v480 = vsub.s32 0, %v479
      %v481 = vrot.slane %v476, %v480
      %v483 = vadd.f32 %v472, %v481
      %v484 = vadd.f32 %v473, %v481
      %v485 = vadd.f32 %v474, %v481
      %v486 = vadd.f32 %v475, %v481
      %v487 = vpack.c.bf16 %v484, %v483
      %v488 = vpack.c.bf16 %v486, %v485
      %v489 = vld [vmem:[%s5] sm:$0xf]
      %v490 = vld [vmem:[%s6] sm:$0x1]
      %v492 = vlaneseq
      %v493 = vshrl.u32 %v492, 7
      %v494 = vsub.s32 0, %v493
      %v495 = vrot.slane %v490, %v494
      %v498 = vsel %vm411, %v487, 0
      %v501 = vsel %vm411, %v488, 0
      %vm503 = vcmask 1043456
      %v505 = vsel %vm503, %v489, 0
      %507 = vmatprep.subr.bf16.mxu0 0
      %508 = vmatpush1.bf16.msra.mxu0 %v505
      %509 = vmatprep.subr.bf16.mxu0 0
      %510 = vmatpush1.bf16.msra.mxu0 0
      %511 = vmatprep.subr.bf16.mxu0 0
      %512 = vmatpush1.bf16.msra.mxu0 0
      %513 = vmatprep.subr.bf16.mxu0 0
      %514 = vmatpush1.bf16.msra.mxu0 0
      %515 = vmatprep.subr.bf16.mxu0 0
      %516 = vmatpush1.bf16.msra.mxu0 0
      %517 = vmatprep.subr.bf16.mxu0 0
      %518 = vmatpush1.bf16.msra.mxu0 0
      %519 = vmatprep.subr.bf16.mxu0 0
      %520 = vmatpush1.bf16.msra.mxu0 0
      %521 = vmatprep.subr.bf16.mxu0 0
      %522 = vmatpush1.bf16.msra.mxu0 0
      %523 = vmatprep.subr.bf16.mxu0 0
      %524 = vmatpush1.bf16.msra.mxu0 0
      %525 = vmatprep.subr.bf16.mxu0 0
      %526 = vmatpush1.bf16.msra.mxu0 0
      %527 = vmatprep.subr.bf16.mxu0 0
      %528 = vmatpush1.bf16.msra.mxu0 0
      %529 = vmatprep.subr.bf16.mxu0 0
      %530 = vmatpush1.bf16.msra.mxu0 0
      %531 = vmatprep.subr.bf16.mxu0 0
      %532 = vmatpush1.bf16.msra.mxu0 0
      %533 = vmatprep.subr.bf16.mxu0 0
      %534 = vmatpush1.bf16.msra.mxu0 0
      %535 = vmatprep.subr.bf16.mxu0 0
      %536 = vmatpush1.bf16.msra.mxu0 0
      %537 = vmatprep.subr.bf16.mxu0 0
      %538 = vmatpush1.bf16.msra.mxu0 0
      %539 = vmatprep.mubr.bf16.mxu0 0
      %540 = vmatmul.mubr.bf16.gmra.mrb[0].mxu0 %v498
      %v541 = vpop.f32.mrb[0].mxu0
      %v542 = vadd.f32 %v495, %v541
      %v543 = vpop.f32.mrb[0].mxu0
      %v544 = vpop.f32.mrb[0].mxu0
      %v545 = vadd.f32 %v495, %v544
      %v546 = vpop.f32.mrb[0].mxu0
      %547 = vmatprep.mubr.bf16.mxu0 0
      %548 = vmatmul.mubr.bf16.gmra.mrb[0].mxu0 %v501
      %v549 = vpop.f32.mrb[0].mxu0
      %v550 = vadd.f32 %v495, %v549
      %v551 = vpop.f32.mrb[0].mxu0
      %v552 = vpop.f32.mrb[0].mxu0
      %v553 = vadd.f32 %v495, %v552
      %v554 = vpop.f32.mrb[0].mxu0
      %555 = vdwg.mxu0
      %v556 = vmul.f32 %v542, 0.5
      %v557 = vmul.f32 %v545, 0.5
      %v558 = vmul.f32 %v550, 0.5
      %v559 = vmul.f32 %v553, 0.5
      %v560 = vmul.f32 %v542, 0.044715
      %v561 = vmul.f32 %v545, 0.044715
      %v562 = vmul.f32 %v550, 0.044715
      %v563 = vmul.f32 %v553, 0.044715
      %v564 = vmul.f32 %v560, %v542
      %v565 = vmul.f32 %v561, %v545
      %v566 = vmul.f32 %v562, %v550
      %v567 = vmul.f32 %v563, %v553
      %v568 = vmul.f32 %v564, %v542
      %v569 = vmul.f32 %v565, %v545
      %v570 = vmul.f32 %v566, %v550
      %v571 = vmul.f32 %v567, %v553
      %v572 = vadd.f32 %v542, %v568
      %v573 = vadd.f32 %v545, %v569
      %v574 = vadd.f32 %v550, %v570
      %v575 = vadd.f32 %v553, %v571
      %v576 = vmul.f32 %v572, 0.7978846
      %v577 = vmul.f32 %v573, 0.7978846
      %v578 = vmul.f32 %v574, 0.7978846
      %v579 = vmul.f32 %v575, 0.7978846
      %v580 = vtanh.pop %v576
      %v581 = vtanh.pop %v577
      %v582 = vtanh.pop %v578
      %v583 = vtanh.pop %v579
      %v584 = vadd.f32 %v580, 1.0
      %v585 = vadd.f32 %v581, 1.0
      %v586 = vadd.f32 %v582, 1.0
      %v587 = vadd.f32 %v583, 1.0
      %v588 = vmul.f32 %v556, %v584
      %v589 = vmul.f32 %v557, %v585
      %v590 = vmul.f32 %v558, %v586
      %v591 = vmul.f32 %v559, %v587
      %v592 = vpack.c.bf16 %v589, %v588
      %v593 = vpack.c.bf16 %v591, %v590
      %v594 = vld [vmem:[%s7] sm:$0xf]
      %v595 = vld [vmem:[%s7 + $0x4] sm:$0xf]
      %v596 = vld [vmem:[%s8] sm:$0x1]
      %v598 = vlaneseq
      %v599 = vshrl.u32 %v598, 7
      %v600 = vsub.s32 0, %v599
      %v601 = vrot.slane %v596, %v600
      %v605 = vunpack.c.l.b16 %v594
      %v606 = vunpack.c.l.b16 %v595
      %v607 = vpack.c.b16 %v606, %v605
      %vm609 = vcmask 130048
      %v611 = vsel %vm609, %v592, 0
      %v614 = vsel %vm609, %v593, 0
      %616 = vmatprep.subr.bf16.mxu0 0
      %617 = vmatpush1.bf16.msra.mxu0 %v607
      %618 = vmatprep.subr.bf16.mxu0 0
      %619 = vmatpush1.bf16.msra.mxu0 0
      %620 = vmatprep.subr.bf16.mxu0 0
      %621 = vmatpush1.bf16.msra.mxu0 0
      %622 = vmatprep.subr.bf16.mxu0 0
      %623 = vmatpush1.bf16.msra.mxu0 0
      %624 = vmatprep.subr.bf16.mxu0 0
      %625 = vmatpush1.bf16.msra.mxu0 0
      %626 = vmatprep.subr.bf16.mxu0 0
      %627 = vmatpush1.bf16.msra.mxu0 0
      %628 = vmatprep.subr.bf16.mxu0 0
      %629 = vmatpush1.bf16.msra.mxu0 0
      %630 = vmatprep.subr.bf16.mxu0 0
      %631 = vmatpush1.bf16.msra.mxu0 0
      %632 = vmatprep.subr.bf16.mxu0 0
      %633 = vmatpush1.bf16.msra.mxu0 0
      %634 = vmatprep.subr.bf16.mxu0 0
      %635 = vmatpush1.bf16.msra.mxu0 0
      %636 = vmatprep.subr.bf16.mxu0 0
      %637 = vmatpush1.bf16.msra.mxu0 0
      %638 = vmatprep.subr.bf16.mxu0 0
      %639 = vmatpush1.bf16.msra.mxu0 0
      %640 = vmatprep.subr.bf16.mxu0 0
      %641 = vmatpush1.bf16.msra.mxu0 0
      %642 = vmatprep.subr.bf16.mxu0 0
      %643 = vmatpush1.bf16.msra.mxu0 0
      %644 = vmatprep.subr.bf16.mxu0 0
      %645 = vmatpush1.bf16.msra.mxu0 0
      %646 = vmatprep.subr.bf16.mxu0 0
      %647 = vmatpush1.bf16.msra.mxu0 0
      %648 = vmatprep.mubr.bf16.mxu0 0
      %649 = vmatmul.mubr.bf16.gmra.mrb[0].mxu0 %v611
      %v650 = vpop.f32.mrb[0].mxu0
      %v651 = vadd.f32 %v601, %v650
      %v652 = vpop.f32.mrb[0].mxu0
      %v653 = vpop.f32.mrb[0].mxu0
      %v654 = vadd.f32 %v601, %v653
      %v655 = vpop.f32.mrb[0].mxu0
      %656 = vmatprep.mubr.bf16.mxu0 0
      %657 = vmatmul.mubr.bf16.gmra.mrb[0].mxu0 %v614
      %v658 = vpop.f32.mrb[0].mxu0
      %v659 = vadd.f32 %v601, %v658
      %v660 = vpop.f32.mrb[0].mxu0
      %v661 = vpop.f32.mrb[0].mxu0
      %v662 = vadd.f32 %v601, %v661
      %v663 = vpop.f32.mrb[0].mxu0
      %664 = vdwg.mxu0
      %v665 = vadd.f32 %v651, %v397
      %v666 = vadd.f32 %v654, %v400
      %v667 = vadd.f32 %v659, %v405
      %v668 = vadd.f32 %v662, %v408
      %669 = vst.msk [vmem:[%s334] sm:$0xff] %vm411, %v665
      %670 = vst.msk [vmem:[%s334 + $0x8] sm:$0xff] %vm411, %v666
      %671 = vst.msk [vmem:[%s334 + $0x10] sm:$0xff] %vm411, %v667
      %672 = vst.msk [vmem:[%s334 + $0x18] sm:$0xff] %vm411, %v668
      %s673 = smul.u32 4, %s20
      %p674 = scmp.lt.s32.totalorder %s673, 7
      %s675 = scalar_select %p674, %s673, 7
      %s676 = smul.addr %s675, 8
      %s677 = scalar_lea.vmem %s9, %s676
      // Predicated region
      $region57: #{a_call__.9} parent=55 // pred_check
        %p678 = pneg %p232
      $region58: #{a_call__.9} parent=55 // pred_check_branch
        %680 = sbr.rel (%p678) target = $region60
      $region59: #{a_call__.9} parent=55 // pred_region
        %s681 = smul.u32 4, %s20
      $region60: #{a_call__.9} parent=55 // pred_fallthru
        _
    $region56: #{a_call__.9} parent=5 // pred_fallthru
      _
    %p682 = scmp.le.s32.totalorder 2, %s15
    // Predicated region
    $region61: #{a_call__.9} parent=5 // pred_check
      %p683 = pneg %p682
    $region62: #{a_call__.9} parent=5 // pred_check_branch
      %685 = sbr.rel (%p683) target = $region64
    $region63: #{a_call__.9} parent=5 // pred_region
      %s686 = ssub.s32 %s15, 2
      // Predicated region
      $region65: #{a_call__.9} parent=63 // pred_check
        %p687 = pneg %p238
      $region66: #{a_call__.9} parent=63 // pred_check_branch
        %689 = sbr.rel (%p687) target = $region68
      $region67: #{a_call__.9} parent=63 // pred_region
        %s690 = smul.u32 4, %s21
        %p691 = scmp.lt.s32.totalorder %s690, 7
        %s692 = scalar_select %p691, %s690, 7
        %s693 = smul.addr %s692, 8
        %s694 = scalar_lea.vmem %s9, %s693
      $region68: #{a_call__.9} parent=63 // pred_fallthru
        _
    $region64: #{a_call__.9} parent=5 // pred_fallthru
      _
  $region6: #{a_call__.9} parent=0 // loop_footer
    %s19 = sadd.s32 1, %s15
  $region7: #{a_call__.9} parent=0 // loop_footer_branch
    %14 = sbr.rel target = $region3
  $region8: #{a_call__.9} parent=0 // loop_exit
    _

// kernel: a_call__.10
$region0: #{a_call__.10}
  #allocation0 [shape = 'u32[]', space=smem, size = 0x4, offset = 0x4, fixed_abs, tag = 'smem constant byte address 0x4 - core index']
  #allocation1 [shape = 'u32[144,128]{1,0:T(1,128)}', space=vmem, size = 0x12000, scoped, tag = 'internal scratch']
  %s0 = inlined_call_operand.vmem [shape: f32[64,8], index: 0, kind: input, shape index: {}]
  %s1 = inlined_call_operand.vmem [shape: f32[1,8], index: 1, kind: input, shape index: {}]
  %s2 = inlined_call_operand.vmem [shape: f32[1,8], index: 2, kind: input, shape index: {}]
  %s3 = inlined_call_operand.vmem [shape: bf16[8,16], index: 3, kind: input, shape index: {}]
  %s4 = inlined_call_operand.vmem [shape: f32[1,16], index: 4, kind: input, shape index: {}]
  %s5 = inlined_call_operand.vmem [shape: bf16[16,8], index: 5, kind: input, shape index: {}]
  %s6 = inlined_call_operand.vmem [shape: f32[1,8], index: 6, kind: input, shape index: {}]
  %s7 = inlined_call_operand.vmem [shape: f32[64,8], index: 7, kind: output, shape index: {}]
  %s8 = sld [smem:[#allocation0]]
  $region61: #{a_call__.10} parent=0
    _
  %s10 = ssub.s32 1, %s8
  %s11 = scalar_select 0, %s10, %s8
  loop: start=0, step=1, limit=4
  $region2: #{a_call__.10} parent=0 // loop_pre_header
    _
  $region3: #{a_call__.10} parent=0 // loop_header
    %s13 = sphi 0, %s17
    %p14 = scmp.ge.s32.totalorder %s13, 4
    %s23 = sphi 0, %s25
    %s26 = sphi 0, %s23
    %s27 = sphi 0, %s26
    %s43 = sphi 0, %s27
    %s47 = sphi 0, %s47
    %s49 = sphi 0, %s47
    %s50 = sphi 0, %s49
    %s64 = sphi 0, %s50
    %s68 = sphi 0, %s68
    %s70 = sphi 0, %s68
    %s71 = sphi 0, %s70
    %s85 = sphi 0, %s71
    %s89 = sphi 0, %s89
    %s91 = sphi 0, %s89
    %s92 = sphi 0, %s91
    %s106 = sphi 0, %s92
    %s110 = sphi 0, %s110
    %s112 = sphi 0, %s110
    %s113 = sphi 0, %s112
    %s127 = sphi 0, %s113
    %s131 = sphi 0, %s131
    %s133 = sphi 0, %s131
    %s134 = sphi 0, %s133
    %s148 = sphi 0, %s134
    %s152 = sphi 0, %s152
    %s154 = sphi 0, %s152
    %s155 = sphi 0, %s154
    %s169 = sphi 0, %s155
    %s175 = sphi 0, %s177
    %s178 = sphi 0, %s175
    %s179 = sphi 0, %s178
    %s195 = sphi 0, %s179
  $region4: #{a_call__.10} parent=0 // loop_header_branch
    %16 = sbr.rel (%p14) target = $region8
  $region5: #{a_call__.10} parent=0 // loop_body
    %s18 = ssub.s32 %s13, 1
    %s19 = ssub.s32 %s13, 2
    %s20 = sadd.s32 %s13, 1
    %s21 = ssub.s32 %s13, %s20
    %p22 = scmp.eq.s32.totalorder %s21, 0
    %s24 = sadd.s32 %s23, 1
    %s25 = scalar_select %p22, %s23, %s24
    %p28 = pneg %p22
    %p29 = scmp.eq.s32.totalorder %s13, 1
    %p30 = por %p28, %p29
    %p31 = scmp.ne.s32.totalorder %s23, %s26
    %p32 = scmp.eq.s32.totalorder %s13, 0
    %p33 = por %p31, %p32
    %p34 = scmp.ne.s32.totalorder %s23, %s26
    %p35 = scmp.eq.s32.totalorder %s18, 1
    %p36 = por %p34, %p35
    %p37 = scmp.ne.s32.totalorder %s26, %s27
    %p38 = scmp.eq.s32.totalorder %s18, 0
    %p39 = por %p37, %p38
    %p40 = scmp.ne.s32.totalorder %s26, %s27
    %p41 = scmp.eq.s32.totalorder %s19, 1
    %p42 = por %p40, %p41
    %p44 = scmp.ne.s32.totalorder %s27, %s43
    %p45 = scmp.eq.s32.totalorder %s19, 0
    %p46 = por %p44, %p45
    %s48 = sadd.s32 %s47, 1
    %p51 = scmp.eq.s32.totalorder %s13, 1
    %p52 = scmp.ne.s32.totalorder %s47, %s49
    %p53 = scmp.eq.s32.totalorder %s13, 0
    %p54 = por %p52, %p53
    %p55 = scmp.ne.s32.totalorder %s47, %s49
    %p56 = scmp.eq.s32.totalorder %s18, 1
    %p57 = por %p55, %p56
    %p58 = scmp.ne.s32.totalorder %s49, %s50
    %p59 = scmp.eq.s32.totalorder %s18, 0
    %p60 = por %p58, %p59
    %p61 = scmp.ne.s32.totalorder %s49, %s50
    %p62 = scmp.eq.s32.totalorder %s19, 1
    %p63 = por %p61, %p62
    %p65 = scmp.ne.s32.totalorder %s50, %s64
    %p66 = scmp.eq.s32.totalorder %s19, 0
    %p67 = por %p65, %p66
    %s69 = sadd.s32 %s68, 1
    %p72 = scmp.eq.s32.totalorder %s13, 1
    %p73 = scmp.ne.s32.totalorder %s68, %s70
    %p74 = scmp.eq.s32.totalorder %s13, 0
    %p75 = por %p73, %p74
    %p76 = scmp.ne.s32.totalorder %s68, %s70
    %p77 = scmp.eq.s32.totalorder %s18, 1
    %p78 = por %p76, %p77
    %p79 = scmp.ne.s32.totalorder %s70, %s71
    %p80 = scmp.eq.s32.totalorder %s18, 0
    %p81 = por %p79, %p80
    %p82 = scmp.ne.s32.totalorder %s70, %s71
    %p83 = scmp.eq.s32.totalorder %s19, 1
    %p84 = por %p82, %p83
    %p86 = scmp.ne.s32.totalorder %s71, %s85
    %p87 = scmp.eq.s32.totalorder %s19, 0
    %p88 = por %p86, %p87
    %s90 = sadd.s32 %s89, 1
    %p93 = scmp.eq.s32.totalorder %s13, 1
    %p94 = scmp.ne.s32.totalorder %s89, %s91
    %p95 = scmp.eq.s32.totalorder %s13, 0
    %p96 = por %p94, %p95
    %p97 = scmp.ne.s32.totalorder %s89, %s91
    %p98 = scmp.eq.s32.totalorder %s18, 1
    %p99 = por %p97, %p98
    %p100 = scmp.ne.s32.totalorder %s91, %s92
    %p101 = scmp.eq.s32.totalorder %s18, 0
    %p102 = por %p100, %p101
    %p103 = scmp.ne.s32.totalorder %s91, %s92
    %p104 = scmp.eq.s32.totalorder %s19, 1
    %p105 = por %p103, %p104
    %p107 = scmp.ne.s32.totalorder %s92, %s106
    %p108 = scmp.eq.s32.totalorder %s19, 0
    %p109 = por %p107, %p108
    %s111 = sadd.s32 %s110, 1
    %p114 = scmp.eq.s32.totalorder %s13, 1
    %p115 = scmp.ne.s32.totalorder %s110, %s112
    %p116 = scmp.eq.s32.totalorder %s13, 0
    %p117 = por %p115, %p116
    %p118 = scmp.ne.s32.totalorder %s110, %s112
    %p119 = scmp.eq.s32.totalorder %s18, 1
    %p120 = por %p118, %p119
    %p121 = scmp.ne.s32.totalorder %s112, %s113
    %p122 = scmp.eq.s32.totalorder %s18, 0
    %p123 = por %p121, %p122
    %p124 = scmp.ne.s32.totalorder %s112, %s113
    %p125 = scmp.eq.s32.totalorder %s19, 1
    %p126 = por %p124, %p125
    %p128 = scmp.ne.s32.totalorder %s113, %s127
    %p129 = scmp.eq.s32.totalorder %s19, 0
    %p130 = por %p128, %p129
    %s132 = sadd.s32 %s131, 1
    %p135 = scmp.eq.s32.totalorder %s13, 1
    %p136 = scmp.ne.s32.totalorder %s131, %s133
    %p137 = scmp.eq.s32.totalorder %s13, 0
    %p138 = por %p136, %p137
    %p139 = scmp.ne.s32.totalorder %s131, %s133
    %p140 = scmp.eq.s32.totalorder %s18, 1
    %p141 = por %p139, %p140
    %p142 = scmp.ne.s32.totalorder %s133, %s134
    %p143 = scmp.eq.s32.totalorder %s18, 0
    %p144 = por %p142, %p143
    %p145 = scmp.ne.s32.totalorder %s133, %s134
    %p146 = scmp.eq.s32.totalorder %s19, 1
    %p147 = por %p145, %p146
    %p149 = scmp.ne.s32.totalorder %s134, %s148
    %p150 = scmp.eq.s32.totalorder %s19, 0
    %p151 = por %p149, %p150
    %s153 = sadd.s32 %s152, 1
    %p156 = scmp.eq.s32.totalorder %s13, 1
    %p157 = scmp.ne.s32.totalorder %s152, %s154
    %p158 = scmp.eq.s32.totalorder %s13, 0
    %p159 = por %p157, %p158
    %p160 = scmp.ne.s32.totalorder %s152, %s154
    %p161 = scmp.eq.s32.totalorder %s18, 1
    %p162 = por %p160, %p161
    %p163 = scmp.ne.s32.totalorder %s154, %s155
    %p164 = scmp.eq.s32.totalorder %s18, 0
    %p165 = por %p163, %p164
    %p166 = scmp.ne.s32.totalorder %s154, %s155
    %p167 = scmp.eq.s32.totalorder %s19, 1
    %p168 = por %p166, %p167
    %p170 = scmp.ne.s32.totalorder %s155, %s169
    %p171 = scmp.eq.s32.totalorder %s19, 0
    %p172 = por %p170, %p171
    %s173 = ssub.s32 %s13, %s20
    %p174 = scmp.eq.s32.totalorder %s173, 0
    %s176 = sadd.s32 %s175, 1
    %s177 = scalar_select %p174, %s175, %s176
    %p180 = pneg %p174
    %p181 = scmp.eq.s32.totalorder %s13, 1
    %p182 = por %p180, %p181
    %p183 = scmp.ne.s32.totalorder %s175, %s178
    %p184 = scmp.eq.s32.totalorder %s13, 0
    %p185 = por %p183, %p184
    %p186 = scmp.ne.s32.totalorder %s175, %s178
    %p187 = scmp.eq.s32.totalorder %s18, 1
    %p188 = por %p186, %p187
    %p189 = scmp.ne.s32.totalorder %s178, %s179
    %p190 = scmp.eq.s32.totalorder %s18, 0
    %p191 = por %p189, %p190
    %p192 = scmp.ne.s32.totalorder %s178, %s179
    %p193 = scmp.eq.s32.totalorder %s19, 1
    %p194 = por %p192, %p193
    %p196 = scmp.ne.s32.totalorder %s179, %s195
    %p197 = scmp.eq.s32.totalorder %s19, 0
    %p198 = por %p196, %p197
    %p199 = scmp.le.s32.totalorder 1, %s13
    %p200 = scmp.lt.s32.totalorder %s13, 3
    %p201 = pnand %p199, %p200
    %p202 = pneg %p201
    // Predicated region
    $region9: #{a_call__.10} parent=5 // pred_check
      _
    $region10: #{a_call__.10} parent=5 // pred_check_branch
      %204 = sbr.rel (%p201) target = $region12
    $region11: #{a_call__.10} parent=5 // pred_region
      %s205 = ssub.s32 %s13, 1
      // Predicated region
      $region13: #{a_call__.10} parent=11 // pred_check
        %p206 = pneg %p60
      $region14: #{a_call__.10} parent=11 // pred_check_branch
        %208 = sbr.rel (%p206) target = $region16
      $region15: #{a_call__.10} parent=11 // pred_region
        _
      $region16: #{a_call__.10} parent=11 // pred_fallthru
        _
      // Predicated region
      $region17: #{a_call__.10} parent=11 // pred_check
        %p209 = pneg %p81
      $region18: #{a_call__.10} parent=11 // pred_check_branch
        %211 = sbr.rel (%p209) target = $region20
      $region19: #{a_call__.10} parent=11 // pred_region
        _
      $region20: #{a_call__.10} parent=11 // pred_fallthru
        _
      // Predicated region
      $region21: #{a_call__.10} parent=11 // pred_check
        %p212 = pneg %p102
      $region22: #{a_call__.10} parent=11 // pred_check_branch
        %214 = sbr.rel (%p212) target = $region24
      $region23: #{a_call__.10} parent=11 // pred_region
        _
      $region24: #{a_call__.10} parent=11 // pred_fallthru
        _
      // Predicated region
      $region25: #{a_call__.10} parent=11 // pred_check
        %p215 = pneg %p123
      $region26: #{a_call__.10} parent=11 // pred_check_branch
        %217 = sbr.rel (%p215) target = $region28
      $region27: #{a_call__.10} parent=11 // pred_region
        _
      $region28: #{a_call__.10} parent=11 // pred_fallthru
        _
      // Predicated region
      $region29: #{a_call__.10} parent=11 // pred_check
        %p218 = pneg %p144
      $region30: #{a_call__.10} parent=11 // pred_check_branch
        %220 = sbr.rel (%p218) target = $region32
      $region31: #{a_call__.10} parent=11 // pred_region
        _
      $region32: #{a_call__.10} parent=11 // pred_fallthru
        _
      // Predicated region
      $region33: #{a_call__.10} parent=11 // pred_check
        %p221 = pneg %p165
      $region34: #{a_call__.10} parent=11 // pred_check_branch
        %223 = sbr.rel (%p221) target = $region36
      $region35: #{a_call__.10} parent=11 // pred_region
        _
      $region36: #{a_call__.10} parent=11 // pred_fallthru
        _
    $region12: #{a_call__.10} parent=5 // pred_fallthru
      _
    %p224 = scmp.lt.s32.totalorder %s13, 2
    // Predicated region
    $region37: #{a_call__.10} parent=5 // pred_check
      %p225 = pneg %p224
    $region38: #{a_call__.10} parent=5 // pred_check_branch
      %227 = sbr.rel (%p225) target = $region40
    $region39: #{a_call__.10} parent=5 // pred_region
      // Predicated region
      $region41: #{a_call__.10} parent=39 // pred_check
        %p228 = pneg %p33
      $region42: #{a_call__.10} parent=39 // pred_check_branch
        %230 = sbr.rel (%p228) target = $region44
      $region43: #{a_call__.10} parent=39 // pred_region
        %s231 = smul.u32 4, %s13
        %p232 = scmp.lt.s32.totalorder %s231, 7
        %s233 = scalar_select %p232, %s231, 7
        %s234 = smul.addr %s233, 8
        %s235 = scalar_lea.vmem %s0, %s234
        %s236 = smul.u32 4, %s13
      $region44: #{a_call__.10} parent=39 // pred_fallthru
        _
    $region40: #{a_call__.10} parent=5 // pred_fallthru
      _
    %p237 = scmp.le.s32.totalorder 1, %s13
    %p238 = scmp.lt.s32.totalorder %s13, 3
    %p239 = pnand %p237, %p238
    %p240 = pneg %p239
    // Predicated region
    $region45: #{a_call__.10} parent=5 // pred_check
      _
    $region46: #{a_call__.10} parent=5 // pred_check_branch
      %242 = sbr.rel (%p239) target = $region48
    $region47: #{a_call__.10} parent=5 // pred_region
      %s243 = ssub.s32 %s13, 1
      %s244 = smul.u32 4, %s18
      %p245 = scmp.lt.s32.totalorder %s244, 7
      %s246 = scalar_select %p245, %s244, 7
      %s247 = smul.addr %s246, 8
      %s248 = scalar_lea.vmem %s0, %s247
      %p249 = pneg %p39
      %p250 = pneg %p36
      %p251 = pneg %p60
      %p252 = pneg %p57
      %p253 = pneg %p81
      %p254 = pneg %p78
      %p255 = pneg %p102
      %p256 = pneg %p99
      %p257 = pneg %p123
      %p258 = pneg %p120
      %p259 = pneg %p144
      %p260 = pneg %p141
      %p261 = pneg %p165
      %p262 = pneg %p162
      %p263 = pneg %p191
      %p264 = pneg %p188
      %s265 = smul.u32 4, %s18
      %p266 = scmp.lt.s32.totalorder %s265, 7
      %s267 = scalar_select %p266, %s265, 7
      %s268 = smul.addr %s267, 8
      %s269 = scalar_lea.vmem %s7, %s268
      %s270 = smul.u32 4, %s18
      %p271 = scmp.lt.s32.totalorder %s270, 7
      %s272 = scalar_select %p271, %s270, 7
      %s273 = smul.addr %s272, 8
      %s274 = scalar_lea.vmem %s0, %s273
      %s275 = smul.u32 4, %s18
      %s276 = smul.u32 4, %s18
      %p277 = scmp.lt.s32.totalorder %s276, 7
      %s278 = scalar_select %p277, %s276, 7
      %s279 = smul.addr %s278, 8
      %s280 = scalar_lea.vmem %s7, %s279
      %s281 = smul.u32 4, %s18
      %v283 = vld [vmem:[%s274] sm:$0xff]
      %v284 = vld [vmem:[%s274 + $0x8] sm:$0xff]
      %v285 = vld [vmem:[%s274 + $0x10] sm:$0xff]
      %v286 = vld [vmem:[%s274 + $0x18] sm:$0xff]
      %vm287 = vcmask 64512
      %v288 = vsel %vm287, %v283, 0.0
      %289 = vadd.xlane.f32.xlu0 %v288
      %v290 = vpop.xlane.xlu0 %289
      %v291 = vsel %vm287, %v284, 0.0
      %292 = vadd.xlane.f32.xlu0 %v291
      %v293 = vpop.xlane.xlu0 %292
      %v294 = vsel %vm287, %v285, 0.0
      %295 = vadd.xlane.f32.xlu0 %v294
      %v296 = vpop.xlane.xlu0 %295
      %v297 = vsel %vm287, %v286, 0.0
      %298 = vadd.xlane.f32.xlu0 %v297
      %v299 = vpop.xlane.xlu0 %298
      %v300 = vrcp.pop 8.0
      %v301 = vmul.f32 %v290, %v300
      %v302 = vmul.f32 %v293, %v300
      %v303 = vmul.f32 %v296, %v300
      %v304 = vmul.f32 %v299, %v300
      %v305 = vsub.f32 %v283, %v301
      %v306 = vsub.f32 %v284, %v302
      %v307 = vsub.f32 %v285, %v303
      %v308 = vsub.f32 %v286, %v304
      %v309 = vmul.f32 %v305, %v305
      %v310 = vmul.f32 %v306, %v306
      %v311 = vmul.f32 %v307, %v307
      %v312 = vmul.f32 %v308, %v308
      %v313 = vsel %vm287, %v309, 0.0
      %314 = vadd.xlane.f32.xlu0 %v313
      %v315 = vpop.xlane.xlu0 %314
      %v316 = vsel %vm287, %v310, 0.0
      %317 = vadd.xlane.f32.xlu0 %v316
      %v318 = vpop.xlane.xlu0 %317
      %v319 = vsel %vm287, %v311, 0.0
      %320 = vadd.xlane.f32.xlu0 %v319
      %v321 = vpop.xlane.xlu0 %320
      %v322 = vsel %vm287, %v312, 0.0
      %323 = vadd.xlane.f32.xlu0 %v322
      %v324 = vpop.xlane.xlu0 %323
      %v325 = vmul.f32 %v315, %v300
      %v326 = vmul.f32 %v318, %v300
      %v327 = vmul.f32 %v321, %v300
      %v328 = vmul.f32 %v324, %v300
      %v329 = vadd.f32 %v325, 1e-05
      %v330 = vadd.f32 %v326, 1e-05
      %v331 = vadd.f32 %v327, 1e-05
      %v332 = vadd.f32 %v328, 1e-05
      %v333 = vrsqrt.pop %v329
      %v334 = vrsqrt.pop %v330
      %v335 = vrsqrt.pop %v331
      %v336 = vrsqrt.pop %v332
      %v337 = vmul.f32 %v305, %v333
      %v338 = vmul.f32 %v306, %v334
      %v339 = vmul.f32 %v307, %v335
      %v340 = vmul.f32 %v308, %v336
      %v341 = vld [vmem:[%s1] sm:$0x1]
      %v343 = vlaneseq
      %v344 = vshrl.u32 %v343, 7
      %v345 = vsub.s32 0, %v344
      %v346 = vrot.slane %v341, %v345
      %v348 = vmul.f32 %v337, %v346
      %v349 = vmul.f32 %v338, %v346
      %v350 = vmul.f32 %v339, %v346
      %v351 = vmul.f32 %v340, %v346
      %v352 = vld [vmem:[%s2] sm:$0x1]
      %v354 = vlaneseq
      %v355 = vshrl.u32 %v354, 7
      %v356 = vsub.s32 0, %v355
      %v357 = vrot.slane %v352, %v356
      %v359 = vadd.f32 %v348, %v357
      %v360 = vadd.f32 %v349, %v357
      %v361 = vadd.f32 %v350, %v357
      %v362 = vadd.f32 %v351, %v357
      %v363 = vpack.c.bf16 %v360, %v359
      %v364 = vpack.c.bf16 %v362, %v361
      %v365 = vld [vmem:[%s3] sm:$0xf]
      %v366 = vld [vmem:[%s4] sm:$0x1]
      %v368 = vlaneseq
      %v369 = vshrl.u32 %v368, 7
      %v370 = vsub.s32 0, %v369
      %v371 = vrot.slane %v366, %v370
      %v374 = vsel %vm287, %v363, 0
      %v377 = vsel %vm287, %v364, 0
      %vm379 = vcmask 1043456
      %v381 = vsel %vm379, %v365, 0
      %383 = vmatprep.subr.bf16.mxu0 0
      %384 = vmatpush1.bf16.msra.mxu0 %v381
      %385 = vmatprep.subr.bf16.mxu0 0
      %386 = vmatpush1.bf16.msra.mxu0 0
      %387 = vmatprep.subr.bf16.mxu0 0
      %388 = vmatpush1.bf16.msra.mxu0 0
      %389 = vmatprep.subr.bf16.mxu0 0
      %390 = vmatpush1.bf16.msra.mxu0 0
      %391 = vmatprep.subr.bf16.mxu0 0
      %392 = vmatpush1.bf16.msra.mxu0 0
      %393 = vmatprep.subr.bf16.mxu0 0
      %394 = vmatpush1.bf16.msra.mxu0 0
      %395 = vmatprep.subr.bf16.mxu0 0
      %396 = vmatpush1.bf16.msra.mxu0 0
      %397 = vmatprep.subr.bf16.mxu0 0
      %398 = vmatpush1.bf16.msra.mxu0 0
      %399 = vmatprep.subr.bf16.mxu0 0
      %400 = vmatpush1.bf16.msra.mxu0 0
      %401 = vmatprep.subr.bf16.mxu0 0
      %402 = vmatpush1.bf16.msra.mxu0 0
      %403 = vmatprep.subr.bf16.mxu0 0
      %404 = vmatpush1.bf16.msra.mxu0 0
      %405 = vmatprep.subr.bf16.mxu0 0
      %406 = vmatpush1.bf16.msra.mxu0 0
      %407 = vmatprep.subr.bf16.mxu0 0
      %408 = vmatpush1.bf16.msra.mxu0 0
      %409 = vmatprep.subr.bf16.mxu0 0
      %410 = vmatpush1.bf16.msra.mxu0 0
      %411 = vmatprep.subr.bf16.mxu0 0
      %412 = vmatpush1.bf16.msra.mxu0 0
      %413 = vmatprep.subr.bf16.mxu0 0
      %414 = vmatpush1.bf16.msra.mxu0 0
      %415 = vmatprep.mubr.bf16.mxu0 0
      %416 = vmatmul.mubr.bf16.gmra.mrb[0].mxu0 %v374
      %v417 = vpop.f32.mrb[0].mxu0
      %v418 = vadd.f32 %v371, %v417
      %v419 = vpop.f32.mrb[0].mxu0
      %v420 = vpop.f32.mrb[0].mxu0
      %v421 = vadd.f32 %v371, %v420
      %v422 = vpop.f32.mrb[0].mxu0
      %423 = vmatprep.mubr.bf16.mxu0 0
      %424 = vmatmul.mubr.bf16.gmra.mrb[0].mxu0 %v377
      %v425 = vpop.f32.mrb[0].mxu0
      %v426 = vadd.f32 %v371, %v425
      %v427 = vpop.f32.mrb[0].mxu0
      %v428 = vpop.f32.mrb[0].mxu0
      %v429 = vadd.f32 %v371, %v428
      %v430 = vpop.f32.mrb[0].mxu0
      %431 = vdwg.mxu0
      %v432 = vmul.f32 %v418, 0.5
      %v433 = vmul.f32 %v421, 0.5
      %v434 = vmul.f32 %v426, 0.5
      %v435 = vmul.f32 %v429, 0.5
      %v436 = vmul.f32 %v418, 0.044715
      %v437 = vmul.f32 %v421, 0.044715
      %v438 = vmul.f32 %v426, 0.044715
      %v439 = vmul.f32 %v429, 0.044715
      %v440 = vmul.f32 %v436, %v418
      %v441 = vmul.f32 %v437, %v421
      %v442 = vmul.f32 %v438, %v426
      %v443 = vmul.f32 %v439, %v429
      %v444 = vmul.f32 %v440, %v418
      %v445 = vmul.f32 %v441, %v421
      %v446 = vmul.f32 %v442, %v426
      %v447 = vmul.f32 %v443, %v429
      %v448 = vadd.f32 %v418, %v444
      %v449 = vadd.f32 %v421, %v445
      %v450 = vadd.f32 %v426, %v446
      %v451 = vadd.f32 %v429, %v447
      %v452 = vmul.f32 %v448, 0.7978846
      %v453 = vmul.f32 %v449, 0.7978846
      %v454 = vmul.f32 %v450, 0.7978846
      %v455 = vmul.f32 %v451, 0.7978846
      %v456 = vtanh.pop %v452
      %v457 = vtanh.pop %v453
      %v458 = vtanh.pop %v454
      %v459 = vtanh.pop %v455
      %v460 = vadd.f32 %v456, 1.0
      %v461 = vadd.f32 %v457, 1.0
      %v462 = vadd.f32 %v458, 1.0
      %v463 = vadd.f32 %v459, 1.0
      %v464 = vmul.f32 %v432, %v460
      %v465 = vmul.f32 %v433, %v461
      %v466 = vmul.f32 %v434, %v462
      %v467 = vmul.f32 %v435, %v463
      %v468 = vpack.c.bf16 %v465, %v464
      %v469 = vpack.c.bf16 %v467, %v466
      %v470 = vld [vmem:[%s5] sm:$0xf]
      %v471 = vld [vmem:[%s5 + $0x4] sm:$0xf]
      %v472 = vld [vmem:[%s6] sm:$0x1]
      %v474 = vlaneseq
      %v475 = vshrl.u32 %v474, 7
      %v476 = vsub.s32 0, %v475
      %v477 = vrot.slane %v472, %v476
      %v481 = vunpack.c.l.b16 %v470
      %v482 = vunpack.c.l.b16 %v471
      %v483 = vpack.c.b16 %v482, %v481
      %vm485 = vcmask 130048
      %v487 = vsel %vm485, %v468, 0
      %v490 = vsel %vm485, %v469, 0
      %492 = vmatprep.subr.bf16.mxu0 0
      %493 = vmatpush1.bf16.msra.mxu0 %v483
      %494 = vmatprep.subr.bf16.mxu0 0
      %495 = vmatpush1.bf16.msra.mxu0 0
      %496 = vmatprep.subr.bf16.mxu0 0
      %497 = vmatpush1.bf16.msra.mxu0 0
      %498 = vmatprep.subr.bf16.mxu0 0
      %499 = vmatpush1.bf16.msra.mxu0 0
      %500 = vmatprep.subr.bf16.mxu0 0
      %501 = vmatpush1.bf16.msra.mxu0 0
      %502 = vmatprep.subr.bf16.mxu0 0
      %503 = vmatpush1.bf16.msra.mxu0 0
      %504 = vmatprep.subr.bf16.mxu0 0
      %505 = vmatpush1.bf16.msra.mxu0 0
      %506 = vmatprep.subr.bf16.mxu0 0
      %507 = vmatpush1.bf16.msra.mxu0 0
      %508 = vmatprep.subr.bf16.mxu0 0
      %509 = vmatpush1.bf16.msra.mxu0 0
      %510 = vmatprep.subr.bf16.mxu0 0
      %511 = vmatpush1.bf16.msra.mxu0 0
      %512 = vmatprep.subr.bf16.mxu0 0
      %513 = vmatpush1.bf16.msra.mxu0 0
      %514 = vmatprep.subr.bf16.mxu0 0
      %515 = vmatpush1.bf16.msra.mxu0 0
      %516 = vmatprep.subr.bf16.mxu0 0
      %517 = vmatpush1.bf16.msra.mxu0 0
      %518 = vmatprep.subr.bf16.mxu0 0
      %519 = vmatpush1.bf16.msra.mxu0 0
      %520 = vmatprep.subr.bf16.mxu0 0
      %521 = vmatpush1.bf16.msra.mxu0 0
      %522 = vmatprep.subr.bf16.mxu0 0
      %523 = vmatpush1.bf16.msra.mxu0 0
      %524 = vmatprep.mubr.bf16.mxu0 0
      %525 = vmatmul.mubr.bf16.gmra.mrb[0].mxu0 %v487
      %v526 = vpop.f32.mrb[0].mxu0
      %v527 = vadd.f32 %v477, %v526
      %v528 = vpop.f32.mrb[0].mxu0
      %v529 = vpop.f32.mrb[0].mxu0
      %v530 = vadd.f32 %v477, %v529
      %v531 = vpop.f32.mrb[0].mxu0
      %532 = vmatprep.mubr.bf16.mxu0 0
      %533 = vmatmul.mubr.bf16.gmra.mrb[0].mxu0 %v490
      %v534 = vpop.f32.mrb[0].mxu0
      %v535 = vadd.f32 %v477, %v534
      %v536 = vpop.f32.mrb[0].mxu0
      %v537 = vpop.f32.mrb[0].mxu0
      %v538 = vadd.f32 %v477, %v537
      %v539 = vpop.f32.mrb[0].mxu0
      %540 = vdwg.mxu0
      %v541 = vadd.f32 %v527, %v283
      %v542 = vadd.f32 %v530, %v284
      %v543 = vadd.f32 %v535, %v285
      %v544 = vadd.f32 %v538, %v286
      %545 = vst.msk [vmem:[%s280] sm:$0xff] %vm287, %v541
      %546 = vst.msk [vmem:[%s280 + $0x8] sm:$0xff] %vm287, %v542
      %547 = vst.msk [vmem:[%s280 + $0x10] sm:$0xff] %vm287, %v543
      %548 = vst.msk [vmem:[%s280 + $0x18] sm:$0xff] %vm287, %v544
      %s549 = smul.u32 4, %s18
      %p550 = scmp.lt.s32.totalorder %s549, 7
      %s551 = scalar_select %p550, %s549, 7
      %s552 = smul.addr %s551, 8
      %s553 = scalar_lea.vmem %s7, %s552
      // Predicated region
      $region49: #{a_call__.10} parent=47 // pred_check
        %p554 = pneg %p188
      $region50: #{a_call__.10} parent=47 // pred_check_branch
        %556 = sbr.rel (%p554) target = $region52
      $region51: #{a_call__.10} parent=47 // pred_region
        %s557 = smul.u32 4, %s18
      $region52: #{a_call__.10} parent=47 // pred_fallthru
        _
    $region48: #{a_call__.10} parent=5 // pred_fallthru
      _
    %p558 = scmp.le.s32.totalorder 2, %s13
    // Predicated region
    $region53: #{a_call__.10} parent=5 // pred_check
      %p559 = pneg %p558
    $region54: #{a_call__.10} parent=5 // pred_check_branch
      %561 = sbr.rel (%p559) target = $region56
    $region55: #{a_call__.10} parent=5 // pred_region
      %s562 = ssub.s32 %s13, 2
      // Predicated region
      $region57: #{a_call__.10} parent=55 // pred_check
        %p563 = pneg %p194
      $region58: #{a_call__.10} parent=55 // pred_check_branch
        %565 = sbr.rel (%p563) target = $region60
      $region59: #{a_call__.10} parent=55 // pred_region
        %s566 = smul.u32 4, %s19
        %p567 = scmp.lt.s32.totalorder %s566, 7
        %s568 = scalar_select %p567, %s566, 7
        %s569 = smul.addr %s568, 8
        %s570 = scalar_lea.vmem %s7, %s569
      $region60: #{a_call__.10} parent=55 // pred_fallthru
        _
    $region56: #{a_call__.10} parent=5 // pred_fallthru
      _
  $region6: #{a_call__.10} parent=0 // loop_footer
    %s17 = sadd.s32 1, %s13
  $region7: #{a_call__.10} parent=0 // loop_footer_branch
    %12 = sbr.rel target = $region3
  $region8: #{a_call__.10} parent=0 // loop_exit
    _

// kernel: a_call__.12
$region0: #{a_call__.12}
  #allocation0 [shape = 'u32[]', space=smem, size = 0x4, offset = 0x4, fixed_abs, tag = 'smem constant byte address 0x4 - core index']
  #allocation1 [shape = 'u32[144,128]{1,0:T(1,128)}', space=vmem, size = 0x12000, scoped, tag = 'internal scratch']
  %s0 = inlined_call_operand.vmem [shape: f32[32,8], index: 0, kind: input, shape index: {}]
  %s1 = inlined_call_operand.vmem [shape: bf16[8,16], index: 1, kind: input, shape index: {}]
  %s2 = inlined_call_operand.vmem [shape: f32[1,16], index: 2, kind: input, shape index: {}]
  %s3 = inlined_call_operand.vmem [shape: f32[1,16], index: 3, kind: input, shape index: {}]
  %s4 = inlined_call_operand.vmem [shape: f32[1,16], index: 4, kind: input, shape index: {}]
  %s5 = inlined_call_operand.vmem [shape: bf16[16,32], index: 5, kind: input, shape index: {}]
  %s6 = inlined_call_operand.vmem [shape: f32[1,32], index: 6, kind: input, shape index: {}]
  %s7 = inlined_call_operand.vmem [shape: bf16[32,16], index: 7, kind: input, shape index: {}]
  %s8 = inlined_call_operand.vmem [shape: f32[1,16], index: 8, kind: input, shape index: {}]
  %s9 = inlined_call_operand.vmem [shape: f32[32,16], index: 9, kind: output, shape index: {}]
  %s10 = sld [smem:[#allocation0]]
  $region69: #{a_call__.12} parent=0
    _
  %s12 = ssub.s32 1, %s10
  %s13 = scalar_select 0, %s12, %s10
  loop: start=0, step=1, limit=4
  $region2: #{a_call__.12} parent=0 // loop_pre_header
    _
  $region3: #{a_call__.12} parent=0 // loop_header
    %s15 = sphi 0, %s19
    %p16 = scmp.ge.s32.totalorder %s15, 4
    %s25 = sphi 0, %s27
    %s28 = sphi 0, %s25
    %s29 = sphi 0, %s28
    %s45 = sphi 0, %s29
    %s49 = sphi 0, %s49
    %s51 = sphi 0, %s49
    %s52 = sphi 0, %s51
    %s66 = sphi 0, %s52
    %s70 = sphi 0, %s70
    %s72 = sphi 0, %s70
    %s73 = sphi 0, %s72
    %s87 = sphi 0, %s73
    %s91 = sphi 0, %s91
    %s93 = sphi 0, %s91
    %s94 = sphi 0, %s93
    %s108 = sphi 0, %s94
    %s112 = sphi 0, %s112
    %s114 = sphi 0, %s112
    %s115 = sphi 0, %s114
    %s129 = sphi 0, %s115
    %s133 = sphi 0, %s133
    %s135 = sphi 0, %s133
    %s136 = sphi 0, %s135
    %s150 = sphi 0, %s136
    %s154 = sphi 0, %s154
    %s156 = sphi 0, %s154
    %s157 = sphi 0, %s156
    %s171 = sphi 0, %s157
    %s175 = sphi 0, %s175
    %s177 = sphi 0, %s175
    %s178 = sphi 0, %s177
    %s192 = sphi 0, %s178
    %s196 = sphi 0, %s196
    %s198 = sphi 0, %s196
    %s199 = sphi 0, %s198
    %s213 = sphi 0, %s199
    %s219 = sphi 0, %s221
    %s222 = sphi 0, %s219
    %s223 = sphi 0, %s222
    %s239 = sphi 0, %s223
  $region4: #{a_call__.12} parent=0 // loop_header_branch
    %18 = sbr.rel (%p16) target = $region8
  $region5: #{a_call__.12} parent=0 // loop_body
    %s20 = ssub.s32 %s15, 1
    %s21 = ssub.s32 %s15, 2
    %s22 = sadd.s32 %s15, 1
    %s23 = ssub.s32 %s15, %s22
    %p24 = scmp.eq.s32.totalorder %s23, 0
    %s26 = sadd.s32 %s25, 1
    %s27 = scalar_select %p24, %s25, %s26
    %p30 = pneg %p24
    %p31 = scmp.eq.s32.totalorder %s15, 1
    %p32 = por %p30, %p31
    %p33 = scmp.ne.s32.totalorder %s25, %s28
    %p34 = scmp.eq.s32.totalorder %s15, 0
    %p35 = por %p33, %p34
    %p36 = scmp.ne.s32.totalorder %s25, %s28
    %p37 = scmp.eq.s32.totalorder %s20, 1
    %p38 = por %p36, %p37
    %p39 = scmp.ne.s32.totalorder %s28, %s29
    %p40 = scmp.eq.s32.totalorder %s20, 0
    %p41 = por %p39, %p40
    %p42 = scmp.ne.s32.totalorder %s28, %s29
    %p43 = scmp.eq.s32.totalorder %s21, 1
    %p44 = por %p42, %p43
    %p46 = scmp.ne.s32.totalorder %s29, %s45
    %p47 = scmp.eq.s32.totalorder %s21, 0
    %p48 = por %p46, %p47
    %s50 = sadd.s32 %s49, 1
    %p53 = scmp.eq.s32.totalorder %s15, 1
    %p54 = scmp.ne.s32.totalorder %s49, %s51
    %p55 = scmp.eq.s32.totalorder %s15, 0
    %p56 = por %p54, %p55
    %p57 = scmp.ne.s32.totalorder %s49, %s51
    %p58 = scmp.eq.s32.totalorder %s20, 1
    %p59 = por %p57, %p58
    %p60 = scmp.ne.s32.totalorder %s51, %s52
    %p61 = scmp.eq.s32.totalorder %s20, 0
    %p62 = por %p60, %p61
    %p63 = scmp.ne.s32.totalorder %s51, %s52
    %p64 = scmp.eq.s32.totalorder %s21, 1
    %p65 = por %p63, %p64
    %p67 = scmp.ne.s32.totalorder %s52, %s66
    %p68 = scmp.eq.s32.totalorder %s21, 0
    %p69 = por %p67, %p68
    %s71 = sadd.s32 %s70, 1
    %p74 = scmp.eq.s32.totalorder %s15, 1
    %p75 = scmp.ne.s32.totalorder %s70, %s72
    %p76 = scmp.eq.s32.totalorder %s15, 0
    %p77 = por %p75, %p76
    %p78 = scmp.ne.s32.totalorder %s70, %s72
    %p79 = scmp.eq.s32.totalorder %s20, 1
    %p80 = por %p78, %p79
    %p81 = scmp.ne.s32.totalorder %s72, %s73
    %p82 = scmp.eq.s32.totalorder %s20, 0
    %p83 = por %p81, %p82
    %p84 = scmp.ne.s32.totalorder %s72, %s73
    %p85 = scmp.eq.s32.totalorder %s21, 1
    %p86 = por %p84, %p85
    %p88 = scmp.ne.s32.totalorder %s73, %s87
    %p89 = scmp.eq.s32.totalorder %s21, 0
    %p90 = por %p88, %p89
    %s92 = sadd.s32 %s91, 1
    %p95 = scmp.eq.s32.totalorder %s15, 1
    %p96 = scmp.ne.s32.totalorder %s91, %s93
    %p97 = scmp.eq.s32.totalorder %s15, 0
    %p98 = por %p96, %p97
    %p99 = scmp.ne.s32.totalorder %s91, %s93
    %p100 = scmp.eq.s32.totalorder %s20, 1
    %p101 = por %p99, %p100
    %p102 = scmp.ne.s32.totalorder %s93, %s94
    %p103 = scmp.eq.s32.totalorder %s20, 0
    %p104 = por %p102, %p103
    %p105 = scmp.ne.s32.totalorder %s93, %s94
    %p106 = scmp.eq.s32.totalorder %s21, 1
    %p107 = por %p105, %p106
    %p109 = scmp.ne.s32.totalorder %s94, %s108
    %p110 = scmp.eq.s32.totalorder %s21, 0
    %p111 = por %p109, %p110
    %s113 = sadd.s32 %s112, 1
    %p116 = scmp.eq.s32.totalorder %s15, 1
    %p117 = scmp.ne.s32.totalorder %s112, %s114
    %p118 = scmp.eq.s32.totalorder %s15, 0
    %p119 = por %p117, %p118
    %p120 = scmp.ne.s32.totalorder %s112, %s114
    %p121 = scmp.eq.s32.totalorder %s20, 1
    %p122 = por %p120, %p121
    %p123 = scmp.ne.s32.totalorder %s114, %s115
    %p124 = scmp.eq.s32.totalorder %s20, 0
    %p125 = por %p123, %p124
    %p126 = scmp.ne.s32.totalorder %s114, %s115
    %p127 = scmp.eq.s32.totalorder %s21, 1
    %p128 = por %p126, %p127
    %p130 = scmp.ne.s32.totalorder %s115, %s129
    %p131 = scmp.eq.s32.totalorder %s21, 0
    %p132 = por %p130, %p131
    %s134 = sadd.s32 %s133, 1
    %p137 = scmp.eq.s32.totalorder %s15, 1
    %p138 = scmp.ne.s32.totalorder %s133, %s135
    %p139 = scmp.eq.s32.totalorder %s15, 0
    %p140 = por %p138, %p139
    %p141 = scmp.ne.s32.totalorder %s133, %s135
    %p142 = scmp.eq.s32.totalorder %s20, 1
    %p143 = por %p141, %p142
    %p144 = scmp.ne.s32.totalorder %s135, %s136
    %p145 = scmp.eq.s32.totalorder %s20, 0
    %p146 = por %p144, %p145
    %p147 = scmp.ne.s32.totalorder %s135, %s136
    %p148 = scmp.eq.s32.totalorder %s21, 1
    %p149 = por %p147, %p148
    %p151 = scmp.ne.s32.totalorder %s136, %s150
    %p152 = scmp.eq.s32.totalorder %s21, 0
    %p153 = por %p151, %p152
    %s155 = sadd.s32 %s154, 1
    %p158 = scmp.eq.s32.totalorder %s15, 1
    %p159 = scmp.ne.s32.totalorder %s154, %s156
    %p160 = scmp.eq.s32.totalorder %s15, 0
    %p161 = por %p159, %p160
    %p162 = scmp.ne.s32.totalorder %s154, %s156
    %p163 = scmp.eq.s32.totalorder %s20, 1
    %p164 = por %p162, %p163
    %p165 = scmp.ne.s32.totalorder %s156, %s157
    %p166 = scmp.eq.s32.totalorder %s20, 0
    %p167 = por %p165, %p166
    %p168 = scmp.ne.s32.totalorder %s156, %s157
    %p169 = scmp.eq.s32.totalorder %s21, 1
    %p170 = por %p168, %p169
    %p172 = scmp.ne.s32.totalorder %s157, %s171
    %p173 = scmp.eq.s32.totalorder %s21, 0
    %p174 = por %p172, %p173
    %s176 = sadd.s32 %s175, 1
    %p179 = scmp.eq.s32.totalorder %s15, 1
    %p180 = scmp.ne.s32.totalorder %s175, %s177
    %p181 = scmp.eq.s32.totalorder %s15, 0
    %p182 = por %p180, %p181
    %p183 = scmp.ne.s32.totalorder %s175, %s177
    %p184 = scmp.eq.s32.totalorder %s20, 1
    %p185 = por %p183, %p184
    %p186 = scmp.ne.s32.totalorder %s177, %s178
    %p187 = scmp.eq.s32.totalorder %s20, 0
    %p188 = por %p186, %p187
    %p189 = scmp.ne.s32.totalorder %s177, %s178
    %p190 = scmp.eq.s32.totalorder %s21, 1
    %p191 = por %p189, %p190
    %p193 = scmp.ne.s32.totalorder %s178, %s192
    %p194 = scmp.eq.s32.totalorder %s21, 0
    %p195 = por %p193, %p194
    %s197 = sadd.s32 %s196, 1
    %p200 = scmp.eq.s32.totalorder %s15, 1
    %p201 = scmp.ne.s32.totalorder %s196, %s198
    %p202 = scmp.eq.s32.totalorder %s15, 0
    %p203 = por %p201, %p202
    %p204 = scmp.ne.s32.totalorder %s196, %s198
    %p205 = scmp.eq.s32.totalorder %s20, 1
    %p206 = por %p204, %p205
    %p207 = scmp.ne.s32.totalorder %s198, %s199
    %p208 = scmp.eq.s32.totalorder %s20, 0
    %p209 = por %p207, %p208
    %p210 = scmp.ne.s32.totalorder %s198, %s199
    %p211 = scmp.eq.s32.totalorder %s21, 1
    %p212 = por %p210, %p211
    %p214 = scmp.ne.s32.totalorder %s199, %s213
    %p215 = scmp.eq.s32.totalorder %s21, 0
    %p216 = por %p214, %p215
    %s217 = ssub.s32 %s15, %s22
    %p218 = scmp.eq.s32.totalorder %s217, 0
    %s220 = sadd.s32 %s219, 1
    %s221 = scalar_select %p218, %s219, %s220
    %p224 = pneg %p218
    %p225 = scmp.eq.s32.totalorder %s15, 1
    %p226 = por %p224, %p225
    %p227 = scmp.ne.s32.totalorder %s219, %s222
    %p228 = scmp.eq.s32.totalorder %s15, 0
    %p229 = por %p227, %p228
    %p230 = scmp.ne.s32.totalorder %s219, %s222
    %p231 = scmp.eq.s32.totalorder %s20, 1
    %p232 = por %p230, %p231
    %p233 = scmp.ne.s32.totalorder %s222, %s223
    %p234 = scmp.eq.s32.totalorder %s20, 0
    %p235 = por %p233, %p234
    %p236 = scmp.ne.s32.totalorder %s222, %s223
    %p237 = scmp.eq.s32.totalorder %s21, 1
    %p238 = por %p236, %p237
    %p240 = scmp.ne.s32.totalorder %s223, %s239
    %p241 = scmp.eq.s32.totalorder %s21, 0
    %p242 = por %p240, %p241
    %p243 = scmp.le.s32.totalorder 1, %s15
    %p244 = scmp.lt.s32.totalorder %s15, 3
    %p245 = pnand %p243, %p244
    %p246 = pneg %p245
    // Predicated region
    $region9: #{a_call__.12} parent=5 // pred_check
      _
    $region10: #{a_call__.12} parent=5 // pred_check_branch
      %248 = sbr.rel (%p245) target = $region12
    $region11: #{a_call__.12} parent=5 // pred_region
      %s249 = ssub.s32 %s15, 1
      // Predicated region
      $region13: #{a_call__.12} parent=11 // pred_check
        %p250 = pneg %p62
      $region14: #{a_call__.12} parent=11 // pred_check_branch
        %252 = sbr.rel (%p250) target = $region16
      $region15: #{a_call__.12} parent=11 // pred_region
        _
      $region16: #{a_call__.12} parent=11 // pred_fallthru
        _
      // Predicated region
      $region17: #{a_call__.12} parent=11 // pred_check
        %p253 = pneg %p83
      $region18: #{a_call__.12} parent=11 // pred_check_branch
        %255 = sbr.rel (%p253) target = $region20
      $region19: #{a_call__.12} parent=11 // pred_region
        _
      $region20: #{a_call__.12} parent=11 // pred_fallthru
        _
      // Predicated region
      $region21: #{a_call__.12} parent=11 // pred_check
        %p256 = pneg %p104
      $region22: #{a_call__.12} parent=11 // pred_check_branch
        %258 = sbr.rel (%p256) target = $region24
      $region23: #{a_call__.12} parent=11 // pred_region
        _
      $region24: #{a_call__.12} parent=11 // pred_fallthru
        _
      // Predicated region
      $region25: #{a_call__.12} parent=11 // pred_check
        %p259 = pneg %p125
      $region26: #{a_call__.12} parent=11 // pred_check_branch
        %261 = sbr.rel (%p259) target = $region28
      $region27: #{a_call__.12} parent=11 // pred_region
        _
      $region28: #{a_call__.12} parent=11 // pred_fallthru
        _
      // Predicated region
      $region29: #{a_call__.12} parent=11 // pred_check
        %p262 = pneg %p146
      $region30: #{a_call__.12} parent=11 // pred_check_branch
        %264 = sbr.rel (%p262) target = $region32
      $region31: #{a_call__.12} parent=11 // pred_region
        _
      $region32: #{a_call__.12} parent=11 // pred_fallthru
        _
      // Predicated region
      $region33: #{a_call__.12} parent=11 // pred_check
        %p265 = pneg %p167
      $region34: #{a_call__.12} parent=11 // pred_check_branch
        %267 = sbr.rel (%p265) target = $region36
      $region35: #{a_call__.12} parent=11 // pred_region
        _
      $region36: #{a_call__.12} parent=11 // pred_fallthru
        _
      // Predicated region
      $region37: #{a_call__.12} parent=11 // pred_check
        %p268 = pneg %p188
      $region38: #{a_call__.12} parent=11 // pred_check_branch
        %270 = sbr.rel (%p268) target = $region40
      $region39: #{a_call__.12} parent=11 // pred_region
        _
      $region40: #{a_call__.12} parent=11 // pred_fallthru
        _
      // Predicated region
      $region41: #{a_call__.12} parent=11 // pred_check
        %p271 = pneg %p209
      $region42: #{a_call__.12} parent=11 // pred_check_branch
        %273 = sbr.rel (%p271) target = $region44
      $region43: #{a_call__.12} parent=11 // pred_region
        _
      $region44: #{a_call__.12} parent=11 // pred_fallthru
        _
    $region12: #{a_call__.12} parent=5 // pred_fallthru
      _
    %p274 = scmp.lt.s32.totalorder %s15, 2
    // Predicated region
    $region45: #{a_call__.12} parent=5 // pred_check
      %p275 = pneg %p274
    $region46: #{a_call__.12} parent=5 // pred_check_branch
      %277 = sbr.rel (%p275) target = $region48
    $region47: #{a_call__.12} parent=5 // pred_region
      // Predicated region
      $region49: #{a_call__.12} parent=47 // pred_check
        %p278 = pneg %p35
      $region50: #{a_call__.12} parent=47 // pred_check_branch
        %280 = sbr.rel (%p278) target = $region52
      $region51: #{a_call__.12} parent=47 // pred_region
        %s281 = smul.u32 2, %s15
        %p282 = scmp.lt.s32.totalorder %s281, 3
        %s283 = scalar_select %p282, %s281, 3
        %s284 = smul.addr %s283, 8
        %s285 = scalar_lea.vmem %s0, %s284
        %s286 = smul.u32 2, %s15
      $region52: #{a_call__.12} parent=47 // pred_fallthru
        _
    $region48: #{a_call__.12} parent=5 // pred_fallthru
      _
    %p287 = scmp.le.s32.totalorder 1, %s15
    %p288 = scmp.lt.s32.totalorder %s15, 3
    %p289 = pnand %p287, %p288
    %p290 = pneg %p289
    // Predicated region
    $region53: #{a_call__.12} parent=5 // pred_check
      _
    $region54: #{a_call__.12} parent=5 // pred_check_branch
      %292 = sbr.rel (%p289) target = $region56
    $region55: #{a_call__.12} parent=5 // pred_region
      %s293 = ssub.s32 %s15, 1
      %s294 = smul.u32 2, %s20
      %p295 = scmp.lt.s32.totalorder %s294, 3
      %s296 = scalar_select %p295, %s294, 3
      %s297 = smul.addr %s296, 8
      %s298 = scalar_lea.vmem %s0, %s297
      %p299 = pneg %p41
      %p300 = pneg %p38
      %p301 = pneg %p62
      %p302 = pneg %p59
      %p303 = pneg %p83
      %p304 = pneg %p80
      %p305 = pneg %p104
      %p306 = pneg %p101
      %p307 = pneg %p125
      %p308 = pneg %p122
      %p309 = pneg %p146
      %p310 = pneg %p143
      %p311 = pneg %p167
      %p312 = pneg %p164
      %p313 = pneg %p188
      %p314 = pneg %p185
      %p315 = pneg %p209
      %p316 = pneg %p206
      %p317 = pneg %p235
      %p318 = pneg %p232
      %s319 = smul.u32 2, %s20
      %p320 = scmp.lt.s32.totalorder %s319, 3
      %s321 = scalar_select %p320, %s319, 3
      %s322 = smul.addr %s321, 8
      %s323 = scalar_lea.vmem %s9, %s322
      %s324 = smul.u32 2, %s20
      %p325 = scmp.lt.s32.totalorder %s324, 3
      %s326 = scalar_select %p325, %s324, 3
      %s327 = smul.addr %s326, 8
      %s328 = scalar_lea.vmem %s0, %s327
      %s329 = smul.u32 2, %s20
      %s330 = smul.u32 2, %s20
      %p331 = scmp.lt.s32.totalorder %s330, 3
      %s332 = scalar_select %p331, %s330, 3
      %s333 = smul.addr %s332, 8
      %s334 = scalar_lea.vmem %s9, %s333
      %s335 = smul.u32 2, %s20
      %v337 = vld [vmem:[%s328] sm:$0xff]
      %v338 = vld [vmem:[%s328 + $0x8] sm:$0xff]
      %v339 = vpack.c.bf16 %v338, %v337
      %v340 = vld [vmem:[%s1] sm:$0xf]
      %v341 = vld [vmem:[%s2] sm:$0x1]
      %v343 = vlaneseq
      %v344 = vshrl.u32 %v343, 7
      %v345 = vsub.s32 0, %v344
      %v346 = vrot.slane %v341, %v345
      %vm348 = vcmask 64512
      %v350 = vsel %vm348, %v339, 0
      %vm352 = vcmask 1043456
      %v354 = vsel %vm352, %v340, 0
      %356 = vmatprep.subr.bf16.mxu0 0
      %357 = vmatpush1.bf16.msra.mxu0 %v354
      %358 = vmatprep.subr.bf16.mxu0 0
      %359 = vmatpush1.bf16.msra.mxu0 0
      %360 = vmatprep.subr.bf16.mxu0 0
      %361 = vmatpush1.bf16.msra.mxu0 0
      %362 = vmatprep.subr.bf16.mxu0 0
      %363 = vmatpush1.bf16.msra.mxu0 0
      %364 = vmatprep.subr.bf16.mxu0 0
      %365 = vmatpush1.bf16.msra.mxu0 0
      %366 = vmatprep.subr.bf16.mxu0 0
      %367 = vmatpush1.bf16.msra.mxu0 0
      %368 = vmatprep.subr.bf16.mxu0 0
      %369 = vmatpush1.bf16.msra.mxu0 0
      %370 = vmatprep.subr.bf16.mxu0 0
      %371 = vmatpush1.bf16.msra.mxu0 0
      %372 = vmatprep.subr.bf16.mxu0 0
      %373 = vmatpush1.bf16.msra.mxu0 0
      %374 = vmatprep.subr.bf16.mxu0 0
      %375 = vmatpush1.bf16.msra.mxu0 0
      %376 = vmatprep.subr.bf16.mxu0 0
      %377 = vmatpush1.bf16.msra.mxu0 0
      %378 = vmatprep.subr.bf16.mxu0 0
      %379 = vmatpush1.bf16.msra.mxu0 0
      %380 = vmatprep.subr.bf16.mxu0 0
      %381 = vmatpush1.bf16.msra.mxu0 0
      %382 = vmatprep.subr.bf16.mxu0 0
      %383 = vmatpush1.bf16.msra.mxu0 0
      %384 = vmatprep.subr.bf16.mxu0 0
      %385 = vmatpush1.bf16.msra.mxu0 0
      %386 = vmatprep.subr.bf16.mxu0 0
      %387 = vmatpush1.bf16.msra.mxu0 0
      %388 = vmatprep.mubr.bf16.mxu0 0
      %389 = vmatmul.mubr.bf16.gmra.mrb[0].mxu0 %v350
      %v390 = vpop.f32.mrb[0].mxu0
      %v391 = vadd.f32 %v346, %v390
      %v392 = vpop.f32.mrb[0].mxu0
      %v393 = vpop.f32.mrb[0].mxu0
      %v394 = vadd.f32 %v346, %v393
      %v395 = vpop.f32.mrb[0].mxu0
      %396 = vdwg.mxu0
      %vm397 = vcmask 130048
      %v398 = vsel %vm397, %v391, 0.0
      %399 = vadd.xlane.f32.xlu0 %v398
      %v400 = vpop.xlane.xlu0 %399
      %v401 = vsel %vm397, %v394, 0.0
      %402 = vadd.xlane.f32.xlu0 %v401
      %v403 = vpop.xlane.xlu0 %402
      %v404 = vrcp.pop 16.0
      %v405 = vmul.f32 %v400, %v404
      %v406 = vmul.f32 %v403, %v404
      %v407 = vsub.f32 %v391, %v405
      %v408 = vsub.f32 %v394, %v406
      %v409 = vmul.f32 %v407, %v407
      %v410 = vmul.f32 %v408, %v408
      %v411 = vsel %vm397, %v409, 0.0
      %412 = vadd.xlane.f32.xlu0 %v411
      %v413 = vpop.xlane.xlu0 %412
      %v414 = vsel %vm397, %v410, 0.0
      %415 = vadd.xlane.f32.xlu0 %v414
      %v416 = vpop.xlane.xlu0 %415
      %v417 = vmul.f32 %v413, %v404
      %v418 = vmul.f32 %v416, %v404
      %v419 = vadd.f32 %v417, 1e-05
      %v420 = vadd.f32 %v418, 1e-05
      %v421 = vrsqrt.pop %v419
      %v422 = vrsqrt.pop %v420
      %v423 = vmul.f32 %v407, %v421
      %v424 = vmul.f32 %v408, %v422
      %v425 = vld [vmem:[%s3] sm:$0x1]
      %v427 = vlaneseq
      %v428 = vshrl.u32 %v427, 7
      %v429 = vsub.s32 0, %v428
      %v430 = vrot.slane %v425, %v429
      %v432 = vmul.f32 %v423, %v430
      %v433 = vmul.f32 %v424, %v430
      %v434 = vld [vmem:[%s4] sm:$0x1]
      %v436 = vlaneseq
      %v437 = vshrl.u32 %v436, 7
      %v438 = vsub.s32 0, %v437
      %v439 = vrot.slane %v434, %v438
      %v441 = vadd.f32 %v432, %v439
      %v442 = vadd.f32 %v433, %v439
      %v443 = vpack.c.bf16 %v442, %v441
      %v444 = vld [vmem:[%s5] sm:$0xf]
      %v445 = vld [vmem:[%s5 + $0x4] sm:$0xf]
      %v446 = vld [vmem:[%s6] sm:$0x1]
      %v448 = vlaneseq
      %v449 = vshrl.u32 %v448, 7
      %v450 = vsub.s32 0, %v449
      %v451 = vrot.slane %v446, %v450
      %v455 = vunpack.c.l.b16 %v444
      %v456 = vunpack.c.l.b16 %v445
      %v457 = vpack.c.b16 %v456, %v455
      %v460 = vsel %vm397, %v443, 0
      %462 = vmatprep.subr.bf16.mxu0 0
      %463 = vmatpush1.bf16.msra.mxu0 %v457
      %464 = vmatprep.subr.bf16.mxu0 0
      %465 = vmatpush1.bf16.msra.mxu0 0
      %466 = vmatprep.subr.bf16.mxu0 0
      %467 = vmatpush1.bf16.msra.mxu0 0
      %468 = vmatprep.subr.bf16.mxu0 0
      %469 = vmatpush1.bf16.msra.mxu0 0
      %470 = vmatprep.subr.bf16.mxu0 0
      %471 = vmatpush1.bf16.msra.mxu0 0
      %472 = vmatprep.subr.bf16.mxu0 0
      %473 = vmatpush1.bf16.msra.mxu0 0
      %474 = vmatprep.subr.bf16.mxu0 0
      %475 = vmatpush1.bf16.msra.mxu0 0
      %476 = vmatprep.subr.bf16.mxu0 0
      %477 = vmatpush1.bf16.msra.mxu0 0
      %478 = vmatprep.subr.bf16.mxu0 0
      %479 = vmatpush1.bf16.msra.mxu0 0
      %480 = vmatprep.subr.bf16.mxu0 0
      %481 = vmatpush1.bf16.msra.mxu0 0
      %482 = vmatprep.subr.bf16.mxu0 0
      %483 = vmatpush1.bf16.msra.mxu0 0
      %484 = vmatprep.subr.bf16.mxu0 0
      %485 = vmatpush1.bf16.msra.mxu0 0
      %486 = vmatprep.subr.bf16.mxu0 0
      %487 = vmatpush1.bf16.msra.mxu0 0
      %488 = vmatprep.subr.bf16.mxu0 0
      %489 = vmatpush1.bf16.msra.mxu0 0
      %490 = vmatprep.subr.bf16.mxu0 0
      %491 = vmatpush1.bf16.msra.mxu0 0
      %492 = vmatprep.subr.bf16.mxu0 0
      %493 = vmatpush1.bf16.msra.mxu0 0
      %494 = vmatprep.mubr.bf16.mxu0 0
      %495 = vmatmul.mubr.bf16.gmra.mrb[0].mxu0 %v460
      %v496 = vpop.f32.mrb[0].mxu0
      %v497 = vadd.f32 %v451, %v496
      %v498 = vpop.f32.mrb[0].mxu0
      %v499 = vpop.f32.mrb[0].mxu0
      %v500 = vadd.f32 %v451, %v499
      %v501 = vpop.f32.mrb[0].mxu0
      %502 = vdwg.mxu0
      %v503 = vmul.f32 %v497, 0.5
      %v504 = vmul.f32 %v500, 0.5
      %v505 = vmul.f32 %v497, 0.044715
      %v506 = vmul.f32 %v500, 0.044715
      %v507 = vmul.f32 %v505, %v497
      %v508 = vmul.f32 %v506, %v500
      %v509 = vmul.f32 %v507, %v497
      %v510 = vmul.f32 %v508, %v500
      %v511 = vadd.f32 %v497, %v509
      %v512 = vadd.f32 %v500, %v510
      %v513 = vmul.f32 %v511, 0.7978846
      %v514 = vmul.f32 %v512, 0.7978846
      %v515 = vtanh.pop %v513
      %v516 = vtanh.pop %v514
      %v517 = vadd.f32 %v515, 1.0
      %v518 = vadd.f32 %v516, 1.0
      %v519 = vmul.f32 %v503, %v517
      %v520 = vmul.f32 %v504, %v518
      %v521 = vpack.c.bf16 %v520, %v519
      %v522 = vld [vmem:[%s7] sm:$0xf]
      %v523 = vld [vmem:[%s7 + $0x4] sm:$0xf]
      %v524 = vld [vmem:[%s7 + $0x8] sm:$0xf]
      %v525 = vld [vmem:[%s7 + $0xc] sm:$0xf]
      %v526 = vld [vmem:[%s8] sm:$0x1]
      %v528 = vlaneseq
      %v529 = vshrl.u32 %v528, 7
      %v530 = vsub.s32 0, %v529
      %v531 = vrot.slane %v526, %v530
      %v537 = vunpack.c.l.b16 %v522
      %v538 = vunpack.c.l.b16 %v523
      %v539 = vunpack.c.l.b16 %v524
      %v540 = vunpack.c.l.b16 %v525
      %v541 = vpack.c.b16 %v538, %v537
      %v542 = vpack.c.b16 %v540, %v539
      %vm545 = vcmask 261120
      %v547 = vsel %vm545, %v521, 0
      %549 = vmatprep.subr.bf16.mxu0 0
      %550 = vmatpush1.bf16.msra.mxu0 %v541
      %551 = vmatprep.subr.bf16.mxu0 0
      %552 = vmatpush1.bf16.msra.mxu0 %v542
      %553 = vmatprep.subr.bf16.mxu0 0
      %554 = vmatpush1.bf16.msra.mxu0 0
      %555 = vmatprep.subr.bf16.mxu0 0
      %556 = vmatpush1.bf16.msra.mxu0 0
      %557 = vmatprep.subr.bf16.mxu0 0
      %558 = vmatpush1.bf16.msra.mxu0 0
      %559 = vmatprep.subr.bf16.mxu0 0
      %560 = vmatpush1.bf16.msra.mxu0 0
      %561 = vmatprep.subr.bf16.mxu0 0
      %562 = vmatpush1.bf16.msra.mxu0 0
      %563 = vmatprep.subr.bf16.mxu0 0
      %564 = vmatpush1.bf16.msra.mxu0 0
      %565 = vmatprep.subr.bf16.mxu0 0
      %566 = vmatpush1.bf16.msra.mxu0 0
      %567 = vmatprep.subr.bf16.mxu0 0
      %568 = vmatpush1.bf16.msra.mxu0 0
      %569 = vmatprep.subr.bf16.mxu0 0
      %570 = vmatpush1.bf16.msra.mxu0 0
      %571 = vmatprep.subr.bf16.mxu0 0
      %572 = vmatpush1.bf16.msra.mxu0 0
      %573 = vmatprep.subr.bf16.mxu0 0
      %574 = vmatpush1.bf16.msra.mxu0 0
      %575 = vmatprep.subr.bf16.mxu0 0
      %576 = vmatpush1.bf16.msra.mxu0 0
      %577 = vmatprep.subr.bf16.mxu0 0
      %578 = vmatpush1.bf16.msra.mxu0 0
      %579 = vmatprep.subr.bf16.mxu0 0
      %580 = vmatpush1.bf16.msra.mxu0 0
      %581 = vmatprep.mubr.bf16.mxu0 0
      %582 = vmatmul.mubr.bf16.gmra.mrb[0].mxu0 %v547
      %v583 = vpop.f32.mrb[0].mxu0
      %v584 = vadd.f32 %v531, %v583
      %v585 = vpop.f32.mrb[0].mxu0
      %v586 = vpop.f32.mrb[0].mxu0
      %v587 = vadd.f32 %v531, %v586
      %v588 = vpop.f32.mrb[0].mxu0
      %589 = vdwg.mxu0
      %v590 = vadd.f32 %v584, %v391
      %v591 = vadd.f32 %v587, %v394
      %592 = vst.msk [vmem:[%s334] sm:$0xff] %vm397, %v590
      %593 = vst.msk [vmem:[%s334 + $0x8] sm:$0xff] %vm397, %v591
      %s594 = smul.u32 2, %s20
      %p595 = scmp.lt.s32.totalorder %s594, 3
      %s596 = scalar_select %p595, %s594, 3
      %s597 = smul.addr %s596, 8
      %s598 = scalar_lea.vmem %s9, %s597
      // Predicated region
      $region57: #{a_call__.12} parent=55 // pred_check
        %p599 = pneg %p232
      $region58: #{a_call__.12} parent=55 // pred_check_branch
        %601 = sbr.rel (%p599) target = $region60
      $region59: #{a_call__.12} parent=55 // pred_region
        %s602 = smul.u32 2, %s20
      $region60: #{a_call__.12} parent=55 // pred_fallthru
        _
    $region56: #{a_call__.12} parent=5 // pred_fallthru
      _
    %p603 = scmp.le.s32.totalorder 2, %s15
    // Predicated region
    $region61: #{a_call__.12} parent=5 // pred_check
      %p604 = pneg %p603
    $region62: #{a_call__.12} parent=5 // pred_check_branch
      %606 = sbr.rel (%p604) target = $region64
    $region63: #{a_call__.12} parent=5 // pred_region
      %s607 = ssub.s32 %s15, 2
      // Predicated region
      $region65: #{a_call__.12} parent=63 // pred_check
        %p608 = pneg %p238
      $region66: #{a_call__.12} parent=63 // pred_check_branch
        %610 = sbr.rel (%p608) target = $region68
      $region67: #{a_call__.12} parent=63 // pred_region
        %s611 = smul.u32 2, %s21
        %p612 = scmp.lt.s32.totalorder %s611, 3
        %s613 = scalar_select %p612, %s611, 3
        %s614 = smul.addr %s613, 8
        %s615 = scalar_lea.vmem %s9, %s614
      $region68: #{a_call__.12} parent=63 // pred_fallthru
        _
    $region64: #{a_call__.12} parent=5 // pred_fallthru
      _
  $region6: #{a_call__.12} parent=0 // loop_footer
    %s19 = sadd.s32 1, %s15
  $region7: #{a_call__.12} parent=0 // loop_footer_branch
    %14 = sbr.rel target = $region3
  $region8: #{a_call__.12} parent=0 // loop_exit
    _

// kernel: a_call__.13
$region0: #{a_call__.13}
  #allocation0 [shape = 'u32[]', space=smem, size = 0x4, offset = 0x4, fixed_abs, tag = 'smem constant byte address 0x4 - core index']
  #allocation1 [shape = 'u32[144,128]{1,0:T(1,128)}', space=vmem, size = 0x12000, scoped, tag = 'internal scratch']
  %s0 = inlined_call_operand.vmem [shape: f32[128,4], index: 0, kind: input, shape index: {}]
  %s1 = inlined_call_operand.vmem [shape: f32[1,4], index: 1, kind: input, shape index: {}]
  %s2 = inlined_call_operand.vmem [shape: f32[1,4], index: 2, kind: input, shape index: {}]
  %s3 = inlined_call_operand.vmem [shape: bf16[4,8], index: 3, kind: input, shape index: {}]
  %s4 = inlined_call_operand.vmem [shape: f32[1,8], index: 4, kind: input, shape index: {}]
  %s5 = inlined_call_operand.vmem [shape: bf16[8,4], index: 5, kind: input, shape index: {}]
  %s6 = inlined_call_operand.vmem [shape: f32[1,4], index: 6, kind: input, shape index: {}]
  %s7 = inlined_call_operand.vmem [shape: f32[128,4], index: 7, kind: output, shape index: {}]
  %s8 = sld [smem:[#allocation0]]
  $region61: #{a_call__.13} parent=0
    _
  %s10 = ssub.s32 1, %s8
  %s11 = scalar_select 0, %s10, %s8
  loop: start=0, step=1, limit=4
  $region2: #{a_call__.13} parent=0 // loop_pre_header
    _
  $region3: #{a_call__.13} parent=0 // loop_header
    %s13 = sphi 0, %s17
    %p14 = scmp.ge.s32.totalorder %s13, 4
    %s23 = sphi 0, %s25
    %s26 = sphi 0, %s23
    %s27 = sphi 0, %s26
    %s43 = sphi 0, %s27
    %s47 = sphi 0, %s47
    %s49 = sphi 0, %s47
    %s50 = sphi 0, %s49
    %s64 = sphi 0, %s50
    %s68 = sphi 0, %s68
    %s70 = sphi 0, %s68
    %s71 = sphi 0, %s70
    %s85 = sphi 0, %s71
    %s89 = sphi 0, %s89
    %s91 = sphi 0, %s89
    %s92 = sphi 0, %s91
    %s106 = sphi 0, %s92
    %s110 = sphi 0, %s110
    %s112 = sphi 0, %s110
    %s113 = sphi 0, %s112
    %s127 = sphi 0, %s113
    %s131 = sphi 0, %s131
    %s133 = sphi 0, %s131
    %s134 = sphi 0, %s133
    %s148 = sphi 0, %s134
    %s152 = sphi 0, %s152
    %s154 = sphi 0, %s152
    %s155 = sphi 0, %s154
    %s169 = sphi 0, %s155
    %s175 = sphi 0, %s177
    %s178 = sphi 0, %s175
    %s179 = sphi 0, %s178
    %s195 = sphi 0, %s179
  $region4: #{a_call__.13} parent=0 // loop_header_branch
    %16 = sbr.rel (%p14) target = $region8
  $region5: #{a_call__.13} parent=0 // loop_body
    %s18 = ssub.s32 %s13, 1
    %s19 = ssub.s32 %s13, 2
    %s20 = sadd.s32 %s13, 1
    %s21 = ssub.s32 %s13, %s20
    %p22 = scmp.eq.s32.totalorder %s21, 0
    %s24 = sadd.s32 %s23, 1
    %s25 = scalar_select %p22, %s23, %s24
    %p28 = pneg %p22
    %p29 = scmp.eq.s32.totalorder %s13, 1
    %p30 = por %p28, %p29
    %p31 = scmp.ne.s32.totalorder %s23, %s26
    %p32 = scmp.eq.s32.totalorder %s13, 0
    %p33 = por %p31, %p32
    %p34 = scmp.ne.s32.totalorder %s23, %s26
    %p35 = scmp.eq.s32.totalorder %s18, 1
    %p36 = por %p34, %p35
    %p37 = scmp.ne.s32.totalorder %s26, %s27
    %p38 = scmp.eq.s32.totalorder %s18, 0
    %p39 = por %p37, %p38
    %p40 = scmp.ne.s32.totalorder %s26, %s27
    %p41 = scmp.eq.s32.totalorder %s19, 1
    %p42 = por %p40, %p41
    %p44 = scmp.ne.s32.totalorder %s27, %s43
    %p45 = scmp.eq.s32.totalorder %s19, 0
    %p46 = por %p44, %p45
    %s48 = sadd.s32 %s47, 1
    %p51 = scmp.eq.s32.totalorder %s13, 1
    %p52 = scmp.ne.s32.totalorder %s47, %s49
    %p53 = scmp.eq.s32.totalorder %s13, 0
    %p54 = por %p52, %p53
    %p55 = scmp.ne.s32.totalorder %s47, %s49
    %p56 = scmp.eq.s32.totalorder %s18, 1
    %p57 = por %p55, %p56
    %p58 = scmp.ne.s32.totalorder %s49, %s50
    %p59 = scmp.eq.s32.totalorder %s18, 0
    %p60 = por %p58, %p59
    %p61 = scmp.ne.s32.totalorder %s49, %s50
    %p62 = scmp.eq.s32.totalorder %s19, 1
    %p63 = por %p61, %p62
    %p65 = scmp.ne.s32.totalorder %s50, %s64
    %p66 = scmp.eq.s32.totalorder %s19, 0
    %p67 = por %p65, %p66
    %s69 = sadd.s32 %s68, 1
    %p72 = scmp.eq.s32.totalorder %s13, 1
    %p73 = scmp.ne.s32.totalorder %s68, %s70
    %p74 = scmp.eq.s32.totalorder %s13, 0
    %p75 = por %p73, %p74
    %p76 = scmp.ne.s32.totalorder %s68, %s70
    %p77 = scmp.eq.s32.totalorder %s18, 1
    %p78 = por %p76, %p77
    %p79 = scmp.ne.s32.totalorder %s70, %s71
    %p80 = scmp.eq.s32.totalorder %s18, 0
    %p81 = por %p79, %p80
    %p82 = scmp.ne.s32.totalorder %s70, %s71
    %p83 = scmp.eq.s32.totalorder %s19, 1
    %p84 = por %p82, %p83
    %p86 = scmp.ne.s32.totalorder %s71, %s85
    %p87 = scmp.eq.s32.totalorder %s19, 0
    %p88 = por %p86, %p87
    %s90 = sadd.s32 %s89, 1
    %p93 = scmp.eq.s32.totalorder %s13, 1
    %p94 = scmp.ne.s32.totalorder %s89, %s91
    %p95 = scmp.eq.s32.totalorder %s13, 0
    %p96 = por %p94, %p95
    %p97 = scmp.ne.s32.totalorder %s89, %s91
    %p98 = scmp.eq.s32.totalorder %s18, 1
    %p99 = por %p97, %p98
    %p100 = scmp.ne.s32.totalorder %s91, %s92
    %p101 = scmp.eq.s32.totalorder %s18, 0
    %p102 = por %p100, %p101
    %p103 = scmp.ne.s32.totalorder %s91, %s92
    %p104 = scmp.eq.s32.totalorder %s19, 1
    %p105 = por %p103, %p104
    %p107 = scmp.ne.s32.totalorder %s92, %s106
    %p108 = scmp.eq.s32.totalorder %s19, 0
    %p109 = por %p107, %p108
    %s111 = sadd.s32 %s110, 1
    %p114 = scmp.eq.s32.totalorder %s13, 1
    %p115 = scmp.ne.s32.totalorder %s110, %s112
    %p116 = scmp.eq.s32.totalorder %s13, 0
    %p117 = por %p115, %p116
    %p118 = scmp.ne.s32.totalorder %s110, %s112
    %p119 = scmp.eq.s32.totalorder %s18, 1
    %p120 = por %p118, %p119
    %p121 = scmp.ne.s32.totalorder %s112, %s113
    %p122 = scmp.eq.s32.totalorder %s18, 0
    %p123 = por %p121, %p122
    %p124 = scmp.ne.s32.totalorder %s112, %s113
    %p125 = scmp.eq.s32.totalorder %s19, 1
    %p126 = por %p124, %p125
    %p128 = scmp.ne.s32.totalorder %s113, %s127
    %p129 = scmp.eq.s32.totalorder %s19, 0
    %p130 = por %p128, %p129
    %s132 = sadd.s32 %s131, 1
    %p135 = scmp.eq.s32.totalorder %s13, 1
    %p136 = scmp.ne.s32.totalorder %s131, %s133
    %p137 = scmp.eq.s32.totalorder %s13, 0
    %p138 = por %p136, %p137
    %p139 = scmp.ne.s32.totalorder %s131, %s133
    %p140 = scmp.eq.s32.totalorder %s18, 1
    %p141 = por %p139, %p140
    %p142 = scmp.ne.s32.totalorder %s133, %s134
    %p143 = scmp.eq.s32.totalorder %s18, 0
    %p144 = por %p142, %p143
    %p145 = scmp.ne.s32.totalorder %s133, %s134
    %p146 = scmp.eq.s32.totalorder %s19, 1
    %p147 = por %p145, %p146
    %p149 = scmp.ne.s32.totalorder %s134, %s148
    %p150 = scmp.eq.s32.totalorder %s19, 0
    %p151 = por %p149, %p150
    %s153 = sadd.s32 %s152, 1
    %p156 = scmp.eq.s32.totalorder %s13, 1
    %p157 = scmp.ne.s32.totalorder %s152, %s154
    %p158 = scmp.eq.s32.totalorder %s13, 0
    %p159 = por %p157, %p158
    %p160 = scmp.ne.s32.totalorder %s152, %s154
    %p161 = scmp.eq.s32.totalorder %s18, 1
    %p162 = por %p160, %p161
    %p163 = scmp.ne.s32.totalorder %s154, %s155
    %p164 = scmp.eq.s32.totalorder %s18, 0
    %p165 = por %p163, %p164
    %p166 = scmp.ne.s32.totalorder %s154, %s155
    %p167 = scmp.eq.s32.totalorder %s19, 1
    %p168 = por %p166, %p167
    %p170 = scmp.ne.s32.totalorder %s155, %s169
    %p171 = scmp.eq.s32.totalorder %s19, 0
    %p172 = por %p170, %p171
    %s173 = ssub.s32 %s13, %s20
    %p174 = scmp.eq.s32.totalorder %s173, 0
    %s176 = sadd.s32 %s175, 1
    %s177 = scalar_select %p174, %s175, %s176
    %p180 = pneg %p174
    %p181 = scmp.eq.s32.totalorder %s13, 1
    %p182 = por %p180, %p181
    %p183 = scmp.ne.s32.totalorder %s175, %s178
    %p184 = scmp.eq.s32.totalorder %s13, 0
    %p185 = por %p183, %p184
    %p186 = scmp.ne.s32.totalorder %s175, %s178
    %p187 = scmp.eq.s32.totalorder %s18, 1
    %p188 = por %p186, %p187
    %p189 = scmp.ne.s32.totalorder %s178, %s179
    %p190 = scmp.eq.s32.totalorder %s18, 0
    %p191 = por %p189, %p190
    %p192 = scmp.ne.s32.totalorder %s178, %s179
    %p193 = scmp.eq.s32.totalorder %s19, 1
    %p194 = por %p192, %p193
    %p196 = scmp.ne.s32.totalorder %s179, %s195
    %p197 = scmp.eq.s32.totalorder %s19, 0
    %p198 = por %p196, %p197
    %p199 = scmp.le.s32.totalorder 1, %s13
    %p200 = scmp.lt.s32.totalorder %s13, 3
    %p201 = pnand %p199, %p200
    %p202 = pneg %p201
    // Predicated region
    $region9: #{a_call__.13} parent=5 // pred_check
      _
    $region10: #{a_call__.13} parent=5 // pred_check_branch
      %204 = sbr.rel (%p201) target = $region12
    $region11: #{a_call__.13} parent=5 // pred_region
      %s205 = ssub.s32 %s13, 1
      // Predicated region
      $region13: #{a_call__.13} parent=11 // pred_check
        %p206 = pneg %p60
      $region14: #{a_call__.13} parent=11 // pred_check_branch
        %208 = sbr.rel (%p206) target = $region16
      $region15: #{a_call__.13} parent=11 // pred_region
        _
      $region16: #{a_call__.13} parent=11 // pred_fallthru
        _
      // Predicated region
      $region17: #{a_call__.13} parent=11 // pred_check
        %p209 = pneg %p81
      $region18: #{a_call__.13} parent=11 // pred_check_branch
        %211 = sbr.rel (%p209) target = $region20
      $region19: #{a_call__.13} parent=11 // pred_region
        _
      $region20: #{a_call__.13} parent=11 // pred_fallthru
        _
      // Predicated region
      $region21: #{a_call__.13} parent=11 // pred_check
        %p212 = pneg %p102
      $region22: #{a_call__.13} parent=11 // pred_check_branch
        %214 = sbr.rel (%p212) target = $region24
      $region23: #{a_call__.13} parent=11 // pred_region
        _
      $region24: #{a_call__.13} parent=11 // pred_fallthru
        _
      // Predicated region
      $region25: #{a_call__.13} parent=11 // pred_check
        %p215 = pneg %p123
      $region26: #{a_call__.13} parent=11 // pred_check_branch
        %217 = sbr.rel (%p215) target = $region28
      $region27: #{a_call__.13} parent=11 // pred_region
        _
      $region28: #{a_call__.13} parent=11 // pred_fallthru
        _
      // Predicated region
      $region29: #{a_call__.13} parent=11 // pred_check
        %p218 = pneg %p144
      $region30: #{a_call__.13} parent=11 // pred_check_branch
        %220 = sbr.rel (%p218) target = $region32
      $region31: #{a_call__.13} parent=11 // pred_region
        _
      $region32: #{a_call__.13} parent=11 // pred_fallthru
        _
      // Predicated region
      $region33: #{a_call__.13} parent=11 // pred_check
        %p221 = pneg %p165
      $region34: #{a_call__.13} parent=11 // pred_check_branch
        %223 = sbr.rel (%p221) target = $region36
      $region35: #{a_call__.13} parent=11 // pred_region
        _
      $region36: #{a_call__.13} parent=11 // pred_fallthru
        _
    $region12: #{a_call__.13} parent=5 // pred_fallthru
      _
    %p224 = scmp.lt.s32.totalorder %s13, 2
    // Predicated region
    $region37: #{a_call__.13} parent=5 // pred_check
      %p225 = pneg %p224
    $region38: #{a_call__.13} parent=5 // pred_check_branch
      %227 = sbr.rel (%p225) target = $region40
    $region39: #{a_call__.13} parent=5 // pred_region
      // Predicated region
      $region41: #{a_call__.13} parent=39 // pred_check
        %p228 = pneg %p33
      $region42: #{a_call__.13} parent=39 // pred_check_branch
        %230 = sbr.rel (%p228) target = $region44
      $region43: #{a_call__.13} parent=39 // pred_region
        %s231 = smul.u32 8, %s13
        %p232 = scmp.lt.s32.totalorder %s231, 15
        %s233 = scalar_select %p232, %s231, 15
        %s234 = smul.addr %s233, 8
        %s235 = scalar_lea.vmem %s0, %s234
        %s236 = smul.u32 8, %s13
      $region44: #{a_call__.13} parent=39 // pred_fallthru
        _
    $region40: #{a_call__.13} parent=5 // pred_fallthru
      _
    %p237 = scmp.le.s32.totalorder 1, %s13
    %p238 = scmp.lt.s32.totalorder %s13, 3
    %p239 = pnand %p237, %p238
    %p240 = pneg %p239
    // Predicated region
    $region45: #{a_call__.13} parent=5 // pred_check
      _
    $region46: #{a_call__.13} parent=5 // pred_check_branch
      %242 = sbr.rel (%p239) target = $region48
    $region47: #{a_call__.13} parent=5 // pred_region
      %s243 = ssub.s32 %s13, 1
      %s244 = smul.u32 8, %s18
      %p245 = scmp.lt.s32.totalorder %s244, 15
      %s246 = scalar_select %p245, %s244, 15
      %s247 = smul.addr %s246, 8
      %s248 = scalar_lea.vmem %s0, %s247
      %p249 = pneg %p39
      %p250 = pneg %p36
      %p251 = pneg %p60
      %p252 = pneg %p57
      %p253 = pneg %p81
      %p254 = pneg %p78
      %p255 = pneg %p102
      %p256 = pneg %p99
      %p257 = pneg %p123
      %p258 = pneg %p120
      %p259 = pneg %p144
      %p260 = pneg %p141
      %p261 = pneg %p165
      %p262 = pneg %p162
      %p263 = pneg %p191
      %p264 = pneg %p188
      %s265 = smul.u32 8, %s18
      %p266 = scmp.lt.s32.totalorder %s265, 15
      %s267 = scalar_select %p266, %s265, 15
      %s268 = smul.addr %s267, 8
      %s269 = scalar_lea.vmem %s7, %s268
      %s270 = smul.u32 8, %s18
      %p271 = scmp.lt.s32.totalorder %s270, 15
      %s272 = scalar_select %p271, %s270, 15
      %s273 = smul.addr %s272, 8
      %s274 = scalar_lea.vmem %s0, %s273
      %s275 = smul.u32 8, %s18
      %s276 = smul.u32 8, %s18
      %p277 = scmp.lt.s32.totalorder %s276, 15
      %s278 = scalar_select %p277, %s276, 15
      %s279 = smul.addr %s278, 8
      %s280 = scalar_lea.vmem %s7, %s279
      %s281 = smul.u32 8, %s18
      %v283 = vld [vmem:[%s274] sm:$0xff]
      %v284 = vld [vmem:[%s274 + $0x8] sm:$0xff]
      %v285 = vld [vmem:[%s274 + $0x10] sm:$0xff]
      %v286 = vld [vmem:[%s274 + $0x18] sm:$0xff]
      %v287 = vld [vmem:[%s274 + $0x20] sm:$0xff]
      %v288 = vld [vmem:[%s274 + $0x28] sm:$0xff]
      %v289 = vld [vmem:[%s274 + $0x30] sm:$0xff]
      %v290 = vld [vmem:[%s274 + $0x38] sm:$0xff]
      %vm291 = vcmask 31744
      %v292 = vsel %vm291, %v283, 0.0
      %293 = vadd.xlane.f32.xlu0 %v292
      %v294 = vpop.xlane.xlu0 %293
      %v295 = vsel %vm291, %v284, 0.0
      %296 = vadd.xlane.f32.xlu0 %v295
      %v297 = vpop.xlane.xlu0 %296
      %v298 = vsel %vm291, %v285, 0.0
      %299 = vadd.xlane.f32.xlu0 %v298
      %v300 = vpop.xlane.xlu0 %299
      %v301 = vsel %vm291, %v286, 0.0
      %302 = vadd.xlane.f32.xlu0 %v301
      %v303 = vpop.xlane.xlu0 %302
      %v304 = vsel %vm291, %v287, 0.0
      %305 = vadd.xlane.f32.xlu0 %v304
      %v306 = vpop.xlane.xlu0 %305
      %v307 = vsel %vm291, %v288, 0.0
      %308 = vadd.xlane.f32.xlu0 %v307
      %v309 = vpop.xlane.xlu0 %308
      %v310 = vsel %vm291, %v289, 0.0
      %311 = vadd.xlane.f32.xlu0 %v310
      %v312 = vpop.xlane.xlu0 %311
      %v313 = vsel %vm291, %v290, 0.0
      %314 = vadd.xlane.f32.xlu0 %v313
      %v315 = vpop.xlane.xlu0 %314
      %v316 = vrcp.pop 4.0
      %v317 = vmul.f32 %v294, %v316
      %v318 = vmul.f32 %v297, %v316
      %v319 = vmul.f32 %v300, %v316
      %v320 = vmul.f32 %v303, %v316
      %v321 = vmul.f32 %v306, %v316
      %v322 = vmul.f32 %v309, %v316
      %v323 = vmul.f32 %v312, %v316
      %v324 = vmul.f32 %v315, %v316
      %v325 = vsub.f32 %v283, %v317
      %v326 = vsub.f32 %v284, %v318
      %v327 = vsub.f32 %v285, %v319
      %v328 = vsub.f32 %v286, %v320
      %v329 = vsub.f32 %v287, %v321
      %v330 = vsub.f32 %v288, %v322
      %v331 = vsub.f32 %v289, %v323
      %v332 = vsub.f32 %v290, %v324
      %v333 = vmul.f32 %v325, %v325
      %v334 = vmul.f32 %v326, %v326
      %v335 = vmul.f32 %v327, %v327
      %v336 = vmul.f32 %v328, %v328
      %v337 = vmul.f32 %v329, %v329
      %v338 = vmul.f32 %v330, %v330
      %v339 = vmul.f32 %v331, %v331
      %v340 = vmul.f32 %v332, %v332
      %v341 = vsel %vm291, %v333, 0.0
      %342 = vadd.xlane.f32.xlu0 %v341
      %v343 = vpop.xlane.xlu0 %342
      %v344 = vsel %vm291, %v334, 0.0
      %345 = vadd.xlane.f32.xlu0 %v344
      %v346 = vpop.xlane.xlu0 %345
      %v347 = vsel %vm291, %v335, 0.0
      %348 = vadd.xlane.f32.xlu0 %v347
      %v349 = vpop.xlane.xlu0 %348
      %v350 = vsel %vm291, %v336, 0.0
      %351 = vadd.xlane.f32.xlu0 %v350
      %v352 = vpop.xlane.xlu0 %351
      %v353 = vsel %vm291, %v337, 0.0
      %354 = vadd.xlane.f32.xlu0 %v353
      %v355 = vpop.xlane.xlu0 %354
      %v356 = vsel %vm291, %v338, 0.0
      %357 = vadd.xlane.f32.xlu0 %v356
      %v358 = vpop.xlane.xlu0 %357
      %v359 = vsel %vm291, %v339, 0.0
      %360 = vadd.xlane.f32.xlu0 %v359
      %v361 = vpop.xlane.xlu0 %360
      %v362 = vsel %vm291, %v340, 0.0
      %363 = vadd.xlane.f32.xlu0 %v362
      %v364 = vpop.xlane.xlu0 %363
      %v365 = vmul.f32 %v343, %v316
      %v366 = vmul.f32 %v346, %v316
      %v367 = vmul.f32 %v349, %v316
      %v368 = vmul.f32 %v352, %v316
      %v369 = vmul.f32 %v355, %v316
      %v370 = vmul.f32 %v358, %v316
      %v371 = vmul.f32 %v361, %v316
      %v372 = vmul.f32 %v364, %v316
      %v373 = vadd.f32 %v365, 1e-05
      %v374 = vadd.f32 %v366, 1e-05
      %v375 = vadd.f32 %v367, 1e-05
      %v376 = vadd.f32 %v368, 1e-05
      %v377 = vadd.f32 %v369, 1e-05
      %v378 = vadd.f32 %v370, 1e-05
      %v379 = vadd.f32 %v371, 1e-05
      %v380 = vadd.f32 %v372, 1e-05
      %v381 = vrsqrt.pop %v373
      %v382 = vrsqrt.pop %v374
      %v383 = vrsqrt.pop %v375
      %v384 = vrsqrt.pop %v376
      %v385 = vrsqrt.pop %v377
      %v386 = vrsqrt.pop %v378
      %v387 = vrsqrt.pop %v379
      %v388 = vrsqrt.pop %v380
      %v389 = vmul.f32 %v325, %v381
      %v390 = vmul.f32 %v326, %v382
      %v391 = vmul.f32 %v327, %v383
      %v392 = vmul.f32 %v328, %v384
      %v393 = vmul.f32 %v329, %v385
      %v394 = vmul.f32 %v330, %v386
      %v395 = vmul.f32 %v331, %v387
      %v396 = vmul.f32 %v332, %v388
      %v397 = vld [vmem:[%s1] sm:$0x1]
      %v399 = vlaneseq
      %v400 = vshrl.u32 %v399, 7
      %v401 = vsub.s32 0, %v400
      %v402 = vrot.slane %v397, %v401
      %v404 = vmul.f32 %v389, %v402
      %v405 = vmul.f32 %v390, %v402
      %v406 = vmul.f32 %v391, %v402
      %v407 = vmul.f32 %v392, %v402
      %v408 = vmul.f32 %v393, %v402
      %v409 = vmul.f32 %v394, %v402
      %v410 = vmul.f32 %v395, %v402
      %v411 = vmul.f32 %v396, %v402
      %v412 = vld [vmem:[%s2] sm:$0x1]
      %v414 = vlaneseq
      %v415 = vshrl.u32 %v414, 7
      %v416 = vsub.s32 0, %v415
      %v417 = vrot.slane %v412, %v416
      %v419 = vadd.f32 %v404, %v417
      %v420 = vadd.f32 %v405, %v417
      %v421 = vadd.f32 %v406, %v417
      %v422 = vadd.f32 %v407, %v417
      %v423 = vadd.f32 %v408, %v417
      %v424 = vadd.f32 %v409, %v417
      %v425 = vadd.f32 %v410, %v417
      %v426 = vadd.f32 %v411, %v417
      %v427 = vpack.c.bf16 %v420, %v419
      %v428 = vpack.c.bf16 %v422, %v421
      %v429 = vpack.c.bf16 %v424, %v423
      %v430 = vpack.c.bf16 %v426, %v425
      %v431 = vld [vmem:[%s3] sm:$0x3]
      %v432 = vld [vmem:[%s4] sm:$0x1]
      %v434 = vlaneseq
      %v435 = vshrl.u32 %v434, 7
      %v436 = vsub.s32 0, %v435
      %v437 = vrot.slane %v432, %v436
      %v440 = vsel %vm291, %v427, 0
      %v443 = vsel %vm291, %v428, 0
      %v446 = vsel %vm291, %v429, 0
      %v449 = vsel %vm291, %v430, 0
      %vm451 = vcmask 1041408
      %v453 = vsel %vm451, %v431, 0
      %455 = vmatprep.subr.bf16.mxu0 0
      %456 = vmatpush1.bf16.msra.mxu0 %v453
      %457 = vmatprep.subr.bf16.mxu0 0
      %458 = vmatpush1.bf16.msra.mxu0 0
      %459 = vmatprep.subr.bf16.mxu0 0
      %460 = vmatpush1.bf16.msra.mxu0 0
      %461 = vmatprep.subr.bf16.mxu0 0
      %462 = vmatpush1.bf16.msra.mxu0 0
      %463 = vmatprep.subr.bf16.mxu0 0
      %464 = vmatpush1.bf16.msra.mxu0 0
      %465 = vmatprep.subr.bf16.mxu0 0
      %466 = vmatpush1.bf16.msra.mxu0 0
      %467 = vmatprep.subr.bf16.mxu0 0
      %468 = vmatpush1.bf16.msra.mxu0 0
      %469 = vmatprep.subr.bf16.mxu0 0
      %470 = vmatpush1.bf16.msra.mxu0 0
      %471 = vmatprep.subr.bf16.mxu0 0
      %472 = vmatpush1.bf16.msra.mxu0 0
      %473 = vmatprep.subr.bf16.mxu0 0
      %474 = vmatpush1.bf16.msra.mxu0 0
      %475 = vmatprep.subr.bf16.mxu0 0
      %476 = vmatpush1.bf16.msra.mxu0 0
      %477 = vmatprep.subr.bf16.mxu0 0
      %478 = vmatpush1.bf16.msra.mxu0 0
      %479 = vmatprep.subr.bf16.mxu0 0
      %480 = vmatpush1.bf16.msra.mxu0 0
      %481 = vmatprep.subr.bf16.mxu0 0
      %482 = vmatpush1.bf16.msra.mxu0 0
      %483 = vmatprep.subr.bf16.mxu0 0
      %484 = vmatpush1.bf16.msra.mxu0 0
      %485 = vmatprep.subr.bf16.mxu0 0
      %486 = vmatpush1.bf16.msra.mxu0 0
      %487 = vmatprep.mubr.bf16.mxu0 0
      %488 = vmatmul.mubr.bf16.gmra.mrb[0].mxu0 %v440
      %v489 = vpop.f32.mrb[0].mxu0
      %v490 = vadd.f32 %v437, %v489
      %v491 = vpop.f32.mrb[0].mxu0
      %v492 = vpop.f32.mrb[0].mxu0
      %v493 = vadd.f32 %v437, %v492
      %v494 = vpop.f32.mrb[0].mxu0
      %495 = vmatprep.mubr.bf16.mxu0 0
      %496 = vmatmul.mubr.bf16.gmra.mrb[0].mxu0 %v443
      %v497 = vpop.f32.mrb[0].mxu0
      %v498 = vadd.f32 %v437, %v497
      %v499 = vpop.f32.mrb[0].mxu0
      %v500 = vpop.f32.mrb[0].mxu0
      %v501 = vadd.f32 %v437, %v500
      %v502 = vpop.f32.mrb[0].mxu0
      %503 = vmatprep.mubr.bf16.mxu0 0
      %504 = vmatmul.mubr.bf16.gmra.mrb[0].mxu0 %v446
      %v505 = vpop.f32.mrb[0].mxu0
      %v506 = vadd.f32 %v437, %v505
      %v507 = vpop.f32.mrb[0].mxu0
      %v508 = vpop.f32.mrb[0].mxu0
      %v509 = vadd.f32 %v437, %v508
      %v510 = vpop.f32.mrb[0].mxu0
      %511 = vmatprep.mubr.bf16.mxu0 0
      %512 = vmatmul.mubr.bf16.gmra.mrb[0].mxu0 %v449
      %v513 = vpop.f32.mrb[0].mxu0
      %v514 = vadd.f32 %v437, %v513
      %v515 = vpop.f32.mrb[0].mxu0
      %v516 = vpop.f32.mrb[0].mxu0
      %v517 = vadd.f32 %v437, %v516
      %v518 = vpop.f32.mrb[0].mxu0
      %519 = vdwg.mxu0
      %v520 = vmul.f32 %v490, 0.5
      %v521 = vmul.f32 %v493, 0.5
      %v522 = vmul.f32 %v498, 0.5
      %v523 = vmul.f32 %v501, 0.5
      %v524 = vmul.f32 %v506, 0.5
      %v525 = vmul.f32 %v509, 0.5
      %v526 = vmul.f32 %v514, 0.5
      %v527 = vmul.f32 %v517, 0.5
      %v528 = vmul.f32 %v490, 0.044715
      %v529 = vmul.f32 %v493, 0.044715
      %v530 = vmul.f32 %v498, 0.044715
      %v531 = vmul.f32 %v501, 0.044715
      %v532 = vmul.f32 %v506, 0.044715
      %v533 = vmul.f32 %v509, 0.044715
      %v534 = vmul.f32 %v514, 0.044715
      %v535 = vmul.f32 %v517, 0.044715
      %v536 = vmul.f32 %v528, %v490
      %v537 = vmul.f32 %v529, %v493
      %v538 = vmul.f32 %v530, %v498
      %v539 = vmul.f32 %v531, %v501
      %v540 = vmul.f32 %v532, %v506
      %v541 = vmul.f32 %v533, %v509
      %v542 = vmul.f32 %v534, %v514
      %v543 = vmul.f32 %v535, %v517
      %v544 = vmul.f32 %v536, %v490
      %v545 = vmul.f32 %v537, %v493
      %v546 = vmul.f32 %v538, %v498
      %v547 = vmul.f32 %v539, %v501
      %v548 = vmul.f32 %v540, %v506
      %v549 = vmul.f32 %v541, %v509
      %v550 = vmul.f32 %v542, %v514
      %v551 = vmul.f32 %v543, %v517
      %v552 = vadd.f32 %v490, %v544
      %v553 = vadd.f32 %v493, %v545
      %v554 = vadd.f32 %v498, %v546
      %v555 = vadd.f32 %v501, %v547
      %v556 = vadd.f32 %v506, %v548
      %v557 = vadd.f32 %v509, %v549
      %v558 = vadd.f32 %v514, %v550
      %v559 = vadd.f32 %v517, %v551
      %v560 = vmul.f32 %v552, 0.7978846
      %v561 = vmul.f32 %v553, 0.7978846
      %v562 = vmul.f32 %v554, 0.7978846
      %v563 = vmul.f32 %v555, 0.7978846
      %v564 = vmul.f32 %v556, 0.7978846
      %v565 = vmul.f32 %v557, 0.7978846
      %v566 = vmul.f32 %v558, 0.7978846
      %v567 = vmul.f32 %v559, 0.7978846
      %v568 = vtanh.pop %v560
      %v569 = vtanh.pop %v561
      %v570 = vtanh.pop %v562
      %v571 = vtanh.pop %v563
      %v572 = vtanh.pop %v564
      %v573 = vtanh.pop %v565
      %v574 = vtanh.pop %v566
      %v575 = vtanh.pop %v567
      %v576 = vadd.f32 %v568, 1.0
      %v577 = vadd.f32 %v569, 1.0
      %v578 = vadd.f32 %v570, 1.0
      %v579 = vadd.f32 %v571, 1.0
      %v580 = vadd.f32 %v572, 1.0
      %v581 = vadd.f32 %v573, 1.0
      %v582 = vadd.f32 %v574, 1.0
      %v583 = vadd.f32 %v575, 1.0
      %v584 = vmul.f32 %v520, %v576
      %v585 = vmul.f32 %v521, %v577
      %v586 = vmul.f32 %v522, %v578
      %v587 = vmul.f32 %v523, %v579
      %v588 = vmul.f32 %v524, %v580
      %v589 = vmul.f32 %v525, %v581
      %v590 = vmul.f32 %v526, %v582
      %v591 = vmul.f32 %v527, %v583
      %v592 = vpack.c.bf16 %v585, %v584
      %v593 = vpack.c.bf16 %v587, %v586
      %v594 = vpack.c.bf16 %v589, %v588
      %v595 = vpack.c.bf16 %v591, %v590
      %v596 = vld [vmem:[%s5] sm:$0xf]
      %v597 = vld [vmem:[%s6] sm:$0x1]
      %v599 = vlaneseq
      %v600 = vshrl.u32 %v599, 7
      %v601 = vsub.s32 0, %v600
      %v602 = vrot.slane %v597, %v601
      %vm604 = vcmask 64512
      %v606 = vsel %vm604, %v592, 0
      %v609 = vsel %vm604, %v593, 0
      %v612 = vsel %vm604, %v594, 0
      %v615 = vsel %vm604, %v595, 0
      %vm617 = vcmask 1043456
      %v619 = vsel %vm617, %v596, 0
      %621 = vmatprep.subr.bf16.mxu0 0
      %622 = vmatpush1.bf16.msra.mxu0 %v619
      %623 = vmatprep.subr.bf16.mxu0 0
      %624 = vmatpush1.bf16.msra.mxu0 0
      %625 = vmatprep.subr.bf16.mxu0 0
      %626 = vmatpush1.bf16.msra.mxu0 0
      %627 = vmatprep.subr.bf16.mxu0 0
      %628 = vmatpush1.bf16.msra.mxu0 0
      %629 = vmatprep.subr.bf16.mxu0 0
      %630 = vmatpush1.bf16.msra.mxu0 0
      %631 = vmatprep.subr.bf16.mxu0 0
      %632 = vmatpush1.bf16.msra.mxu0 0
      %633 = vmatprep.subr.bf16.mxu0 0
      %634 = vmatpush1.bf16.msra.mxu0 0
      %635 = vmatprep.subr.bf16.mxu0 0
      %636 = vmatpush1.bf16.msra.mxu0 0
      %637 = vmatprep.subr.bf16.mxu0 0
      %638 = vmatpush1.bf16.msra.mxu0 0
      %639 = vmatprep.subr.bf16.mxu0 0
      %640 = vmatpush1.bf16.msra.mxu0 0
      %641 = vmatprep.subr.bf16.mxu0 0
      %642 = vmatpush1.bf16.msra.mxu0 0
      %643 = vmatprep.subr.bf16.mxu0 0
      %644 = vmatpush1.bf16.msra.mxu0 0
      %645 = vmatprep.subr.bf16.mxu0 0
      %646 = vmatpush1.bf16.msra.mxu0 0
      %647 = vmatprep.subr.bf16.mxu0 0
      %648 = vmatpush1.bf16.msra.mxu0 0
      %649 = vmatprep.subr.bf16.mxu0 0
      %650 = vmatpush1.bf16.msra.mxu0 0
      %651 = vmatprep.subr.bf16.mxu0 0
      %652 = vmatpush1.bf16.msra.mxu0 0
      %653 = vmatprep.mubr.bf16.mxu0 0
      %654 = vmatmul.mubr.bf16.gmra.mrb[0].mxu0 %v606
      %v655 = vpop.f32.mrb[0].mxu0
      %v656 = vadd.f32 %v602, %v655
      %v657 = vpop.f32.mrb[0].mxu0
      %v658 = vpop.f32.mrb[0].mxu0
      %v659 = vadd.f32 %v602, %v658
      %v660 = vpop.f32.mrb[0].mxu0
      %661 = vmatprep.mubr.bf16.mxu0 0
      %662 = vmatmul.mubr.bf16.gmra.mrb[0].mxu0 %v609
      %v663 = vpop.f32.mrb[0].mxu0
      %v664 = vadd.f32 %v602, %v663
      %v665 = vpop.f32.mrb[0].mxu0
      %v666 = vpop.f32.mrb[0].mxu0
      %v667 = vadd.f32 %v602, %v666
      %v668 = vpop.f32.mrb[0].mxu0
      %669 = vmatprep.mubr.bf16.mxu0 0
      %670 = vmatmul.mubr.bf16.gmra.mrb[0].mxu0 %v612
      %v671 = vpop.f32.mrb[0].mxu0
      %v672 = vadd.f32 %v602, %v671
      %v673 = vpop.f32.mrb[0].mxu0
      %v674 = vpop.f32.mrb[0].mxu0
      %v675 = vadd.f32 %v602, %v674
      %v676 = vpop.f32.mrb[0].mxu0
      %677 = vmatprep.mubr.bf16.mxu0 0
      %678 = vmatmul.mubr.bf16.gmra.mrb[0].mxu0 %v615
      %v679 = vpop.f32.mrb[0].mxu0
      %v680 = vadd.f32 %v602, %v679
      %v681 = vpop.f32.mrb[0].mxu0
      %v682 = vpop.f32.mrb[0].mxu0
      %v683 = vadd.f32 %v602, %v682
      %v684 = vpop.f32.mrb[0].mxu0
      %685 = vdwg.mxu0
      %v686 = vadd.f32 %v656, %v283
      %v687 = vadd.f32 %v659, %v284
      %v688 = vadd.f32 %v664, %v285
      %v689 = vadd.f32 %v667, %v286
      %v690 = vadd.f32 %v672, %v287
      %v691 = vadd.f32 %v675, %v288
      %v692 = vadd.f32 %v680, %v289
      %v693 = vadd.f32 %v683, %v290
      %694 = vst.msk [vmem:[%s280] sm:$0xff] %vm291, %v686
      %695 = vst.msk [vmem:[%s280 + $0x8] sm:$0xff] %vm291, %v687
      %696 = vst.msk [vmem:[%s280 + $0x10] sm:$0xff] %vm291, %v688
      %697 = vst.msk [vmem:[%s280 + $0x18] sm:$0xff] %vm291, %v689
      %698 = vst.msk [vmem:[%s280 + $0x20] sm:$0xff] %vm291, %v690
      %699 = vst.msk [vmem:[%s280 + $0x28] sm:$0xff] %vm291, %v691
      %700 = vst.msk [vmem:[%s280 + $0x30] sm:$0xff] %vm291, %v692
      %701 = vst.msk [vmem:[%s280 + $0x38] sm:$0xff] %vm291, %v693
      %s702 = smul.u32 8, %s18
      %p703 = scmp.lt.s32.totalorder %s702, 15
      %s704 = scalar_select %p703, %s702, 15
      %s705 = smul.addr %s704, 8
      %s706 = scalar_lea.vmem %s7, %s705
      // Predicated region
      $region49: #{a_call__.13} parent=47 // pred_check
        %p707 = pneg %p188
      $region50: #{a_call__.13} parent=47 // pred_check_branch
        %709 = sbr.rel (%p707) target = $region52
      $region51: #{a_call__.13} parent=47 // pred_region
        %s710 = smul.u32 8, %s18
      $region52: #{a_call__.13} parent=47 // pred_fallthru
        _
    $region48: #{a_call__.13} parent=5 // pred_fallthru
      _
    %p711 = scmp.le.s32.totalorder 2, %s13
    // Predicated region
    $region53: #{a_call__.13} parent=5 // pred_check
      %p712 = pneg %p711
    $region54: #{a_call__.13} parent=5 // pred_check_branch
      %714 = sbr.rel (%p712) target = $region56
    $region55: #{a_call__.13} parent=5 // pred_region
      %s715 = ssub.s32 %s13, 2
      // Predicated region
      $region57: #{a_call__.13} parent=55 // pred_check
        %p716 = pneg %p194
      $region58: #{a_call__.13} parent=55 // pred_check_branch
        %718 = sbr.rel (%p716) target = $region60
      $region59: #{a_call__.13} parent=55 // pred_region
        %s719 = smul.u32 8, %s19
        %p720 = scmp.lt.s32.totalorder %s719, 15
        %s721 = scalar_select %p720, %s719, 15
        %s722 = smul.addr %s721, 8
        %s723 = scalar_lea.vmem %s7, %s722
      $region60: #{a_call__.13} parent=55 // pred_fallthru
        _
    $region56: #{a_call__.13} parent=5 // pred_fallthru
      _
  $region6: #{a_call__.13} parent=0 // loop_footer
    %s17 = sadd.s32 1, %s13
  $region7: #{a_call__.13} parent=0 // loop_footer_branch
    %12 = sbr.rel target = $region3
  $region8: #{a_call__.13} parent=0 // loop_exit
    _

</llo_original>
